<compile_context>
chip_gen: v7x
topology: tpu7x:2x2x1
jax: 0.10.0
libtpu: 0.0.40
codegen_flags: <defaults>
</compile_context>

<pallas_src>
import functools

import jax
import jax.numpy as jnp
from jax.experimental import pallas as pl
from jax.experimental.pallas import tpu as pltpu

D_MODEL = 32
D_FF = 64
N_HEADS = 4
CONV_K = 7
LN_EPS = 1e-5
BN_EPS = 1e-5


# ---------------------------------------------------------------------------
# Packed-parameter layout (shared between wrapper and kernel)
# ---------------------------------------------------------------------------
def _vec_rows(conv_k):
    """Row offsets of every small parameter vector inside the packed `vec` slab."""
    rows, r = {}, 0
    rows["ln_g"] = r; r += 5          # 5 layer norms: [ff1, self_att, conv, ff2, out]
    rows["ln_b"] = r; r += 5
    rows["dw_w"] = r; r += conv_k     # depthwise conv taps, one row per tap
    for name in ("ff1_b1", "ff1_b2", "bqkv", "bo", "pw1_b", "dw_b",
                 "bn_scale", "bn_shift", "pw2_b", "ff2_b1", "ff2_b2"):
        rows[name] = r; r += 1
    rows["_total"] = r
    return rows


def _wd_cols(d, f):
    """Column (offset, width) of every d_model-row weight inside the packed `wd` slab."""
    cols, c = {}, 0
    for name, w in (("ff1_w1", f), ("wqkv", 3 * d), ("wo", d),
                    ("pw1_w", 2 * d), ("pw2_w", d), ("ff2_w1", f)):
        cols[name] = (c, w); c += w
    cols["_total"] = c
    return cols


# ---------------------------------------------------------------------------
# Kernel
# ---------------------------------------------------------------------------
def conformer_kernel(x_ref, wd_ref, wf_ref, vec_ref, o_ref, *, n_heads, conv_k):
    bb, t, d = x_ref.shape
    f = wf_ref.shape[0]
    bt = bb * t
    dh = d // n_heads
    rows = _vec_rows(conv_k)
    cols = _wd_cols(d, f)
    mxu_dtype = wd_ref.dtype            # bf16 by default: MXU inputs, f32 accumulation

    # (bb, t, d) -> (bb*t, d): leading-dim merge (layout preserving); all matmuls share M=bb*t.
    x = x_ref[...].astype(jnp.float32).reshape(bt, d)

    def vrow(name, width):
        r = rows[name]
        return vec_ref[r:r + 1, :width]                      # (1, width), f32

    def wslab(name):
        c, w = cols[name]
        return wd_ref[:, c:c + w]                            # (d, w), mxu dtype

    def mm(a, w):                                            # MXU matmul, f32 accumulate
        return jnp.dot(a.astype(mxu_dtype), w, preferred_element_type=jnp.float32)

    def layer_norm(h, idx):
        g = vec_ref[rows["ln_g"] + idx:rows["ln_g"] + idx + 1, :d]
        b = vec_ref[rows["ln_b"] + idx:rows["ln_b"] + idx + 1, :d]
        mu = jnp.mean(h, axis=-1, keepdims=True)
        var = jnp.mean(jnp.square(h - mu), axis=-1, keepdims=True)
        return (h - mu) * jax.lax.rsqrt(var + LN_EPS) * g + b

    def swish(h):
        return h * jax.nn.sigmoid(h)

    # ---- Macaron feed-forward 1 (half-step residual; dropout = identity in eval) ----
    h = layer_norm(x, 0)
    h = swish(mm(h, wslab("ff1_w1")) + vrow("ff1_b1", f))
    h = mm(h, wf_ref[:, :d]) + vrow("ff1_b2", d)
    x = x + 0.5 * h

    # ---- Multi-head self-attention ----
    # TODO(synk): pos_emb (relative positions) and att_mask default to None in forward();
    # plain scaled-dot-product attention is implemented here.
    # TODO(synk): at production T, restructure as flash-style online softmax over a KV grid
    # axis instead of materializing the (t, t) score matrix per head.
    h = layer_norm(x, 1)
    qkv = mm(h, wslab("wqkv")) + vrow("bqkv", 3 * d)         # (bt, 3d), f32
    wo = wslab("wo")                                         # (d, d)
    scale = 1.0 / float(dh) ** 0.5
    q_all = qkv[:, :d] * scale                               # scale hoisted out of head loop
    attn = jnp.zeros((bt, d), jnp.float32)
    for hd in range(n_heads):
        lo = hd * dh
        # (bt, dh) -> (bb, t, dh): leading-dim split (free); heads batched over the batch dim.
        qh = q_all[:, lo:lo + dh].reshape(bb, t, dh)
        kh = qkv[:, d + lo:d + lo + dh].reshape(bb, t, dh)
        vh = qkv[:, 2 * d + lo:2 * d + lo + dh].reshape(bb, t, dh)
        s = jnp.einsum("bqd,bkd->bqk", qh.astype(mxu_dtype), kh.astype(mxu_dtype),
                       preferred_element_type=jnp.float32)   # (bb, t, t)
        s = s - jnp.max(s, axis=-1, keepdims=True)
        p = jnp.exp(s)
        p = p * pl.reciprocal(jnp.sum(p, axis=-1, keepdims=True), approx=True)
        ctx = jnp.einsum("bqk,bkd->bqd", p.astype(mxu_dtype), vh.astype(mxu_dtype),
                         preferred_element_type=jnp.float32)
        # concat(heads) @ Wo  ==  sum_h head_h @ Wo[h*dh:(h+1)*dh]   (no concatenate/relayout)
        attn = attn + jnp.dot(ctx.reshape(bt, dh).astype(mxu_dtype), wo[lo:lo + dh, :],
                              preferred_element_type=jnp.float32)
    x = x + attn + vrow("bo", d)

    # ---- Convolution module ----
    # TODO(synk): pad_mask defaults to None, so no padding mask is applied before the dw conv.
    h = layer_norm(x, 2)
    h = mm(h, wslab("pw1_w")) + vrow("pw1_b", 2 * d)         # (bt, 2d)
    h = h[:, :d] * jax.nn.sigmoid(h[:, d:])                  # GLU over channels
    # Depthwise conv along time: masked sublane rolls (XLU) -- no zero-padded copies, and the
    # time-index mask also prevents leakage across batch elements in the flattened layout.
    pad = (conv_k - 1) // 2
    t_idx = jax.lax.broadcasted_iota(jnp.int32, (bt, 1), 0) % t
    acc = jnp.broadcast_to(vrow("dw_b", d), (bt, d))
    for kk in range(conv_k):
        off = kk - pad
        shifted = h if off == 0 else pltpu.roll(h, shift=(-off) % bt, axis=0)
        valid = jnp.logical_and(t_idx + off >= 0, t_idx + off < t)
        w_k = vec_ref[rows["dw_w"] + kk:rows["dw_w"] + kk + 1, :d]
        acc = acc + jnp.where(valid, shifted, 0.0) * w_k
    # BatchNorm1d (eval): running mean/var + eps pre-folded into bn_scale / bn_shift.
    h = swish(acc * vrow("bn_scale", d) + vrow("bn_shift", d))
    h = mm(h, wslab("pw2_w")) + vrow("pw2_b", d)
    x = x + h

    # ---- Macaron feed-forward 2 ----
    h = layer_norm(x, 3)
    h = swish(mm(h, wslab("ff2_w1")) + vrow("ff2_b1", f))
    h = mm(h, wf_ref[:, d:2 * d]) + vrow("ff2_b2", d)
    x = x + 0.5 * h

    # ---- Final layer norm ----
    x = layer_norm(x, 4)
    o_ref[...] = x.reshape(bb, t, d).astype(o_ref.dtype)


# ---------------------------------------------------------------------------
# Wrapper
# ---------------------------------------------------------------------------
def pack_params(params, *, mxu_dtype=jnp.bfloat16):
    """Pack the ~22 small parameters into 3 contiguous slabs (3 DMAs per call)."""
    d, f = params["ff1_w1"].shape
    conv_k = params["dw_w"].shape[0]
    wd = jnp.concatenate([params["ff1_w1"], params["wqkv"], params["wo"],
                          params["pw1_w"], params["pw2_w"], params["ff2_w1"]],
                         axis=1).astype(mxu_dtype)                               # (d, 7d+2f)
    wf = jnp.concatenate([params["ff1_w2"], params["ff2_w2"]],
                         axis=1).astype(mxu_dtype)                               # (f, 2d)

    # Fold eval-mode BatchNorm running stats into a single scale/shift pair.
    bn_scale = params["bn_g"] * jax.lax.rsqrt(params["bn_rv"] + BN_EPS)
    bn_shift = params["bn_b"] - params["bn_rm"] * bn_scale

    rows = _vec_rows(conv_k)
    vw = max(3 * d, 2 * d, f)
    vec = jnp.zeros((rows["_total"], vw), jnp.float32)

    def put(slab, name, a):
        a = jnp.asarray(a, jnp.float32)
        if a.ndim == 1:
            a = a[None, :]
        r = rows[name]
        return slab.at[r:r + a.shape[0], :a.shape[1]].set(a)

    vec = put(vec, "ln_g", params["ln_g"])
    vec = put(vec, "ln_b", params["ln_b"])
    vec = put(vec, "dw_w", params["dw_w"])
    vec = put(vec, "ff1_b1", params["ff1_b1"])
    vec = put(vec, "ff1_b2", params["ff1_b2"])
    vec = put(vec, "bqkv", params["bqkv"])
    vec = put(vec, "bo", params["bo"])
    vec = put(vec, "pw1_b", params["pw1_b"])
    vec = put(vec, "dw_b", params["dw_b"])
    vec = put(vec, "bn_scale", bn_scale)
    vec = put(vec, "bn_shift", bn_shift)
    vec = put(vec, "pw2_b", params["pw2_b"])
    vec = put(vec, "ff2_b1", params["ff2_b1"])
    vec = put(vec, "ff2_b2", params["ff2_b2"])
    return wd, wf, vec


def _pick_batch_block(batch, time, target_rows=1024):
    """Smallest divisor of `batch` giving >= target_rows (batch*time) rows per grid step."""
    for bb in range(1, batch + 1):
        if batch % bb == 0 and bb * time >= target_rows:
            return bb
    return batch                        # tiny problems: single grid step over the whole batch


def conformer_layer(x, params, *, n_heads=N_HEADS, conv_k=CONV_K,
                    mxu_dtype=jnp.bfloat16, batch_block=None):
    B, T, D = x.shape
    wd, wf, vec = pack_params(params, mxu_dtype=mxu_dtype)
    bb = batch_block if batch_block is not None else _pick_batch_block(B, T)
    assert B % bb == 0

    kernel = functools.partial(conformer_kernel, n_heads=n_heads, conv_k=conv_k)
    fn = pl.pallas_call(
        kernel,
        out_shape=jax.ShapeDtypeStruct((B, T, D), x.dtype),
        grid=(B // bb,),
        in_specs=[
            pl.BlockSpec((bb, T, D), lambda i: (i, 0, 0)),    # bb batch elements per grid step
            pl.BlockSpec(wd.shape, lambda i: (0, 0)),         # packed d_model-row weights (bf16)
            pl.BlockSpec(wf.shape, lambda i: (0, 0)),         # packed d_ff-row weights (bf16)
            pl.BlockSpec(vec.shape, lambda i: (0, 0)),        # packed LN/BN/bias/dw vectors (f32)
        ],
        out_specs=pl.BlockSpec((bb, T, D), lambda i: (i, 0, 0)),
        compiler_params=pltpu.CompilerParams(
            dimension_semantics=("parallel",)),               # batch axis -> both TCs on v7x
    )
    return fn(x, wd, wf, vec)


# ---------------------------------------------------------------------------
# Pure-JAX f32 reference (for self-check)
# ---------------------------------------------------------------------------
def conformer_reference(x, params, *, n_heads=N_HEADS, conv_k=CONV_K):
    B, T, D = x.shape
    dh = D // n_heads

    def ln(h, i):
        mu = jnp.mean(h, axis=-1, keepdims=True)
        var = jnp.mean((h - mu) ** 2, axis=-1, keepdims=True)
        return (h - mu) * jax.lax.rsqrt(var + LN_EPS) * params["ln_g"][i] + params["ln_b"][i]

    def swish(h):
        return h * jax.nn.sigmoid(h)

    x = x.astype(jnp.float32)
    h = ln(x, 0)
    h = swish(h @ params["ff1_w1"] + params["ff1_b1"])
    x = x + 0.5 * (h @ params["ff1_w2"] + params["ff1_b2"])

    h = ln(x, 1)
    qkv = h @ params["wqkv"] + params["bqkv"]
    q, k, v = qkv[..., :D], qkv[..., D:2 * D], qkv[..., 2 * D:]
    q = q.reshape(B, T, n_heads, dh).transpose(0, 2, 1, 3)
    k = k.reshape(B, T, n_heads, dh).transpose(0, 2, 1, 3)
    v = v.reshape(B, T, n_heads, dh).transpose(0, 2, 1, 3)
    s = jnp.einsum("bhqd,bhkd->bhqk", q, k) / jnp.sqrt(float(dh))
    p = jax.nn.softmax(s, axis=-1)
    ctx = jnp.einsum("bhqk,bhkd->bhqd", p, v).transpose(0, 2, 1, 3).reshape(B, T, D)
    x = x + ctx @ params["wo"] + params["bo"]

    h = ln(x, 2)
    h = h @ params["pw1_w"] + params["pw1_b"]
    h = h[..., :D] * jax.nn.sigmoid(h[..., D:])
    pad = (conv_k - 1) // 2
    hp = jnp.pad(h, ((0, 0), (pad, pad), (0, 0)))
    acc = jnp.zeros_like(h) + params["dw_b"]
    for kk in range(conv_k):
        acc = acc + hp[:, kk:kk + T, :] * params["dw_w"][kk]
    bn_scale = params["bn_g"] * jax.lax.rsqrt(params["bn_rv"] + BN_EPS)
    bn_shift = params["bn_b"] - params["bn_rm"] * bn_scale
    h = swish(acc * bn_scale + bn_shift)
    x = x + h @ params["pw2_w"] + params["pw2_b"]

    h = ln(x, 3)
    h = swish(h @ params["ff2_w1"] + params["ff2_b1"])
    x = x + 0.5 * (h @ params["ff2_w2"] + params["ff2_b2"])
    return ln(x, 4)


# ---------------------------------------------------------------------------
# Params + demo
# ---------------------------------------------------------------------------
def init_params(key, d_model=D_MODEL, d_ff=D_FF, conv_k=CONV_K, scale=0.1):
    ks = jax.random.split(key, 24)

    def w(k, shape):
        return (scale * jax.random.normal(k, shape)).astype(jnp.float32)

    def b(k, n):
        return (0.1 * jax.random.normal(k, (n,))).astype(jnp.float32)

    return {
        # 5 layer norms: [ff1, self_att, conv, ff2, out]
        "ln_g": (1.0 + 0.1 * jax.random.normal(ks[0], (5, d_model))).astype(jnp.float32),
        "ln_b": (0.1 * jax.random.normal(ks[1], (5, d_model))).astype(jnp.float32),
        "ff1_w1": w(ks[2], (d_model, d_ff)), "ff1_b1": b(ks[3], d_ff),
        "ff1_w2": w(ks[4], (d_ff, d_model)), "ff1_b2": b(ks[5], d_model),
        "wqkv": w(ks[6], (d_model, 3 * d_model)), "bqkv": b(ks[7], 3 * d_model),
        "wo": w(ks[8], (d_model, d_model)), "bo": b(ks[9], d_model),
        "pw1_w": w(ks[10], (d_model, 2 * d_model)), "pw1_b": b(ks[11], 2 * d_model),
        # Depthwise Conv1d weight: PyTorch layout is (D, 1, K); stored here as (K, D) = w[:, 0, :].T
        "dw_w": w(ks[12], (conv_k, d_model)), "dw_b": b(ks[13], d_model),
        "bn_g": (1.0 + 0.1 * jax.random.normal(ks[14], (d_model,))).astype(jnp.float32),
        "bn_b": (0.1 * jax.random.normal(ks[15], (d_model,))).astype(jnp.float32),
        "bn_rm": (0.1 * jax.random.normal(ks[16], (d_model,))).astype(jnp.float32),
        "bn_rv": (1.0 + 0.2 * jax.random.uniform(ks[17], (d_model,))).astype(jnp.float32),
        "pw2_w": w(ks[18], (d_model, d_model)), "pw2_b": b(ks[19], d_model),
        "ff2_w1": w(ks[20], (d_model, d_ff)), "ff2_b1": b(ks[21], d_ff),
        "ff2_w2": w(ks[22], (d_ff, d_model)), "ff2_b2": b(ks[23], d_model),
    }


if __name__ == "__main__":
    key = jax.random.PRNGKey(0)
    kx, kp = jax.random.split(key)
    B, T = 2, 8
    x = jax.random.normal(kx, (B, T, D_MODEL), dtype=jnp.float32)
    params = init_params(kp)

    out = jax.block_until_ready(conformer_layer(x, params))
    ref = conformer_reference(x, params)

    assert out.shape == (B, T, D_MODEL), out.shape
    assert bool(jnp.all(jnp.isfinite(out)))
    # bf16 MXU inputs + approx softmax reciprocal vs. pure-f32 reference -> loose tolerance.
    assert bool(jnp.allclose(out, ref, rtol=3e-2, atol=3e-2)), \
        f"max abs err vs f32 reference: {float(jnp.max(jnp.abs(out - ref)))}"
    print("KERNEL_OK")
</pallas_src>

<mosaic_0001>
module attributes {stable_mosaic.version = 11 : i64} {
  func.func @conformer_kernel(%arg0: i32, %arg1: memref<2x8x32xf32, #tpu.memory_space<vmem>>, %arg2: memref<32x352xbf16, #tpu.memory_space<vmem>>, %arg3: memref<64x64xbf16, #tpu.memory_space<vmem>>, %arg4: memref<28x96xf32, #tpu.memory_space<vmem>>, %arg5: memref<2x8x32xf32, #tpu.memory_space<vmem>>) attributes {dimension_semantics = [#tpu.dimension_semantics<parallel>], iteration_bounds = array<i64: 1>, scalar_prefetch = 0 : i64, scratch_operands = 0 : i64, tpu.core_type = #tpu.core_type<tc>, window_params = [{transform_indices = @transform_0, window_bounds = array<i64: 2, 8, 32>}, {pipeline_mode = #tpu.pipeline_mode<synchronous>, transform_indices = @transform_1, window_bounds = array<i64: 32, 352>}, {pipeline_mode = #tpu.pipeline_mode<synchronous>, transform_indices = @transform_2, window_bounds = array<i64: 64, 64>}, {pipeline_mode = #tpu.pipeline_mode<synchronous>, transform_indices = @transform_3, window_bounds = array<i64: 28, 96>}, {transform_indices = @transform_4, window_bounds = array<i64: 2, 8, 32>}]} {
    %c0 = arith.constant 0 : index
    %c0_0 = arith.constant 0 : index
    %c0_1 = arith.constant 0 : index
    %0 = vector.load %arg1[%c0, %c0_0, %c0_1] : memref<2x8x32xf32, #tpu.memory_space<vmem>>, vector<2x8x32xf32>
    %1 = vector.shape_cast %0 : vector<2x8x32xf32> to vector<16x32xf32>
    %c0_2 = arith.constant 0 : index
    %c0_3 = arith.constant 0 : index
    %2 = vector.load %arg4[%c0_2, %c0_3] : memref<28x96xf32, #tpu.memory_space<vmem>>, vector<1x32xf32>
    %c5 = arith.constant 5 : index
    %c0_4 = arith.constant 0 : index
    %3 = vector.load %arg4[%c5, %c0_4] : memref<28x96xf32, #tpu.memory_space<vmem>>, vector<1x32xf32>
    %cst = arith.constant dense<0.000000e+00> : vector<16xf32>
    %4 = vector.multi_reduction <add>, %1, %cst [1] : vector<16x32xf32> to vector<16xf32>
    %5 = vector.shape_cast %4 : vector<16xf32> to vector<16x1xf32>
    %cst_5 = arith.constant 3.200000e+01 : f32
    %6 = vector.broadcast %cst_5 : f32 to vector<16x1xf32>
    %7 = arith.divf %5, %6 : vector<16x1xf32>
    %8 = vector.broadcast %7 : vector<16x1xf32> to vector<16x32xf32>
    %9 = arith.subf %1, %8 : vector<16x32xf32>
    %10 = arith.mulf %9, %9 : vector<16x32xf32>
    %cst_6 = arith.constant dense<0.000000e+00> : vector<16xf32>
    %11 = vector.multi_reduction <add>, %10, %cst_6 [1] : vector<16x32xf32> to vector<16xf32>
    %12 = vector.shape_cast %11 : vector<16xf32> to vector<16x1xf32>
    %cst_7 = arith.constant 3.200000e+01 : f32
    %13 = vector.broadcast %cst_7 : f32 to vector<16x1xf32>
    %14 = arith.divf %12, %13 : vector<16x1xf32>
    %15 = vector.broadcast %7 : vector<16x1xf32> to vector<16x32xf32>
    %16 = arith.subf %1, %15 : vector<16x32xf32>
    %cst_8 = arith.constant 9.99999974E-6 : f32
    %17 = vector.broadcast %cst_8 : f32 to vector<16x1xf32>
    %18 = arith.addf %14, %17 : vector<16x1xf32>
    %19 = math.rsqrt %18 : vector<16x1xf32>
    %20 = vector.broadcast %19 : vector<16x1xf32> to vector<16x32xf32>
    %21 = arith.mulf %16, %20 : vector<16x32xf32>
    %22 = vector.broadcast %2 : vector<1x32xf32> to vector<16x32xf32>
    %23 = arith.mulf %21, %22 : vector<16x32xf32>
    %24 = vector.broadcast %3 : vector<1x32xf32> to vector<16x32xf32>
    %25 = arith.addf %23, %24 : vector<16x32xf32>
    %c0_9 = arith.constant 0 : index
    %c0_10 = arith.constant 0 : index
    %26 = vector.load %arg2[%c0_9, %c0_10] : memref<32x352xbf16, #tpu.memory_space<vmem>>, vector<32x64xbf16>
    %27 = arith.truncf %25 : vector<16x32xf32> to vector<16x32xbf16>
    %cst_11 = arith.constant dense<0.000000e+00> : vector<16x64xf32>
    %28 = tpu.matmul %27, %26, %cst_11 {dimension_numbers = #tpu.dot_dimension_numbers<[1], [0], [0], [1], [0, 0, 1, 1], [], []>} : vector<16x32xbf16>, vector<32x64xbf16>, vector<16x64xf32> -> vector<16x64xf32>
    %c17 = arith.constant 17 : index
    %c0_12 = arith.constant 0 : index
    %29 = vector.load %arg4[%c17, %c0_12] : memref<28x96xf32, #tpu.memory_space<vmem>>, vector<1x64xf32>
    %30 = vector.broadcast %29 : vector<1x64xf32> to vector<16x64xf32>
    %31 = arith.addf %28, %30 : vector<16x64xf32>
    %32 = arith.negf %31 : vector<16x64xf32>
    %33 = math.exp %32 : vector<16x64xf32>
    %cst_13 = arith.constant 1.000000e+00 : f32
    %34 = vector.broadcast %cst_13 : f32 to vector<16x64xf32>
    %35 = arith.addf %34, %33 : vector<16x64xf32>
    %36 = arith.divf %34, %35 : vector<16x64xf32>
    %37 = arith.mulf %31, %36 : vector<16x64xf32>
    %c0_14 = arith.constant 0 : index
    %c0_15 = arith.constant 0 : index
    %38 = vector.load %arg3[%c0_14, %c0_15] : memref<64x64xbf16, #tpu.memory_space<vmem>>, vector<64x32xbf16>
    %39 = arith.truncf %37 : vector<16x64xf32> to vector<16x64xbf16>
    %cst_16 = arith.constant dense<0.000000e+00> : vector<16x32xf32>
    %40 = tpu.matmul %39, %38, %cst_16 {dimension_numbers = #tpu.dot_dimension_numbers<[1], [0], [0], [1], [0, 0, 1, 1], [], []>} : vector<16x64xbf16>, vector<64x32xbf16>, vector<16x32xf32> -> vector<16x32xf32>
    %c18 = arith.constant 18 : index
    %c0_17 = arith.constant 0 : index
    %41 = vector.load %arg4[%c18, %c0_17] : memref<28x96xf32, #tpu.memory_space<vmem>>, vector<1x32xf32>
    %42 = vector.broadcast %41 : vector<1x32xf32> to vector<16x32xf32>
    %43 = arith.addf %40, %42 : vector<16x32xf32>
    %cst_18 = arith.constant 5.000000e-01 : f32
    %44 = vector.broadcast %cst_18 : f32 to vector<16x32xf32>
    %45 = arith.mulf %44, %43 : vector<16x32xf32>
    %46 = arith.addf %1, %45 : vector<16x32xf32>
    %c1 = arith.constant 1 : index
    %c0_19 = arith.constant 0 : index
    %47 = vector.load %arg4[%c1, %c0_19] : memref<28x96xf32, #tpu.memory_space<vmem>>, vector<1x32xf32>
    %c6 = arith.constant 6 : index
    %c0_20 = arith.constant 0 : index
    %48 = vector.load %arg4[%c6, %c0_20] : memref<28x96xf32, #tpu.memory_space<vmem>>, vector<1x32xf32>
    %cst_21 = arith.constant dense<0.000000e+00> : vector<16xf32>
    %49 = vector.multi_reduction <add>, %46, %cst_21 [1] : vector<16x32xf32> to vector<16xf32>
    %50 = vector.shape_cast %49 : vector<16xf32> to vector<16x1xf32>
    %cst_22 = arith.constant 3.200000e+01 : f32
    %51 = vector.broadcast %cst_22 : f32 to vector<16x1xf32>
    %52 = arith.divf %50, %51 : vector<16x1xf32>
    %53 = vector.broadcast %52 : vector<16x1xf32> to vector<16x32xf32>
    %54 = arith.subf %46, %53 : vector<16x32xf32>
    %55 = arith.mulf %54, %54 : vector<16x32xf32>
    %cst_23 = arith.constant dense<0.000000e+00> : vector<16xf32>
    %56 = vector.multi_reduction <add>, %55, %cst_23 [1] : vector<16x32xf32> to vector<16xf32>
    %57 = vector.shape_cast %56 : vector<16xf32> to vector<16x1xf32>
    %cst_24 = arith.constant 3.200000e+01 : f32
    %58 = vector.broadcast %cst_24 : f32 to vector<16x1xf32>
    %59 = arith.divf %57, %58 : vector<16x1xf32>
    %60 = vector.broadcast %52 : vector<16x1xf32> to vector<16x32xf32>
    %61 = arith.subf %46, %60 : vector<16x32xf32>
    %cst_25 = arith.constant 9.99999974E-6 : f32
    %62 = vector.broadcast %cst_25 : f32 to vector<16x1xf32>
    %63 = arith.addf %59, %62 : vector<16x1xf32>
    %64 = math.rsqrt %63 : vector<16x1xf32>
    %65 = vector.broadcast %64 : vector<16x1xf32> to vector<16x32xf32>
    %66 = arith.mulf %61, %65 : vector<16x32xf32>
    %67 = vector.broadcast %47 : vector<1x32xf32> to vector<16x32xf32>
    %68 = arith.mulf %66, %67 : vector<16x32xf32>
    %69 = vector.broadcast %48 : vector<1x32xf32> to vector<16x32xf32>
    %70 = arith.addf %68, %69 : vector<16x32xf32>
    %c0_26 = arith.constant 0 : index
    %c64 = arith.constant 64 : index
    %71 = vector.load %arg2[%c0_26, %c64] : memref<32x352xbf16, #tpu.memory_space<vmem>>, vector<32x96xbf16>
    %72 = arith.truncf %70 : vector<16x32xf32> to vector<16x32xbf16>
    %cst_27 = arith.constant dense<0.000000e+00> : vector<16x96xf32>
    %73 = tpu.matmul %72, %71, %cst_27 {dimension_numbers = #tpu.dot_dimension_numbers<[1], [0], [0], [1], [0, 0, 1, 1], [], []>} : vector<16x32xbf16>, vector<32x96xbf16>, vector<16x96xf32> -> vector<16x96xf32>
    %c19 = arith.constant 19 : index
    %c0_28 = arith.constant 0 : index
    %74 = vector.load %arg4[%c19, %c0_28] : memref<28x96xf32, #tpu.memory_space<vmem>>, vector<1x96xf32>
    %75 = vector.broadcast %74 : vector<1x96xf32> to vector<16x96xf32>
    %76 = arith.addf %73, %75 : vector<16x96xf32>
    %c0_29 = arith.constant 0 : index
    %c160 = arith.constant 160 : index
    %77 = vector.load %arg2[%c0_29, %c160] : memref<32x352xbf16, #tpu.memory_space<vmem>>, vector<32x32xbf16>
    %78 = vector.extract_strided_slice %76 {offsets = [0, 0], sizes = [16, 32], strides = [1, 1]} : vector<16x96xf32> to vector<16x32xf32>
    %cst_30 = arith.constant 0.353553385 : f32
    %79 = vector.broadcast %cst_30 : f32 to vector<16x32xf32>
    %80 = arith.mulf %78, %79 : vector<16x32xf32>
    %cst_31 = arith.constant 0.000000e+00 : f32
    %81 = vector.broadcast %cst_31 : f32 to vector<16x32xf32>
    %82 = vector.extract_strided_slice %80 {offsets = [0, 0], sizes = [16, 8], strides = [1, 1]} : vector<16x32xf32> to vector<16x8xf32>
    %83 = vector.shape_cast %82 : vector<16x8xf32> to vector<2x8x8xf32>
    %84 = vector.extract_strided_slice %76 {offsets = [0, 32], sizes = [16, 8], strides = [1, 1]} : vector<16x96xf32> to vector<16x8xf32>
    %85 = vector.shape_cast %84 : vector<16x8xf32> to vector<2x8x8xf32>
    %86 = vector.extract_strided_slice %76 {offsets = [0, 64], sizes = [16, 8], strides = [1, 1]} : vector<16x96xf32> to vector<16x8xf32>
    %87 = vector.shape_cast %86 : vector<16x8xf32> to vector<2x8x8xf32>
    %88 = arith.truncf %83 : vector<2x8x8xf32> to vector<2x8x8xbf16>
    %89 = arith.truncf %85 : vector<2x8x8xf32> to vector<2x8x8xbf16>
    "tpu.trace_start"() <{level = 10 : i32, message = "bqd,bkd->bqk"}> : () -> ()
    %cst_32 = arith.constant dense<0.000000e+00> : vector<2x8x8xf32>
    %90 = tpu.matmul %88, %89, %cst_32 {dimension_numbers = #tpu.dot_dimension_numbers<[2], [2], [1], [1], [0, 0, 0, 1, 1, 1], [0], [0]>} : vector<2x8x8xbf16>, vector<2x8x8xbf16>, vector<2x8x8xf32> -> vector<2x8x8xf32>
    "tpu.trace_stop"() : () -> ()
    %cst_33 = arith.constant dense<0xFF800000> : vector<2x8xf32>
    %91 = vector.multi_reduction <maximumf>, %90, %cst_33 [2] : vector<2x8x8xf32> to vector<2x8xf32>
    %92 = vector.shape_cast %91 : vector<2x8xf32> to vector<2x8x1xf32>
    %93 = vector.broadcast %92 : vector<2x8x1xf32> to vector<2x8x8xf32>
    %94 = arith.subf %90, %93 : vector<2x8x8xf32>
    %95 = math.exp %94 : vector<2x8x8xf32>
    %cst_34 = arith.constant dense<0.000000e+00> : vector<2x8xf32>
    %96 = vector.multi_reduction <add>, %95, %cst_34 [2] : vector<2x8x8xf32> to vector<2x8xf32>
    %97 = vector.shape_cast %96 : vector<2x8xf32> to vector<2x8x1xf32>
    %98 = tpu.reciprocal %97 {approx = true} : vector<2x8x1xf32> -> vector<2x8x1xf32>
    %99 = vector.broadcast %98 : vector<2x8x1xf32> to vector<2x8x8xf32>
    %100 = arith.mulf %95, %99 : vector<2x8x8xf32>
    %101 = arith.truncf %100 : vector<2x8x8xf32> to vector<2x8x8xbf16>
    %102 = arith.truncf %87 : vector<2x8x8xf32> to vector<2x8x8xbf16>
    "tpu.trace_start"() <{level = 10 : i32, message = "bqk,bkd->bqd"}> : () -> ()
    %cst_35 = arith.constant dense<0.000000e+00> : vector<2x8x8xf32>
    %103 = tpu.matmul %101, %102, %cst_35 {dimension_numbers = #tpu.dot_dimension_numbers<[2], [1], [1], [2], [0, 0, 0, 1, 1, 2], [0], [0]>} : vector<2x8x8xbf16>, vector<2x8x8xbf16>, vector<2x8x8xf32> -> vector<2x8x8xf32>
    "tpu.trace_stop"() : () -> ()
    %104 = vector.shape_cast %103 : vector<2x8x8xf32> to vector<16x8xf32>
    %105 = arith.truncf %104 : vector<16x8xf32> to vector<16x8xbf16>
    %106 = vector.extract_strided_slice %77 {offsets = [0, 0], sizes = [8, 32], strides = [1, 1]} : vector<32x32xbf16> to vector<8x32xbf16>
    %cst_36 = arith.constant dense<0.000000e+00> : vector<16x32xf32>
    %107 = tpu.matmul %105, %106, %cst_36 {dimension_numbers = #tpu.dot_dimension_numbers<[1], [0], [0], [1], [0, 0, 1, 1], [], []>} : vector<16x8xbf16>, vector<8x32xbf16>, vector<16x32xf32> -> vector<16x32xf32>
    %108 = arith.addf %81, %107 : vector<16x32xf32>
    %109 = vector.extract_strided_slice %80 {offsets = [0, 8], sizes = [16, 8], strides = [1, 1]} : vector<16x32xf32> to vector<16x8xf32>
    %110 = vector.shape_cast %109 : vector<16x8xf32> to vector<2x8x8xf32>
    %111 = vector.extract_strided_slice %76 {offsets = [0, 40], sizes = [16, 8], strides = [1, 1]} : vector<16x96xf32> to vector<16x8xf32>
    %112 = vector.shape_cast %111 : vector<16x8xf32> to vector<2x8x8xf32>
    %113 = vector.extract_strided_slice %76 {offsets = [0, 72], sizes = [16, 8], strides = [1, 1]} : vector<16x96xf32> to vector<16x8xf32>
    %114 = vector.shape_cast %113 : vector<16x8xf32> to vector<2x8x8xf32>
    %115 = arith.truncf %110 : vector<2x8x8xf32> to vector<2x8x8xbf16>
    %116 = arith.truncf %112 : vector<2x8x8xf32> to vector<2x8x8xbf16>
    "tpu.trace_start"() <{level = 10 : i32, message = "bqd,bkd->bqk"}> : () -> ()
    %cst_37 = arith.constant dense<0.000000e+00> : vector<2x8x8xf32>
    %117 = tpu.matmul %115, %116, %cst_37 {dimension_numbers = #tpu.dot_dimension_numbers<[2], [2], [1], [1], [0, 0, 0, 1, 1, 1], [0], [0]>} : vector<2x8x8xbf16>, vector<2x8x8xbf16>, vector<2x8x8xf32> -> vector<2x8x8xf32>
    "tpu.trace_stop"() : () -> ()
    %cst_38 = arith.constant dense<0xFF800000> : vector<2x8xf32>
    %118 = vector.multi_reduction <maximumf>, %117, %cst_38 [2] : vector<2x8x8xf32> to vector<2x8xf32>
    %119 = vector.shape_cast %118 : vector<2x8xf32> to vector<2x8x1xf32>
    %120 = vector.broadcast %119 : vector<2x8x1xf32> to vector<2x8x8xf32>
    %121 = arith.subf %117, %120 : vector<2x8x8xf32>
    %122 = math.exp %121 : vector<2x8x8xf32>
    %cst_39 = arith.constant dense<0.000000e+00> : vector<2x8xf32>
    %123 = vector.multi_reduction <add>, %122, %cst_39 [2] : vector<2x8x8xf32> to vector<2x8xf32>
    %124 = vector.shape_cast %123 : vector<2x8xf32> to vector<2x8x1xf32>
    %125 = tpu.reciprocal %124 {approx = true} : vector<2x8x1xf32> -> vector<2x8x1xf32>
    %126 = vector.broadcast %125 : vector<2x8x1xf32> to vector<2x8x8xf32>
    %127 = arith.mulf %122, %126 : vector<2x8x8xf32>
    %128 = arith.truncf %127 : vector<2x8x8xf32> to vector<2x8x8xbf16>
    %129 = arith.truncf %114 : vector<2x8x8xf32> to vector<2x8x8xbf16>
    "tpu.trace_start"() <{level = 10 : i32, message = "bqk,bkd->bqd"}> : () -> ()
    %cst_40 = arith.constant dense<0.000000e+00> : vector<2x8x8xf32>
    %130 = tpu.matmul %128, %129, %cst_40 {dimension_numbers = #tpu.dot_dimension_numbers<[2], [1], [1], [2], [0, 0, 0, 1, 1, 2], [0], [0]>} : vector<2x8x8xbf16>, vector<2x8x8xbf16>, vector<2x8x8xf32> -> vector<2x8x8xf32>
    "tpu.trace_stop"() : () -> ()
    %131 = vector.shape_cast %130 : vector<2x8x8xf32> to vector<16x8xf32>
    %132 = arith.truncf %131 : vector<16x8xf32> to vector<16x8xbf16>
    %133 = vector.extract_strided_slice %77 {offsets = [8, 0], sizes = [8, 32], strides = [1, 1]} : vector<32x32xbf16> to vector<8x32xbf16>
    %cst_41 = arith.constant dense<0.000000e+00> : vector<16x32xf32>
    %134 = tpu.matmul %132, %133, %cst_41 {dimension_numbers = #tpu.dot_dimension_numbers<[1], [0], [0], [1], [0, 0, 1, 1], [], []>} : vector<16x8xbf16>, vector<8x32xbf16>, vector<16x32xf32> -> vector<16x32xf32>
    %135 = arith.addf %108, %134 : vector<16x32xf32>
    %136 = vector.extract_strided_slice %80 {offsets = [0, 16], sizes = [16, 8], strides = [1, 1]} : vector<16x32xf32> to vector<16x8xf32>
    %137 = vector.shape_cast %136 : vector<16x8xf32> to vector<2x8x8xf32>
    %138 = vector.extract_strided_slice %76 {offsets = [0, 48], sizes = [16, 8], strides = [1, 1]} : vector<16x96xf32> to vector<16x8xf32>
    %139 = vector.shape_cast %138 : vector<16x8xf32> to vector<2x8x8xf32>
    %140 = vector.extract_strided_slice %76 {offsets = [0, 80], sizes = [16, 8], strides = [1, 1]} : vector<16x96xf32> to vector<16x8xf32>
    %141 = vector.shape_cast %140 : vector<16x8xf32> to vector<2x8x8xf32>
    %142 = arith.truncf %137 : vector<2x8x8xf32> to vector<2x8x8xbf16>
    %143 = arith.truncf %139 : vector<2x8x8xf32> to vector<2x8x8xbf16>
    "tpu.trace_start"() <{level = 10 : i32, message = "bqd,bkd->bqk"}> : () -> ()
    %cst_42 = arith.constant dense<0.000000e+00> : vector<2x8x8xf32>
    %144 = tpu.matmul %142, %143, %cst_42 {dimension_numbers = #tpu.dot_dimension_numbers<[2], [2], [1], [1], [0, 0, 0, 1, 1, 1], [0], [0]>} : vector<2x8x8xbf16>, vector<2x8x8xbf16>, vector<2x8x8xf32> -> vector<2x8x8xf32>
    "tpu.trace_stop"() : () -> ()
    %cst_43 = arith.constant dense<0xFF800000> : vector<2x8xf32>
    %145 = vector.multi_reduction <maximumf>, %144, %cst_43 [2] : vector<2x8x8xf32> to vector<2x8xf32>
    %146 = vector.shape_cast %145 : vector<2x8xf32> to vector<2x8x1xf32>
    %147 = vector.broadcast %146 : vector<2x8x1xf32> to vector<2x8x8xf32>
    %148 = arith.subf %144, %147 : vector<2x8x8xf32>
    %149 = math.exp %148 : vector<2x8x8xf32>
    %cst_44 = arith.constant dense<0.000000e+00> : vector<2x8xf32>
    %150 = vector.multi_reduction <add>, %149, %cst_44 [2] : vector<2x8x8xf32> to vector<2x8xf32>
    %151 = vector.shape_cast %150 : vector<2x8xf32> to vector<2x8x1xf32>
    %152 = tpu.reciprocal %151 {approx = true} : vector<2x8x1xf32> -> vector<2x8x1xf32>
    %153 = vector.broadcast %152 : vector<2x8x1xf32> to vector<2x8x8xf32>
    %154 = arith.mulf %149, %153 : vector<2x8x8xf32>
    %155 = arith.truncf %154 : vector<2x8x8xf32> to vector<2x8x8xbf16>
    %156 = arith.truncf %141 : vector<2x8x8xf32> to vector<2x8x8xbf16>
    "tpu.trace_start"() <{level = 10 : i32, message = "bqk,bkd->bqd"}> : () -> ()
    %cst_45 = arith.constant dense<0.000000e+00> : vector<2x8x8xf32>
    %157 = tpu.matmul %155, %156, %cst_45 {dimension_numbers = #tpu.dot_dimension_numbers<[2], [1], [1], [2], [0, 0, 0, 1, 1, 2], [0], [0]>} : vector<2x8x8xbf16>, vector<2x8x8xbf16>, vector<2x8x8xf32> -> vector<2x8x8xf32>
    "tpu.trace_stop"() : () -> ()
    %158 = vector.shape_cast %157 : vector<2x8x8xf32> to vector<16x8xf32>
    %159 = arith.truncf %158 : vector<16x8xf32> to vector<16x8xbf16>
    %160 = vector.extract_strided_slice %77 {offsets = [16, 0], sizes = [8, 32], strides = [1, 1]} : vector<32x32xbf16> to vector<8x32xbf16>
    %cst_46 = arith.constant dense<0.000000e+00> : vector<16x32xf32>
    %161 = tpu.matmul %159, %160, %cst_46 {dimension_numbers = #tpu.dot_dimension_numbers<[1], [0], [0], [1], [0, 0, 1, 1], [], []>} : vector<16x8xbf16>, vector<8x32xbf16>, vector<16x32xf32> -> vector<16x32xf32>
    %162 = arith.addf %135, %161 : vector<16x32xf32>
    %163 = vector.extract_strided_slice %80 {offsets = [0, 24], sizes = [16, 8], strides = [1, 1]} : vector<16x32xf32> to vector<16x8xf32>
    %164 = vector.shape_cast %163 : vector<16x8xf32> to vector<2x8x8xf32>
    %165 = vector.extract_strided_slice %76 {offsets = [0, 56], sizes = [16, 8], strides = [1, 1]} : vector<16x96xf32> to vector<16x8xf32>
    %166 = vector.shape_cast %165 : vector<16x8xf32> to vector<2x8x8xf32>
    %167 = vector.extract_strided_slice %76 {offsets = [0, 88], sizes = [16, 8], strides = [1, 1]} : vector<16x96xf32> to vector<16x8xf32>
    %168 = vector.shape_cast %167 : vector<16x8xf32> to vector<2x8x8xf32>
    %169 = arith.truncf %164 : vector<2x8x8xf32> to vector<2x8x8xbf16>
    %170 = arith.truncf %166 : vector<2x8x8xf32> to vector<2x8x8xbf16>
    "tpu.trace_start"() <{level = 10 : i32, message = "bqd,bkd->bqk"}> : () -> ()
    %cst_47 = arith.constant dense<0.000000e+00> : vector<2x8x8xf32>
    %171 = tpu.matmul %169, %170, %cst_47 {dimension_numbers = #tpu.dot_dimension_numbers<[2], [2], [1], [1], [0, 0, 0, 1, 1, 1], [0], [0]>} : vector<2x8x8xbf16>, vector<2x8x8xbf16>, vector<2x8x8xf32> -> vector<2x8x8xf32>
    "tpu.trace_stop"() : () -> ()
    %cst_48 = arith.constant dense<0xFF800000> : vector<2x8xf32>
    %172 = vector.multi_reduction <maximumf>, %171, %cst_48 [2] : vector<2x8x8xf32> to vector<2x8xf32>
    %173 = vector.shape_cast %172 : vector<2x8xf32> to vector<2x8x1xf32>
    %174 = vector.broadcast %173 : vector<2x8x1xf32> to vector<2x8x8xf32>
    %175 = arith.subf %171, %174 : vector<2x8x8xf32>
    %176 = math.exp %175 : vector<2x8x8xf32>
    %cst_49 = arith.constant dense<0.000000e+00> : vector<2x8xf32>
    %177 = vector.multi_reduction <add>, %176, %cst_49 [2] : vector<2x8x8xf32> to vector<2x8xf32>
    %178 = vector.shape_cast %177 : vector<2x8xf32> to vector<2x8x1xf32>
    %179 = tpu.reciprocal %178 {approx = true} : vector<2x8x1xf32> -> vector<2x8x1xf32>
    %180 = vector.broadcast %179 : vector<2x8x1xf32> to vector<2x8x8xf32>
    %181 = arith.mulf %176, %180 : vector<2x8x8xf32>
    %182 = arith.truncf %181 : vector<2x8x8xf32> to vector<2x8x8xbf16>
    %183 = arith.truncf %168 : vector<2x8x8xf32> to vector<2x8x8xbf16>
    "tpu.trace_start"() <{level = 10 : i32, message = "bqk,bkd->bqd"}> : () -> ()
    %cst_50 = arith.constant dense<0.000000e+00> : vector<2x8x8xf32>
    %184 = tpu.matmul %182, %183, %cst_50 {dimension_numbers = #tpu.dot_dimension_numbers<[2], [1], [1], [2], [0, 0, 0, 1, 1, 2], [0], [0]>} : vector<2x8x8xbf16>, vector<2x8x8xbf16>, vector<2x8x8xf32> -> vector<2x8x8xf32>
    "tpu.trace_stop"() : () -> ()
    %185 = vector.shape_cast %184 : vector<2x8x8xf32> to vector<16x8xf32>
    %186 = arith.truncf %185 : vector<16x8xf32> to vector<16x8xbf16>
    %187 = vector.extract_strided_slice %77 {offsets = [24, 0], sizes = [8, 32], strides = [1, 1]} : vector<32x32xbf16> to vector<8x32xbf16>
    %cst_51 = arith.constant dense<0.000000e+00> : vector<16x32xf32>
    %188 = tpu.matmul %186, %187, %cst_51 {dimension_numbers = #tpu.dot_dimension_numbers<[1], [0], [0], [1], [0, 0, 1, 1], [], []>} : vector<16x8xbf16>, vector<8x32xbf16>, vector<16x32xf32> -> vector<16x32xf32>
    %189 = arith.addf %162, %188 : vector<16x32xf32>
    %190 = arith.addf %46, %189 : vector<16x32xf32>
    %c20 = arith.constant 20 : index
    %c0_52 = arith.constant 0 : index
    %191 = vector.load %arg4[%c20, %c0_52] : memref<28x96xf32, #tpu.memory_space<vmem>>, vector<1x32xf32>
    %192 = vector.broadcast %191 : vector<1x32xf32> to vector<16x32xf32>
    %193 = arith.addf %190, %192 : vector<16x32xf32>
    %c2 = arith.constant 2 : index
    %c0_53 = arith.constant 0 : index
    %194 = vector.load %arg4[%c2, %c0_53] : memref<28x96xf32, #tpu.memory_space<vmem>>, vector<1x32xf32>
    %c7 = arith.constant 7 : index
    %c0_54 = arith.constant 0 : index
    %195 = vector.load %arg4[%c7, %c0_54] : memref<28x96xf32, #tpu.memory_space<vmem>>, vector<1x32xf32>
    %cst_55 = arith.constant dense<0.000000e+00> : vector<16xf32>
    %196 = vector.multi_reduction <add>, %193, %cst_55 [1] : vector<16x32xf32> to vector<16xf32>
    %197 = vector.shape_cast %196 : vector<16xf32> to vector<16x1xf32>
    %cst_56 = arith.constant 3.200000e+01 : f32
    %198 = vector.broadcast %cst_56 : f32 to vector<16x1xf32>
    %199 = arith.divf %197, %198 : vector<16x1xf32>
    %200 = vector.broadcast %199 : vector<16x1xf32> to vector<16x32xf32>
    %201 = arith.subf %193, %200 : vector<16x32xf32>
    %202 = arith.mulf %201, %201 : vector<16x32xf32>
    %cst_57 = arith.constant dense<0.000000e+00> : vector<16xf32>
    %203 = vector.multi_reduction <add>, %202, %cst_57 [1] : vector<16x32xf32> to vector<16xf32>
    %204 = vector.shape_cast %203 : vector<16xf32> to vector<16x1xf32>
    %cst_58 = arith.constant 3.200000e+01 : f32
    %205 = vector.broadcast %cst_58 : f32 to vector<16x1xf32>
    %206 = arith.divf %204, %205 : vector<16x1xf32>
    %207 = vector.broadcast %199 : vector<16x1xf32> to vector<16x32xf32>
    %208 = arith.subf %193, %207 : vector<16x32xf32>
    %cst_59 = arith.constant 9.99999974E-6 : f32
    %209 = vector.broadcast %cst_59 : f32 to vector<16x1xf32>
    %210 = arith.addf %206, %209 : vector<16x1xf32>
    %211 = math.rsqrt %210 : vector<16x1xf32>
    %212 = vector.broadcast %211 : vector<16x1xf32> to vector<16x32xf32>
    %213 = arith.mulf %208, %212 : vector<16x32xf32>
    %214 = vector.broadcast %194 : vector<1x32xf32> to vector<16x32xf32>
    %215 = arith.mulf %213, %214 : vector<16x32xf32>
    %216 = vector.broadcast %195 : vector<1x32xf32> to vector<16x32xf32>
    %217 = arith.addf %215, %216 : vector<16x32xf32>
    %c0_60 = arith.constant 0 : index
    %c192 = arith.constant 192 : index
    %218 = vector.load %arg2[%c0_60, %c192] : memref<32x352xbf16, #tpu.memory_space<vmem>>, vector<32x64xbf16>
    %219 = arith.truncf %217 : vector<16x32xf32> to vector<16x32xbf16>
    %cst_61 = arith.constant dense<0.000000e+00> : vector<16x64xf32>
    %220 = tpu.matmul %219, %218, %cst_61 {dimension_numbers = #tpu.dot_dimension_numbers<[1], [0], [0], [1], [0, 0, 1, 1], [], []>} : vector<16x32xbf16>, vector<32x64xbf16>, vector<16x64xf32> -> vector<16x64xf32>
    %c21 = arith.constant 21 : index
    %c0_62 = arith.constant 0 : index
    %221 = vector.load %arg4[%c21, %c0_62] : memref<28x96xf32, #tpu.memory_space<vmem>>, vector<1x64xf32>
    %222 = vector.broadcast %221 : vector<1x64xf32> to vector<16x64xf32>
    %223 = arith.addf %220, %222 : vector<16x64xf32>
    %224 = vector.extract_strided_slice %223 {offsets = [0, 0], sizes = [16, 32], strides = [1, 1]} : vector<16x64xf32> to vector<16x32xf32>
    %225 = vector.extract_strided_slice %223 {offsets = [0, 32], sizes = [16, 32], strides = [1, 1]} : vector<16x64xf32> to vector<16x32xf32>
    %226 = arith.negf %225 : vector<16x32xf32>
    %227 = math.exp %226 : vector<16x32xf32>
    %cst_63 = arith.constant 1.000000e+00 : f32
    %228 = vector.broadcast %cst_63 : f32 to vector<16x32xf32>
    %229 = arith.addf %228, %227 : vector<16x32xf32>
    %230 = arith.divf %228, %229 : vector<16x32xf32>
    %231 = arith.mulf %224, %230 : vector<16x32xf32>
    %232 = tpu.iota {dimensions = array<i32: 0>} : vector<16x1xi32>
    %c8_i32 = arith.constant 8 : i32
    %c0_i32 = arith.constant 0 : i32
    %233 = arith.cmpi eq, %c8_i32, %c0_i32 : i32
    %c1_i32 = arith.constant 1 : i32
    %234 = arith.select %233, %c1_i32, %c8_i32 : i32
    %235 = vector.broadcast %234 : i32 to vector<16x1xi32>
    %236 = arith.remsi %232, %235 : vector<16x1xi32>
    %c0_i32_64 = arith.constant 0 : i32
    %237 = vector.broadcast %c0_i32_64 : i32 to vector<16x1xi32>
    %238 = arith.cmpi ne, %236, %237 : vector<16x1xi32>
    %c0_i32_65 = arith.constant 0 : i32
    %239 = vector.broadcast %c0_i32_65 : i32 to vector<16x1xi32>
    %240 = arith.cmpi slt, %236, %239 : vector<16x1xi32>
    %c0_i32_66 = arith.constant 0 : i32
    %241 = arith.cmpi slt, %234, %c0_i32_66 : i32
    %242 = vector.broadcast %241 : i1 to vector<16x1xi1>
    %243 = vector.broadcast %242 : vector<16x1xi1> to vector<16x1xi1>
    %244 = arith.xori %240, %243 : vector<16x1xi1>
    %245 = arith.andi %244, %238 : vector<16x1xi1>
    %246 = vector.broadcast %234 : i32 to vector<16x1xi32>
    %247 = arith.addi %236, %246 : vector<16x1xi32>
    %248 = arith.select %245, %247, %236 : vector<16x1xi1>, vector<16x1xi32>
    %c22 = arith.constant 22 : index
    %c0_67 = arith.constant 0 : index
    %249 = vector.load %arg4[%c22, %c0_67] : memref<28x96xf32, #tpu.memory_space<vmem>>, vector<1x32xf32>
    %250 = vector.shape_cast %249 : vector<1x32xf32> to vector<1x32xf32>
    %251 = vector.broadcast %250 : vector<1x32xf32> to vector<16x32xf32>
    %c3_i32 = arith.constant 3 : i32
    %252 = tpu.dynamic_rotate %231 by %c3_i32 dim 0 : vector<16x32xf32>, i32 -> vector<16x32xf32>
    %c-3_i32 = arith.constant -3 : i32
    %253 = vector.broadcast %c-3_i32 : i32 to vector<16x1xi32>
    %254 = arith.addi %248, %253 : vector<16x1xi32>
    %c0_i32_68 = arith.constant 0 : i32
    %255 = vector.broadcast %c0_i32_68 : i32 to vector<16x1xi32>
    %256 = arith.cmpi sge, %254, %255 : vector<16x1xi32>
    %c-3_i32_69 = arith.constant -3 : i32
    %257 = vector.broadcast %c-3_i32_69 : i32 to vector<16x1xi32>
    %258 = arith.addi %248, %257 : vector<16x1xi32>
    %c8_i32_70 = arith.constant 8 : i32
    %259 = vector.broadcast %c8_i32_70 : i32 to vector<16x1xi32>
    %260 = arith.cmpi slt, %258, %259 : vector<16x1xi32>
    %261 = arith.andi %256, %260 : vector<16x1xi1>
    %c10 = arith.constant 10 : index
    %c0_71 = arith.constant 0 : index
    %262 = vector.load %arg4[%c10, %c0_71] : memref<28x96xf32, #tpu.memory_space<vmem>>, vector<1x32xf32>
    %cst_72 = arith.constant 0.000000e+00 : f32
    %263 = vector.shape_cast %261 : vector<16x1xi1> to vector<16x1xi1>
    %264 = vector.broadcast %263 : vector<16x1xi1> to vector<16x32xi1>
    %265 = vector.broadcast %cst_72 : f32 to vector<16x32xf32>
    %266 = arith.select %264, %252, %265 : vector<16x32xi1>, vector<16x32xf32>
    %267 = vector.broadcast %262 : vector<1x32xf32> to vector<16x32xf32>
    %268 = arith.mulf %266, %267 : vector<16x32xf32>
    %269 = arith.addf %251, %268 : vector<16x32xf32>
    %c2_i32 = arith.constant 2 : i32
    %270 = tpu.dynamic_rotate %231 by %c2_i32 dim 0 : vector<16x32xf32>, i32 -> vector<16x32xf32>
    %c-2_i32 = arith.constant -2 : i32
    %271 = vector.broadcast %c-2_i32 : i32 to vector<16x1xi32>
    %272 = arith.addi %248, %271 : vector<16x1xi32>
    %c0_i32_73 = arith.constant 0 : i32
    %273 = vector.broadcast %c0_i32_73 : i32 to vector<16x1xi32>
    %274 = arith.cmpi sge, %272, %273 : vector<16x1xi32>
    %c-2_i32_74 = arith.constant -2 : i32
    %275 = vector.broadcast %c-2_i32_74 : i32 to vector<16x1xi32>
    %276 = arith.addi %248, %275 : vector<16x1xi32>
    %c8_i32_75 = arith.constant 8 : i32
    %277 = vector.broadcast %c8_i32_75 : i32 to vector<16x1xi32>
    %278 = arith.cmpi slt, %276, %277 : vector<16x1xi32>
    %279 = arith.andi %274, %278 : vector<16x1xi1>
    %c11 = arith.constant 11 : index
    %c0_76 = arith.constant 0 : index
    %280 = vector.load %arg4[%c11, %c0_76] : memref<28x96xf32, #tpu.memory_space<vmem>>, vector<1x32xf32>
    %cst_77 = arith.constant 0.000000e+00 : f32
    %281 = vector.shape_cast %279 : vector<16x1xi1> to vector<16x1xi1>
    %282 = vector.broadcast %281 : vector<16x1xi1> to vector<16x32xi1>
    %283 = vector.broadcast %cst_77 : f32 to vector<16x32xf32>
    %284 = arith.select %282, %270, %283 : vector<16x32xi1>, vector<16x32xf32>
    %285 = vector.broadcast %280 : vector<1x32xf32> to vector<16x32xf32>
    %286 = arith.mulf %284, %285 : vector<16x32xf32>
    %287 = arith.addf %269, %286 : vector<16x32xf32>
    %c1_i32_78 = arith.constant 1 : i32
    %288 = tpu.dynamic_rotate %231 by %c1_i32_78 dim 0 : vector<16x32xf32>, i32 -> vector<16x32xf32>
    %c-1_i32 = arith.constant -1 : i32
    %289 = vector.broadcast %c-1_i32 : i32 to vector<16x1xi32>
    %290 = arith.addi %248, %289 : vector<16x1xi32>
    %c0_i32_79 = arith.constant 0 : i32
    %291 = vector.broadcast %c0_i32_79 : i32 to vector<16x1xi32>
    %292 = arith.cmpi sge, %290, %291 : vector<16x1xi32>
    %c-1_i32_80 = arith.constant -1 : i32
    %293 = vector.broadcast %c-1_i32_80 : i32 to vector<16x1xi32>
    %294 = arith.addi %248, %293 : vector<16x1xi32>
    %c8_i32_81 = arith.constant 8 : i32
    %295 = vector.broadcast %c8_i32_81 : i32 to vector<16x1xi32>
    %296 = arith.cmpi slt, %294, %295 : vector<16x1xi32>
    %297 = arith.andi %292, %296 : vector<16x1xi1>
    %c12 = arith.constant 12 : index
    %c0_82 = arith.constant 0 : index
    %298 = vector.load %arg4[%c12, %c0_82] : memref<28x96xf32, #tpu.memory_space<vmem>>, vector<1x32xf32>
    %cst_83 = arith.constant 0.000000e+00 : f32
    %299 = vector.shape_cast %297 : vector<16x1xi1> to vector<16x1xi1>
    %300 = vector.broadcast %299 : vector<16x1xi1> to vector<16x32xi1>
    %301 = vector.broadcast %cst_83 : f32 to vector<16x32xf32>
    %302 = arith.select %300, %288, %301 : vector<16x32xi1>, vector<16x32xf32>
    %303 = vector.broadcast %298 : vector<1x32xf32> to vector<16x32xf32>
    %304 = arith.mulf %302, %303 : vector<16x32xf32>
    %305 = arith.addf %287, %304 : vector<16x32xf32>
    %c0_i32_84 = arith.constant 0 : i32
    %306 = vector.broadcast %c0_i32_84 : i32 to vector<16x1xi32>
    %307 = arith.addi %248, %306 : vector<16x1xi32>
    %c0_i32_85 = arith.constant 0 : i32
    %308 = vector.broadcast %c0_i32_85 : i32 to vector<16x1xi32>
    %309 = arith.cmpi sge, %307, %308 : vector<16x1xi32>
    %c0_i32_86 = arith.constant 0 : i32
    %310 = vector.broadcast %c0_i32_86 : i32 to vector<16x1xi32>
    %311 = arith.addi %248, %310 : vector<16x1xi32>
    %c8_i32_87 = arith.constant 8 : i32
    %312 = vector.broadcast %c8_i32_87 : i32 to vector<16x1xi32>
    %313 = arith.cmpi slt, %311, %312 : vector<16x1xi32>
    %314 = arith.andi %309, %313 : vector<16x1xi1>
    %c13 = arith.constant 13 : index
    %c0_88 = arith.constant 0 : index
    %315 = vector.load %arg4[%c13, %c0_88] : memref<28x96xf32, #tpu.memory_space<vmem>>, vector<1x32xf32>
    %cst_89 = arith.constant 0.000000e+00 : f32
    %316 = vector.shape_cast %314 : vector<16x1xi1> to vector<16x1xi1>
    %317 = vector.broadcast %316 : vector<16x1xi1> to vector<16x32xi1>
    %318 = vector.broadcast %cst_89 : f32 to vector<16x32xf32>
    %319 = arith.select %317, %231, %318 : vector<16x32xi1>, vector<16x32xf32>
    %320 = vector.broadcast %315 : vector<1x32xf32> to vector<16x32xf32>
    %321 = arith.mulf %319, %320 : vector<16x32xf32>
    %322 = arith.addf %305, %321 : vector<16x32xf32>
    %c15_i32 = arith.constant 15 : i32
    %323 = tpu.dynamic_rotate %231 by %c15_i32 dim 0 : vector<16x32xf32>, i32 -> vector<16x32xf32>
    %c1_i32_90 = arith.constant 1 : i32
    %324 = vector.broadcast %c1_i32_90 : i32 to vector<16x1xi32>
    %325 = arith.addi %248, %324 : vector<16x1xi32>
    %c0_i32_91 = arith.constant 0 : i32
    %326 = vector.broadcast %c0_i32_91 : i32 to vector<16x1xi32>
    %327 = arith.cmpi sge, %325, %326 : vector<16x1xi32>
    %c1_i32_92 = arith.constant 1 : i32
    %328 = vector.broadcast %c1_i32_92 : i32 to vector<16x1xi32>
    %329 = arith.addi %248, %328 : vector<16x1xi32>
    %c8_i32_93 = arith.constant 8 : i32
    %330 = vector.broadcast %c8_i32_93 : i32 to vector<16x1xi32>
    %331 = arith.cmpi slt, %329, %330 : vector<16x1xi32>
    %332 = arith.andi %327, %331 : vector<16x1xi1>
    %c14 = arith.constant 14 : index
    %c0_94 = arith.constant 0 : index
    %333 = vector.load %arg4[%c14, %c0_94] : memref<28x96xf32, #tpu.memory_space<vmem>>, vector<1x32xf32>
    %cst_95 = arith.constant 0.000000e+00 : f32
    %334 = vector.shape_cast %332 : vector<16x1xi1> to vector<16x1xi1>
    %335 = vector.broadcast %334 : vector<16x1xi1> to vector<16x32xi1>
    %336 = vector.broadcast %cst_95 : f32 to vector<16x32xf32>
    %337 = arith.select %335, %323, %336 : vector<16x32xi1>, vector<16x32xf32>
    %338 = vector.broadcast %333 : vector<1x32xf32> to vector<16x32xf32>
    %339 = arith.mulf %337, %338 : vector<16x32xf32>
    %340 = arith.addf %322, %339 : vector<16x32xf32>
    %c14_i32 = arith.constant 14 : i32
    %341 = tpu.dynamic_rotate %231 by %c14_i32 dim 0 : vector<16x32xf32>, i32 -> vector<16x32xf32>
    %c2_i32_96 = arith.constant 2 : i32
    %342 = vector.broadcast %c2_i32_96 : i32 to vector<16x1xi32>
    %343 = arith.addi %248, %342 : vector<16x1xi32>
    %c0_i32_97 = arith.constant 0 : i32
    %344 = vector.broadcast %c0_i32_97 : i32 to vector<16x1xi32>
    %345 = arith.cmpi sge, %343, %344 : vector<16x1xi32>
    %c2_i32_98 = arith.constant 2 : i32
    %346 = vector.broadcast %c2_i32_98 : i32 to vector<16x1xi32>
    %347 = arith.addi %248, %346 : vector<16x1xi32>
    %c8_i32_99 = arith.constant 8 : i32
    %348 = vector.broadcast %c8_i32_99 : i32 to vector<16x1xi32>
    %349 = arith.cmpi slt, %347, %348 : vector<16x1xi32>
    %350 = arith.andi %345, %349 : vector<16x1xi1>
    %c15 = arith.constant 15 : index
    %c0_100 = arith.constant 0 : index
    %351 = vector.load %arg4[%c15, %c0_100] : memref<28x96xf32, #tpu.memory_space<vmem>>, vector<1x32xf32>
    %cst_101 = arith.constant 0.000000e+00 : f32
    %352 = vector.shape_cast %350 : vector<16x1xi1> to vector<16x1xi1>
    %353 = vector.broadcast %352 : vector<16x1xi1> to vector<16x32xi1>
    %354 = vector.broadcast %cst_101 : f32 to vector<16x32xf32>
    %355 = arith.select %353, %341, %354 : vector<16x32xi1>, vector<16x32xf32>
    %356 = vector.broadcast %351 : vector<1x32xf32> to vector<16x32xf32>
    %357 = arith.mulf %355, %356 : vector<16x32xf32>
    %358 = arith.addf %340, %357 : vector<16x32xf32>
    %c13_i32 = arith.constant 13 : i32
    %359 = tpu.dynamic_rotate %231 by %c13_i32 dim 0 : vector<16x32xf32>, i32 -> vector<16x32xf32>
    %c3_i32_102 = arith.constant 3 : i32
    %360 = vector.broadcast %c3_i32_102 : i32 to vector<16x1xi32>
    %361 = arith.addi %248, %360 : vector<16x1xi32>
    %c0_i32_103 = arith.constant 0 : i32
    %362 = vector.broadcast %c0_i32_103 : i32 to vector<16x1xi32>
    %363 = arith.cmpi sge, %361, %362 : vector<16x1xi32>
    %c3_i32_104 = arith.constant 3 : i32
    %364 = vector.broadcast %c3_i32_104 : i32 to vector<16x1xi32>
    %365 = arith.addi %248, %364 : vector<16x1xi32>
    %c8_i32_105 = arith.constant 8 : i32
    %366 = vector.broadcast %c8_i32_105 : i32 to vector<16x1xi32>
    %367 = arith.cmpi slt, %365, %366 : vector<16x1xi32>
    %368 = arith.andi %363, %367 : vector<16x1xi1>
    %c16 = arith.constant 16 : index
    %c0_106 = arith.constant 0 : index
    %369 = vector.load %arg4[%c16, %c0_106] : memref<28x96xf32, #tpu.memory_space<vmem>>, vector<1x32xf32>
    %cst_107 = arith.constant 0.000000e+00 : f32
    %370 = vector.shape_cast %368 : vector<16x1xi1> to vector<16x1xi1>
    %371 = vector.broadcast %370 : vector<16x1xi1> to vector<16x32xi1>
    %372 = vector.broadcast %cst_107 : f32 to vector<16x32xf32>
    %373 = arith.select %371, %359, %372 : vector<16x32xi1>, vector<16x32xf32>
    %374 = vector.broadcast %369 : vector<1x32xf32> to vector<16x32xf32>
    %375 = arith.mulf %373, %374 : vector<16x32xf32>
    %376 = arith.addf %358, %375 : vector<16x32xf32>
    %c23 = arith.constant 23 : index
    %c0_108 = arith.constant 0 : index
    %377 = vector.load %arg4[%c23, %c0_108] : memref<28x96xf32, #tpu.memory_space<vmem>>, vector<1x32xf32>
    %378 = vector.broadcast %377 : vector<1x32xf32> to vector<16x32xf32>
    %379 = arith.mulf %376, %378 : vector<16x32xf32>
    %c24 = arith.constant 24 : index
    %c0_109 = arith.constant 0 : index
    %380 = vector.load %arg4[%c24, %c0_109] : memref<28x96xf32, #tpu.memory_space<vmem>>, vector<1x32xf32>
    %381 = vector.broadcast %380 : vector<1x32xf32> to vector<16x32xf32>
    %382 = arith.addf %379, %381 : vector<16x32xf32>
    %383 = arith.negf %382 : vector<16x32xf32>
    %384 = math.exp %383 : vector<16x32xf32>
    %cst_110 = arith.constant 1.000000e+00 : f32
    %385 = vector.broadcast %cst_110 : f32 to vector<16x32xf32>
    %386 = arith.addf %385, %384 : vector<16x32xf32>
    %387 = arith.divf %385, %386 : vector<16x32xf32>
    %388 = arith.mulf %382, %387 : vector<16x32xf32>
    %c0_111 = arith.constant 0 : index
    %c256 = arith.constant 256 : index
    %389 = vector.load %arg2[%c0_111, %c256] : memref<32x352xbf16, #tpu.memory_space<vmem>>, vector<32x32xbf16>
    %390 = arith.truncf %388 : vector<16x32xf32> to vector<16x32xbf16>
    %cst_112 = arith.constant dense<0.000000e+00> : vector<16x32xf32>
    %391 = tpu.matmul %390, %389, %cst_112 {dimension_numbers = #tpu.dot_dimension_numbers<[1], [0], [0], [1], [0, 0, 1, 1], [], []>} : vector<16x32xbf16>, vector<32x32xbf16>, vector<16x32xf32> -> vector<16x32xf32>
    %c25 = arith.constant 25 : index
    %c0_113 = arith.constant 0 : index
    %392 = vector.load %arg4[%c25, %c0_113] : memref<28x96xf32, #tpu.memory_space<vmem>>, vector<1x32xf32>
    %393 = vector.broadcast %392 : vector<1x32xf32> to vector<16x32xf32>
    %394 = arith.addf %391, %393 : vector<16x32xf32>
    %395 = arith.addf %193, %394 : vector<16x32xf32>
    %c3 = arith.constant 3 : index
    %c0_114 = arith.constant 0 : index
    %396 = vector.load %arg4[%c3, %c0_114] : memref<28x96xf32, #tpu.memory_space<vmem>>, vector<1x32xf32>
    %c8 = arith.constant 8 : index
    %c0_115 = arith.constant 0 : index
    %397 = vector.load %arg4[%c8, %c0_115] : memref<28x96xf32, #tpu.memory_space<vmem>>, vector<1x32xf32>
    %cst_116 = arith.constant dense<0.000000e+00> : vector<16xf32>
    %398 = vector.multi_reduction <add>, %395, %cst_116 [1] : vector<16x32xf32> to vector<16xf32>
    %399 = vector.shape_cast %398 : vector<16xf32> to vector<16x1xf32>
    %cst_117 = arith.constant 3.200000e+01 : f32
    %400 = vector.broadcast %cst_117 : f32 to vector<16x1xf32>
    %401 = arith.divf %399, %400 : vector<16x1xf32>
    %402 = vector.broadcast %401 : vector<16x1xf32> to vector<16x32xf32>
    %403 = arith.subf %395, %402 : vector<16x32xf32>
    %404 = arith.mulf %403, %403 : vector<16x32xf32>
    %cst_118 = arith.constant dense<0.000000e+00> : vector<16xf32>
    %405 = vector.multi_reduction <add>, %404, %cst_118 [1] : vector<16x32xf32> to vector<16xf32>
    %406 = vector.shape_cast %405 : vector<16xf32> to vector<16x1xf32>
    %cst_119 = arith.constant 3.200000e+01 : f32
    %407 = vector.broadcast %cst_119 : f32 to vector<16x1xf32>
    %408 = arith.divf %406, %407 : vector<16x1xf32>
    %409 = vector.broadcast %401 : vector<16x1xf32> to vector<16x32xf32>
    %410 = arith.subf %395, %409 : vector<16x32xf32>
    %cst_120 = arith.constant 9.99999974E-6 : f32
    %411 = vector.broadcast %cst_120 : f32 to vector<16x1xf32>
    %412 = arith.addf %408, %411 : vector<16x1xf32>
    %413 = math.rsqrt %412 : vector<16x1xf32>
    %414 = vector.broadcast %413 : vector<16x1xf32> to vector<16x32xf32>
    %415 = arith.mulf %410, %414 : vector<16x32xf32>
    %416 = vector.broadcast %396 : vector<1x32xf32> to vector<16x32xf32>
    %417 = arith.mulf %415, %416 : vector<16x32xf32>
    %418 = vector.broadcast %397 : vector<1x32xf32> to vector<16x32xf32>
    %419 = arith.addf %417, %418 : vector<16x32xf32>
    %c0_121 = arith.constant 0 : index
    %c288 = arith.constant 288 : index
    %420 = vector.load %arg2[%c0_121, %c288] : memref<32x352xbf16, #tpu.memory_space<vmem>>, vector<32x64xbf16>
    %421 = arith.truncf %419 : vector<16x32xf32> to vector<16x32xbf16>
    %cst_122 = arith.constant dense<0.000000e+00> : vector<16x64xf32>
    %422 = tpu.matmul %421, %420, %cst_122 {dimension_numbers = #tpu.dot_dimension_numbers<[1], [0], [0], [1], [0, 0, 1, 1], [], []>} : vector<16x32xbf16>, vector<32x64xbf16>, vector<16x64xf32> -> vector<16x64xf32>
    %c26 = arith.constant 26 : index
    %c0_123 = arith.constant 0 : index
    %423 = vector.load %arg4[%c26, %c0_123] : memref<28x96xf32, #tpu.memory_space<vmem>>, vector<1x64xf32>
    %424 = vector.broadcast %423 : vector<1x64xf32> to vector<16x64xf32>
    %425 = arith.addf %422, %424 : vector<16x64xf32>
    %426 = arith.negf %425 : vector<16x64xf32>
    %427 = math.exp %426 : vector<16x64xf32>
    %cst_124 = arith.constant 1.000000e+00 : f32
    %428 = vector.broadcast %cst_124 : f32 to vector<16x64xf32>
    %429 = arith.addf %428, %427 : vector<16x64xf32>
    %430 = arith.divf %428, %429 : vector<16x64xf32>
    %431 = arith.mulf %425, %430 : vector<16x64xf32>
    %c0_125 = arith.constant 0 : index
    %c32 = arith.constant 32 : index
    %432 = vector.load %arg3[%c0_125, %c32] : memref<64x64xbf16, #tpu.memory_space<vmem>>, vector<64x32xbf16>
    %433 = arith.truncf %431 : vector<16x64xf32> to vector<16x64xbf16>
    %cst_126 = arith.constant dense<0.000000e+00> : vector<16x32xf32>
    %434 = tpu.matmul %433, %432, %cst_126 {dimension_numbers = #tpu.dot_dimension_numbers<[1], [0], [0], [1], [0, 0, 1, 1], [], []>} : vector<16x64xbf16>, vector<64x32xbf16>, vector<16x32xf32> -> vector<16x32xf32>
    %c27 = arith.constant 27 : index
    %c0_127 = arith.constant 0 : index
    %435 = vector.load %arg4[%c27, %c0_127] : memref<28x96xf32, #tpu.memory_space<vmem>>, vector<1x32xf32>
    %436 = vector.broadcast %435 : vector<1x32xf32> to vector<16x32xf32>
    %437 = arith.addf %434, %436 : vector<16x32xf32>
    %cst_128 = arith.constant 5.000000e-01 : f32
    %438 = vector.broadcast %cst_128 : f32 to vector<16x32xf32>
    %439 = arith.mulf %438, %437 : vector<16x32xf32>
    %440 = arith.addf %395, %439 : vector<16x32xf32>
    %c4 = arith.constant 4 : index
    %c0_129 = arith.constant 0 : index
    %441 = vector.load %arg4[%c4, %c0_129] : memref<28x96xf32, #tpu.memory_space<vmem>>, vector<1x32xf32>
    %c9 = arith.constant 9 : index
    %c0_130 = arith.constant 0 : index
    %442 = vector.load %arg4[%c9, %c0_130] : memref<28x96xf32, #tpu.memory_space<vmem>>, vector<1x32xf32>
    %cst_131 = arith.constant dense<0.000000e+00> : vector<16xf32>
    %443 = vector.multi_reduction <add>, %440, %cst_131 [1] : vector<16x32xf32> to vector<16xf32>
    %444 = vector.shape_cast %443 : vector<16xf32> to vector<16x1xf32>
    %cst_132 = arith.constant 3.200000e+01 : f32
    %445 = vector.broadcast %cst_132 : f32 to vector<16x1xf32>
    %446 = arith.divf %444, %445 : vector<16x1xf32>
    %447 = vector.broadcast %446 : vector<16x1xf32> to vector<16x32xf32>
    %448 = arith.subf %440, %447 : vector<16x32xf32>
    %449 = arith.mulf %448, %448 : vector<16x32xf32>
    %cst_133 = arith.constant dense<0.000000e+00> : vector<16xf32>
    %450 = vector.multi_reduction <add>, %449, %cst_133 [1] : vector<16x32xf32> to vector<16xf32>
    %451 = vector.shape_cast %450 : vector<16xf32> to vector<16x1xf32>
    %cst_134 = arith.constant 3.200000e+01 : f32
    %452 = vector.broadcast %cst_134 : f32 to vector<16x1xf32>
    %453 = arith.divf %451, %452 : vector<16x1xf32>
    %454 = vector.broadcast %446 : vector<16x1xf32> to vector<16x32xf32>
    %455 = arith.subf %440, %454 : vector<16x32xf32>
    %cst_135 = arith.constant 9.99999974E-6 : f32
    %456 = vector.broadcast %cst_135 : f32 to vector<16x1xf32>
    %457 = arith.addf %453, %456 : vector<16x1xf32>
    %458 = math.rsqrt %457 : vector<16x1xf32>
    %459 = vector.broadcast %458 : vector<16x1xf32> to vector<16x32xf32>
    %460 = arith.mulf %455, %459 : vector<16x32xf32>
    %461 = vector.broadcast %441 : vector<1x32xf32> to vector<16x32xf32>
    %462 = arith.mulf %460, %461 : vector<16x32xf32>
    %463 = vector.broadcast %442 : vector<1x32xf32> to vector<16x32xf32>
    %464 = arith.addf %462, %463 : vector<16x32xf32>
    %465 = vector.shape_cast %464 : vector<16x32xf32> to vector<2x8x32xf32>
    %c0_136 = arith.constant 0 : index
    %c0_137 = arith.constant 0 : index
    %c0_138 = arith.constant 0 : index
    %466 = vector.load %arg5[%c0_136, %c0_137, %c0_138] : memref<2x8x32xf32, #tpu.memory_space<vmem>>, vector<2x8x32xf32>
    tpu.vector_store %arg5[%c0_136, %c0_137, %c0_138], %465 {strides = array<i32>} : memref<2x8x32xf32, #tpu.memory_space<vmem>>, vector<2x8x32xf32>,
    return
  }
  func.func @transform_0(%arg0: i32) -> (i32, i32, i32) {
    %c0_i32 = arith.constant 0 : i32
    %c0_i32_0 = arith.constant 0 : i32
    %c0_i32_1 = arith.constant 0 : i32
    return %arg0, %c0_i32, %c0_i32_0 : i32, i32, i32
  }
  func.func @transform_1(%arg0: i32) -> (i32, i32) {
    %c0_i32 = arith.constant 0 : i32
    %c0_i32_0 = arith.constant 0 : i32
    %c0_i32_1 = arith.constant 0 : i32
    return %c0_i32, %c0_i32_0 : i32, i32
  }
  func.func @transform_2(%arg0: i32) -> (i32, i32) {
    %c0_i32 = arith.constant 0 : i32
    %c0_i32_0 = arith.constant 0 : i32
    %c0_i32_1 = arith.constant 0 : i32
    return %c0_i32, %c0_i32_0 : i32, i32
  }
  func.func @transform_3(%arg0: i32) -> (i32, i32) {
    %c0_i32 = arith.constant 0 : i32
    %c0_i32_0 = arith.constant 0 : i32
    %c0_i32_1 = arith.constant 0 : i32
    return %c0_i32, %c0_i32_0 : i32, i32
  }
  func.func @transform_4(%arg0: i32) -> (i32, i32, i32) {
    %c0_i32 = arith.constant 0 : i32
    %c0_i32_0 = arith.constant 0 : i32
    %c0_i32_1 = arith.constant 0 : i32
    return %arg0, %c0_i32, %c0_i32_0 : i32, i32, i32
  }
}

</mosaic_0001>

<llo_original>
// kernel: tpu_custom_call.1
$region0: #{tpu_custom_call.1}
  #allocation0 [shape = 'u32[]', space=smem, size = 0x4, offset = 0x4, fixed_abs, tag = 'smem constant byte address 0x4 - core index']
  #allocation1 [shape = 'u32[144,128]{1,0:T(1,128)}', space=vmem, size = 0x12000, scoped, tag = 'internal scratch']
  %s0 = inlined_call_operand.hbm [shape: f32[2,8,32], index: 0, kind: input, shape index: {}]
  %s1 = inlined_call_operand.hbm [shape: bf16[32,352], index: 1, kind: input, shape index: {}]
  %s2 = inlined_call_operand.hbm [shape: bf16[64,64], index: 2, kind: input, shape index: {}]
  %s3 = inlined_call_operand.hbm [shape: f32[28,96], index: 3, kind: input, shape index: {}]
  %s4 = inlined_call_operand.hbm [shape: f32[2,8,32], index: 4, kind: output, shape index: {}]
  %s5 = sld [smem:[#allocation0]]
  $region42: #{tpu_custom_call.1} parent=0
    _
  %s7 = ssub.s32 1, %s5
  %s8 = scalar_select 0, %s7, %s5
  $region1: #{tpu_custom_call.1} parent=0
    #allocation2 [shape = 'u8[8192]{0}', space=vmem, size = 0x2000, scoped, tag = 'input window, operand 0, single buffered']
    #allocation3 [shape = 's32[1]{0}', space=sflag, size = 0x4, scoped, tag = 'scoped memory for tpu_custom_call.1']
    #allocation4 [shape = 's32[1]{0}', space=sflag, size = 0x4, scoped, tag = 'scoped memory for tpu_custom_call.1']
    #allocation5 [shape = 'u8[24576]{0}', space=vmem, size = 0x6000, scoped, tag = 'input window, operand 1, single buffered']
    #allocation6 [shape = 's32[1]{0}', space=sflag, size = 0x4, scoped, tag = 'scoped memory for tpu_custom_call.1']
    #allocation7 [shape = 'u8[16384]{0}', space=vmem, size = 0x4000, scoped, tag = 'input window, operand 2, single buffered']
    #allocation8 [shape = 'u8[16384]{0}', space=vmem, size = 0x4000, scoped, tag = 'input window, operand 3, single buffered']
    #allocation9 [shape = 's32[1]{0}', space=sflag, size = 0x4, scoped, tag = 'scoped memory for tpu_custom_call.1']
    #allocation10 [shape = 'u8[8192]{0}', space=vmem, size = 0x2000, scoped, tag = 'output window, operand 0, single buffered']
    %9 = vsyncpa [#allocation3], 0
    %10 = vsyncpa [#allocation6], 0
    %11 = vsyncpa [#allocation9], 0
    %12 = vsyncpa [#allocation4], 0
    // Predicated region
    $region2: #{tpu_custom_call.1} parent=1 // pred_check
      _
    $region3: #{tpu_custom_call.1} parent=1 // pred_check_branch
      %14 = sbr.rel (0) target = $region5
    $region4: #{tpu_custom_call.1} parent=1 // pred_region
      %s16 = ssub.s32 256, 256
      %17 = vsyncadd [#allocation3], %s16
      %s18 = sshll.u32 [#allocation2], 4
      %s19 = int_to_ptr.vmem [resolvable:$true] %s18
      %24 = dma.hbm_to_vmem [thread:$0]  %s0, 256, %s19, [#allocation3], 128, 128, 8
    $region5: #{tpu_custom_call.1} parent=1 // pred_fallthru
      _
    // Predicated region
    $region6: #{tpu_custom_call.1} parent=1 // pred_check
      _
    $region7: #{tpu_custom_call.1} parent=1 // pred_check_branch
      %26 = sbr.rel (0) target = $region9
    $region8: #{tpu_custom_call.1} parent=1 // pred_region
      %s28 = ssub.s32 768, 768
      %29 = vsyncadd [#allocation6], %s28
      %s30 = sshll.u32 [#allocation5], 4
      %s31 = int_to_ptr.vmem [resolvable:$true] %s30
      %36 = dma.hbm_to_vmem [thread:$0]  %s1, 768, %s31, [#allocation6], 192, 192, 12
    $region9: #{tpu_custom_call.1} parent=1 // pred_fallthru
      _
    // Predicated region
    $region10: #{tpu_custom_call.1} parent=1 // pred_check
      _
    $region11: #{tpu_custom_call.1} parent=1 // pred_check_branch
      %38 = sbr.rel (0) target = $region13
    $region12: #{tpu_custom_call.1} parent=1 // pred_region
      %s40 = ssub.s32 512, 512
      %41 = vsyncadd [#allocation6], %s40
      %s42 = sshll.u32 [#allocation7], 4
      %s43 = int_to_ptr.vmem [resolvable:$true] %s42
      %48 = dma.hbm_to_vmem [thread:$0]  %s2, 512, %s43, [#allocation6], 64, 64, 4
    $region13: #{tpu_custom_call.1} parent=1 // pred_fallthru
      _
    // Predicated region
    $region14: #{tpu_custom_call.1} parent=1 // pred_check
      _
    $region15: #{tpu_custom_call.1} parent=1 // pred_check_branch
      %50 = sbr.rel (0) target = $region17
    $region16: #{tpu_custom_call.1} parent=1 // pred_region
      %s52 = ssub.s32 512, 512
      %53 = vsyncadd [#allocation9], %s52
      %s54 = sshll.u32 [#allocation8], 4
      %s55 = int_to_ptr.vmem [resolvable:$true] %s54
      %60 = dma.hbm_to_vmem [thread:$0]  %s3, 512, %s55, [#allocation9], 128, 128, 8
    $region17: #{tpu_custom_call.1} parent=1 // pred_fallthru
      _
    // Predicated region
    $region18: #{tpu_custom_call.1} parent=1 // pred_check
      _
    $region19: #{tpu_custom_call.1} parent=1 // pred_check_branch
      %62 = sbr.rel (0) target = $region21
    $region20: #{tpu_custom_call.1} parent=1 // pred_region
      %63 = dma.done [#allocation3], 256
    $region21: #{tpu_custom_call.1} parent=1 // pred_fallthru
      _
    // Predicated region
    $region22: #{tpu_custom_call.1} parent=1 // pred_check
      _
    $region23: #{tpu_custom_call.1} parent=1 // pred_check_branch
      %65 = sbr.rel (0) target = $region25
    $region24: #{tpu_custom_call.1} parent=1 // pred_region
      %66 = dma.done [#allocation6], 768
    $region25: #{tpu_custom_call.1} parent=1 // pred_fallthru
      _
    // Predicated region
    $region26: #{tpu_custom_call.1} parent=1 // pred_check
      _
    $region27: #{tpu_custom_call.1} parent=1 // pred_check_branch
      %68 = sbr.rel (0) target = $region29
    $region28: #{tpu_custom_call.1} parent=1 // pred_region
      %69 = dma.done [#allocation6], 512
    $region29: #{tpu_custom_call.1} parent=1 // pred_fallthru
      _
    // Predicated region
    $region30: #{tpu_custom_call.1} parent=1 // pred_check
      _
    $region31: #{tpu_custom_call.1} parent=1 // pred_check_branch
      %71 = sbr.rel (0) target = $region33
    $region32: #{tpu_custom_call.1} parent=1 // pred_region
      %72 = dma.done [#allocation9], 512
    $region33: #{tpu_custom_call.1} parent=1 // pred_fallthru
      _
    %v74 = vld [vmem:[#allocation2] sm:$0xff]
    %v75 = vld [vmem:[#allocation2 + $0x8] sm:$0xff]
    %v76 = vld [vmem:[#allocation8] sm:$0x1]
    %v77 = vld [vmem:[#allocation8 + $0x5] sm:$0x1]
    %vm78 = vcmask 261120
    %v79 = vsel %vm78, %v74, 0.0
    %80 = vadd.xlane.f32.xlu0 %v79
    %v81 = vpop.xlane.xlu0 %80
    %v82 = vsel %vm78, %v75, 0.0
    %83 = vadd.xlane.f32.xlu0 %v82
    %v84 = vpop.xlane.xlu0 %83
    %v85 = vrcp.pop 32.0
    %v86 = vmul.f32 %v81, %v85
    %v87 = vmul.f32 %v84, %v85
    %v88 = vsub.f32 %v74, %v86
    %v89 = vsub.f32 %v75, %v87
    %v90 = vmul.f32 %v88, %v88
    %v91 = vmul.f32 %v89, %v89
    %v92 = vsel %vm78, %v90, 0.0
    %93 = vadd.xlane.f32.xlu0 %v92
    %v94 = vpop.xlane.xlu0 %93
    %v95 = vsel %vm78, %v91, 0.0
    %96 = vadd.xlane.f32.xlu0 %v95
    %v97 = vpop.xlane.xlu0 %96
    %v98 = vmul.f32 %v94, %v85
    %v99 = vmul.f32 %v97, %v85
    %v100 = vadd.f32 %v98, 1e-05
    %v101 = vadd.f32 %v99, 1e-05
    %v102 = vrsqrt.pop %v100
    %v103 = vrsqrt.pop %v101
    %v104 = vmul.f32 %v88, %v102
    %v105 = vmul.f32 %v89, %v103
    %v106 = vlaneseq
    %v107 = vshrl.u32 %v106, 7
    %v108 = vsub.s32 0, %v107
    %v109 = vrot.slane %v76, %v108
    %v110 = vmul.f32 %v104, %v109
    %v111 = vmul.f32 %v105, %v109
    %v112 = vlaneseq
    %v113 = vshrl.u32 %v112, 7
    %v114 = vsub.s32 0, %v113
    %v115 = vrot.slane %v77, %v114
    %v116 = vadd.f32 %v110, %v115
    %v117 = vadd.f32 %v111, %v115
    %v118 = vld [vmem:[#allocation5] sm:$0xf]
    %v119 = vld [vmem:[#allocation5 + $0xc] sm:$0xf]
    %v120 = vld [vmem:[#allocation5 + $0x18] sm:$0xf]
    %v121 = vld [vmem:[#allocation5 + $0x24] sm:$0xf]
    %v122 = vpack.c.bf16 %v117, %v116
    %v123 = vld [vmem:[#allocation8 + $0x11] sm:$0x1]
    %v124 = vlaneseq
    %v125 = vshrl.u32 %v124, 7
    %v126 = vsub.s32 0, %v125
    %v127 = vrot.slane %v123, %v126
    %v132 = vunpack.c.l.b16 %v118
    %v133 = vunpack.c.l.b16 %v119
    %v134 = vunpack.c.l.b16 %v120
    %v135 = vunpack.c.l.b16 %v121
    %v136 = vpack.c.b16 %v133, %v132
    %v137 = vpack.c.b16 %v135, %v134
    %v141 = vsel %vm78, %v122, 0
    %143 = vmatprep.subr.bf16.mxu0 0
    %144 = vmatpush1.bf16.msra.mxu0 %v136
    %145 = vmatprep.subr.bf16.mxu0 0
    %146 = vmatpush1.bf16.msra.mxu0 %v137
    %147 = vmatprep.subr.bf16.mxu0 0
    %148 = vmatpush1.bf16.msra.mxu0 0
    %149 = vmatprep.subr.bf16.mxu0 0
    %150 = vmatpush1.bf16.msra.mxu0 0
    %151 = vmatprep.subr.bf16.mxu0 0
    %152 = vmatpush1.bf16.msra.mxu0 0
    %153 = vmatprep.subr.bf16.mxu0 0
    %154 = vmatpush1.bf16.msra.mxu0 0
    %155 = vmatprep.subr.bf16.mxu0 0
    %156 = vmatpush1.bf16.msra.mxu0 0
    %157 = vmatprep.subr.bf16.mxu0 0
    %158 = vmatpush1.bf16.msra.mxu0 0
    %159 = vmatprep.subr.bf16.mxu0 0
    %160 = vmatpush1.bf16.msra.mxu0 0
    %161 = vmatprep.subr.bf16.mxu0 0
    %162 = vmatpush1.bf16.msra.mxu0 0
    %163 = vmatprep.subr.bf16.mxu0 0
    %164 = vmatpush1.bf16.msra.mxu0 0
    %165 = vmatprep.subr.bf16.mxu0 0
    %166 = vmatpush1.bf16.msra.mxu0 0
    %167 = vmatprep.subr.bf16.mxu0 0
    %168 = vmatpush1.bf16.msra.mxu0 0
    %169 = vmatprep.subr.bf16.mxu0 0
    %170 = vmatpush1.bf16.msra.mxu0 0
    %171 = vmatprep.subr.bf16.mxu0 0
    %172 = vmatpush1.bf16.msra.mxu0 0
    %173 = vmatprep.subr.bf16.mxu0 0
    %174 = vmatpush1.bf16.msra.mxu0 0
    %175 = vmatprep.mubr.bf16.mxu0 0
    %176 = vmatmul.mubr.bf16.gmra.mrb[0].mxu0 %v141
    %v177 = vpop.f32.mrb[0].mxu0
    %v178 = vadd.f32 %v127, %v177
    %v179 = vpop.f32.mrb[0].mxu0
    %v180 = vpop.f32.mrb[0].mxu0
    %v181 = vadd.f32 %v127, %v180
    %v182 = vpop.f32.mrb[0].mxu0
    %183 = vdwg.mxu0
    %v184 = vxor.u32 %v178, 2147483648
    %v185 = vxor.u32 %v181, 2147483648
    %v186 = vmul.f32 %v184, 1.442695
    %v187 = vpow.pop %v186
    %v188 = vmul.f32 %v185, 1.442695
    %v189 = vpow.pop %v188
    %v190 = vadd.f32 %v187, 1.0
    %v191 = vadd.f32 %v189, 1.0
    %v192 = vrcp.pop %v190
    %v193 = vmul.f32 1.0, %v192
    %v194 = vrcp.pop %v191
    %v195 = vmul.f32 1.0, %v194
    %v196 = vmul.f32 %v178, %v193
    %v197 = vmul.f32 %v181, %v195
    %v198 = vld [vmem:[#allocation7] sm:$0xf]
    %v199 = vld [vmem:[#allocation7 + $0x4] sm:$0xf]
    %v200 = vld [vmem:[#allocation7 + $0x8] sm:$0xf]
    %v201 = vld [vmem:[#allocation7 + $0xc] sm:$0xf]
    %v202 = vld [vmem:[#allocation7 + $0x10] sm:$0xf]
    %v203 = vld [vmem:[#allocation7 + $0x14] sm:$0xf]
    %v204 = vld [vmem:[#allocation7 + $0x18] sm:$0xf]
    %v205 = vld [vmem:[#allocation7 + $0x1c] sm:$0xf]
    %v206 = vpack.c.bf16 %v197, %v196
    %v207 = vld [vmem:[#allocation8 + $0x12] sm:$0x1]
    %v208 = vlaneseq
    %v209 = vshrl.u32 %v208, 7
    %v210 = vsub.s32 0, %v209
    %v211 = vrot.slane %v207, %v210
    %v220 = vunpack.c.l.b16 %v198
    %v221 = vunpack.c.l.b16 %v199
    %v222 = vunpack.c.l.b16 %v200
    %v223 = vunpack.c.l.b16 %v201
    %v224 = vunpack.c.l.b16 %v202
    %v225 = vunpack.c.l.b16 %v203
    %v226 = vunpack.c.l.b16 %v204
    %v227 = vunpack.c.l.b16 %v205
    %v228 = vpack.c.b16 %v221, %v220
    %v229 = vpack.c.b16 %v223, %v222
    %v230 = vpack.c.b16 %v225, %v224
    %v231 = vpack.c.b16 %v227, %v226
    %vm236 = vcmask 523264
    %v238 = vsel %vm236, %v206, 0
    %240 = vmatprep.subr.bf16.mxu0 0
    %241 = vmatpush1.bf16.msra.mxu0 %v228
    %242 = vmatprep.subr.bf16.mxu0 0
    %243 = vmatpush1.bf16.msra.mxu0 %v229
    %244 = vmatprep.subr.bf16.mxu0 0
    %245 = vmatpush1.bf16.msra.mxu0 %v230
    %246 = vmatprep.subr.bf16.mxu0 0
    %247 = vmatpush1.bf16.msra.mxu0 %v231
    %248 = vmatprep.subr.bf16.mxu0 0
    %249 = vmatpush1.bf16.msra.mxu0 0
    %250 = vmatprep.subr.bf16.mxu0 0
    %251 = vmatpush1.bf16.msra.mxu0 0
    %252 = vmatprep.subr.bf16.mxu0 0
    %253 = vmatpush1.bf16.msra.mxu0 0
    %254 = vmatprep.subr.bf16.mxu0 0
    %255 = vmatpush1.bf16.msra.mxu0 0
    %256 = vmatprep.subr.bf16.mxu0 0
    %257 = vmatpush1.bf16.msra.mxu0 0
    %258 = vmatprep.subr.bf16.mxu0 0
    %259 = vmatpush1.bf16.msra.mxu0 0
    %260 = vmatprep.subr.bf16.mxu0 0
    %261 = vmatpush1.bf16.msra.mxu0 0
    %262 = vmatprep.subr.bf16.mxu0 0
    %263 = vmatpush1.bf16.msra.mxu0 0
    %264 = vmatprep.subr.bf16.mxu0 0
    %265 = vmatpush1.bf16.msra.mxu0 0
    %266 = vmatprep.subr.bf16.mxu0 0
    %267 = vmatpush1.bf16.msra.mxu0 0
    %268 = vmatprep.subr.bf16.mxu0 0
    %269 = vmatpush1.bf16.msra.mxu0 0
    %270 = vmatprep.subr.bf16.mxu0 0
    %271 = vmatpush1.bf16.msra.mxu0 0
    %272 = vmatprep.mubr.bf16.mxu0 0
    %273 = vmatmul.mubr.bf16.gmra.mrb[0].mxu0 %v238
    %v274 = vpop.f32.mrb[0].mxu0
    %v275 = vadd.f32 %v211, %v274
    %v276 = vpop.f32.mrb[0].mxu0
    %v277 = vpop.f32.mrb[0].mxu0
    %v278 = vadd.f32 %v211, %v277
    %v279 = vpop.f32.mrb[0].mxu0
    %280 = vdwg.mxu0
    %v281 = vmul.f32 %v275, 0.5
    %v282 = vmul.f32 %v278, 0.5
    %v283 = vadd.f32 %v74, %v281
    %v284 = vadd.f32 %v75, %v282
    %v285 = vld [vmem:[#allocation8 + $0x1] sm:$0x1]
    %v286 = vld [vmem:[#allocation8 + $0x6] sm:$0x1]
    %v287 = vsel %vm78, %v283, 0.0
    %288 = vadd.xlane.f32.xlu0 %v287
    %v289 = vpop.xlane.xlu0 %288
    %v290 = vsel %vm78, %v284, 0.0
    %291 = vadd.xlane.f32.xlu0 %v290
    %v292 = vpop.xlane.xlu0 %291
    %v293 = vmul.f32 %v289, %v85
    %v294 = vmul.f32 %v292, %v85
    %v295 = vsub.f32 %v283, %v293
    %v296 = vsub.f32 %v284, %v294
    %v297 = vmul.f32 %v295, %v295
    %v298 = vmul.f32 %v296, %v296
    %v299 = vsel %vm78, %v297, 0.0
    %300 = vadd.xlane.f32.xlu0 %v299
    %v301 = vpop.xlane.xlu0 %300
    %v302 = vsel %vm78, %v298, 0.0
    %303 = vadd.xlane.f32.xlu0 %v302
    %v304 = vpop.xlane.xlu0 %303
    %v305 = vmul.f32 %v301, %v85
    %v306 = vmul.f32 %v304, %v85
    %v307 = vadd.f32 %v305, 1e-05
    %v308 = vadd.f32 %v306, 1e-05
    %v309 = vrsqrt.pop %v307
    %v310 = vrsqrt.pop %v308
    %v311 = vmul.f32 %v295, %v309
    %v312 = vmul.f32 %v296, %v310
    %v313 = vlaneseq
    %v314 = vshrl.u32 %v313, 7
    %v315 = vsub.s32 0, %v314
    %v316 = vrot.slane %v285, %v315
    %v317 = vmul.f32 %v311, %v316
    %v318 = vmul.f32 %v312, %v316
    %v319 = vlaneseq
    %v320 = vshrl.u32 %v319, 7
    %v321 = vsub.s32 0, %v320
    %v322 = vrot.slane %v286, %v321
    %v323 = vadd.f32 %v317, %v322
    %v324 = vadd.f32 %v318, %v322
    %v325 = vld [vmem:[#allocation5] sm:$0xff]
    %v326 = vld [vmem:[#allocation5 + $0xc] sm:$0xff]
    %v327 = vld [vmem:[#allocation5 + $0x18] sm:$0xff]
    %v328 = vld [vmem:[#allocation5 + $0x24] sm:$0xff]
    %v329 = vpack.c.bf16 %v324, %v323
    %v330 = vld [vmem:[#allocation8 + $0x13] sm:$0x1]
    %v331 = vlaneseq
    %v332 = vshrl.u32 %v331, 7
    %v333 = vsub.s32 0, %v332
    %v334 = vrot.slane %v330, %v333
    %v339 = vunpack.c.l.b16 %v325
    %v340 = vunpack.c.h.b16 %v325
    %v341 = vunpack.c.l.b16 %v326
    %v342 = vunpack.c.h.b16 %v326
    %v343 = vunpack.c.l.b16 %v327
    %v344 = vunpack.c.h.b16 %v327
    %v345 = vunpack.c.l.b16 %v328
    %v346 = vunpack.c.h.b16 %v328
    %v347 = vpack.c.b16 %v341, %v339
    %v348 = vpack.c.b16 %v342, %v340
    %v349 = vpack.c.b16 %v345, %v343
    %v350 = vpack.c.b16 %v346, %v344
    %351 = vrot.lane.b32.xlu0 %v347, 64
    %v352 = vpop.permute.xlu0 %351
    %353 = vrot.lane.b32.xlu0 %v348, 64
    %v354 = vpop.permute.xlu0 %353
    %355 = vrot.lane.b32.xlu0 %v349, 64
    %v356 = vpop.permute.xlu0 %355
    %357 = vrot.lane.b32.xlu0 %v350, 64
    %v358 = vpop.permute.xlu0 %357
    %vm359 = vcmask 523264
    %v360 = vsel %vm359, %v352, %v354
    %v361 = vsel %vm359, %v356, %v358
    %v365 = vsel %vm78, %v329, 0
    %367 = vmatprep.subr.bf16.mxu0 0
    %368 = vmatpush1.bf16.msra.mxu0 %v360
    %369 = vmatprep.subr.bf16.mxu0 0
    %370 = vmatpush1.bf16.msra.mxu0 %v361
    %371 = vmatprep.subr.bf16.mxu0 0
    %372 = vmatpush1.bf16.msra.mxu0 0
    %373 = vmatprep.subr.bf16.mxu0 0
    %374 = vmatpush1.bf16.msra.mxu0 0
    %375 = vmatprep.subr.bf16.mxu0 0
    %376 = vmatpush1.bf16.msra.mxu0 0
    %377 = vmatprep.subr.bf16.mxu0 0
    %378 = vmatpush1.bf16.msra.mxu0 0
    %379 = vmatprep.subr.bf16.mxu0 0
    %380 = vmatpush1.bf16.msra.mxu0 0
    %381 = vmatprep.subr.bf16.mxu0 0
    %382 = vmatpush1.bf16.msra.mxu0 0
    %383 = vmatprep.subr.bf16.mxu0 0
    %384 = vmatpush1.bf16.msra.mxu0 0
    %385 = vmatprep.subr.bf16.mxu0 0
    %386 = vmatpush1.bf16.msra.mxu0 0
    %387 = vmatprep.subr.bf16.mxu0 0
    %388 = vmatpush1.bf16.msra.mxu0 0
    %389 = vmatprep.subr.bf16.mxu0 0
    %390 = vmatpush1.bf16.msra.mxu0 0
    %391 = vmatprep.subr.bf16.mxu0 0
    %392 = vmatpush1.bf16.msra.mxu0 0
    %393 = vmatprep.subr.bf16.mxu0 0
    %394 = vmatpush1.bf16.msra.mxu0 0
    %395 = vmatprep.subr.bf16.mxu0 0
    %396 = vmatpush1.bf16.msra.mxu0 0
    %397 = vmatprep.subr.bf16.mxu0 0
    %398 = vmatpush1.bf16.msra.mxu0 0
    %399 = vmatprep.mubr.bf16.mxu0 0
    %400 = vmatmul.mubr.bf16.gmra.mrb[0].mxu0 %v365
    %v401 = vpop.f32.mrb[0].mxu0
    %v402 = vadd.f32 %v334, %v401
    %v403 = vpop.f32.mrb[0].mxu0
    %v404 = vpop.f32.mrb[0].mxu0
    %v405 = vadd.f32 %v334, %v404
    %v406 = vpop.f32.mrb[0].mxu0
    %407 = vdwg.mxu0
    %v408 = vld [vmem:[#allocation5 + $0x4] sm:$0xf]
    %v409 = vld [vmem:[#allocation5 + $0x10] sm:$0xf]
    %v410 = vld [vmem:[#allocation5 + $0x1c] sm:$0xf]
    %v411 = vld [vmem:[#allocation5 + $0x28] sm:$0xf]
    %v412 = vmul.f32 %v402, 0.35355338
    %v413 = vmul.f32 %v405, 0.35355338
    %v414 = vpack.c.bf16 %v412, %v412
    %v415 = vpack.c.bf16 %v413, %v413
    %v416 = vpack.c.bf16 %v402, %v402
    %v417 = vpack.c.bf16 %v405, %v405
    %419 = vrot.lane.b32.xlu0 %v416, 96
    %v420 = vpop.permute.xlu0 %419
    %vm421 = vcmask 64512
    %v423 = vsel %vm421, %v414, 0
    %v426 = vsel %vm421, %v420, 0
    %428 = vmatprep.subr.bf16.mxu0 0
    %429 = vmatpush1.bf16.xpose.msra.mxu0 %v426
    %430 = vmatprep.subr.bf16.mxu0 0
    %431 = vmatpush1.bf16.xpose.msra.mxu0 0
    %432 = vmatprep.subr.bf16.mxu0 0
    %433 = vmatpush1.bf16.xpose.msra.mxu0 0
    %434 = vmatprep.subr.bf16.mxu0 0
    %435 = vmatpush1.bf16.xpose.msra.mxu0 0
    %436 = vmatprep.subr.bf16.mxu0 0
    %437 = vmatpush1.bf16.xpose.msra.mxu0 0
    %438 = vmatprep.subr.bf16.mxu0 0
    %439 = vmatpush1.bf16.xpose.msra.mxu0 0
    %440 = vmatprep.subr.bf16.mxu0 0
    %441 = vmatpush1.bf16.xpose.msra.mxu0 0
    %442 = vmatprep.subr.bf16.mxu0 0
    %443 = vmatpush1.bf16.xpose.msra.mxu0 0
    %444 = vmatprep.subr.bf16.mxu0 0
    %445 = vmatpush1.bf16.xpose.msra.mxu0 0
    %446 = vmatprep.subr.bf16.mxu0 0
    %447 = vmatpush1.bf16.xpose.msra.mxu0 0
    %448 = vmatprep.subr.bf16.mxu0 0
    %449 = vmatpush1.bf16.xpose.msra.mxu0 0
    %450 = vmatprep.subr.bf16.mxu0 0
    %451 = vmatpush1.bf16.xpose.msra.mxu0 0
    %452 = vmatprep.subr.bf16.mxu0 0
    %453 = vmatpush1.bf16.xpose.msra.mxu0 0
    %454 = vmatprep.subr.bf16.mxu0 0
    %455 = vmatpush1.bf16.xpose.msra.mxu0 0
    %456 = vmatprep.subr.bf16.mxu0 0
    %457 = vmatpush1.bf16.xpose.msra.mxu0 0
    %458 = vmatprep.subr.bf16.mxu0 0
    %459 = vmatpush1.bf16.xpose.msra.mxu0 0
    %460 = vmatprep.mubr.bf16.mxu0 0
    %461 = vmatmul.mubr.bf16.gmra.mrb[0].mxu0 %v423
    %v462 = vpop.f32.mrb[0].mxu0
    %v463 = vadd.f32 0.0, %v462
    %v464 = vpop.f32.mrb[0].mxu0
    %v465 = vpop.f32.mrb[0].mxu0
    %v466 = vpop.f32.mrb[0].mxu0
    %467 = vdwg.mxu0
    %469 = vrot.lane.b32.xlu0 %v417, 96
    %v470 = vpop.permute.xlu0 %469
    %v472 = vsel %vm421, %v415, 0
    %v475 = vsel %vm421, %v470, 0
    %477 = vmatprep.subr.bf16.mxu0 0
    %478 = vmatpush1.bf16.xpose.msra.mxu0 %v475
    %479 = vmatprep.subr.bf16.mxu0 0
    %480 = vmatpush1.bf16.xpose.msra.mxu0 0
    %481 = vmatprep.subr.bf16.mxu0 0
    %482 = vmatpush1.bf16.xpose.msra.mxu0 0
    %483 = vmatprep.subr.bf16.mxu0 0
    %484 = vmatpush1.bf16.xpose.msra.mxu0 0
    %485 = vmatprep.subr.bf16.mxu0 0
    %486 = vmatpush1.bf16.xpose.msra.mxu0 0
    %487 = vmatprep.subr.bf16.mxu0 0
    %488 = vmatpush1.bf16.xpose.msra.mxu0 0
    %489 = vmatprep.subr.bf16.mxu0 0
    %490 = vmatpush1.bf16.xpose.msra.mxu0 0
    %491 = vmatprep.subr.bf16.mxu0 0
    %492 = vmatpush1.bf16.xpose.msra.mxu0 0
    %493 = vmatprep.subr.bf16.mxu0 0
    %494 = vmatpush1.bf16.xpose.msra.mxu0 0
    %495 = vmatprep.subr.bf16.mxu0 0
    %496 = vmatpush1.bf16.xpose.msra.mxu0 0
    %497 = vmatprep.subr.bf16.mxu0 0
    %498 = vmatpush1.bf16.xpose.msra.mxu0 0
    %499 = vmatprep.subr.bf16.mxu0 0
    %500 = vmatpush1.bf16.xpose.msra.mxu0 0
    %501 = vmatprep.subr.bf16.mxu0 0
    %502 = vmatpush1.bf16.xpose.msra.mxu0 0
    %503 = vmatprep.subr.bf16.mxu0 0
    %504 = vmatpush1.bf16.xpose.msra.mxu0 0
    %505 = vmatprep.subr.bf16.mxu0 0
    %506 = vmatpush1.bf16.xpose.msra.mxu0 0
    %507 = vmatprep.subr.bf16.mxu0 0
    %508 = vmatpush1.bf16.xpose.msra.mxu0 0
    %509 = vmatprep.mubr.bf16.mxu0 0
    %510 = vmatmul.mubr.bf16.gmra.mrb[0].mxu0 %v472
    %v511 = vpop.f32.mrb[0].mxu0
    %v512 = vadd.f32 0.0, %v511
    %v513 = vpop.f32.mrb[0].mxu0
    %v514 = vpop.f32.mrb[0].mxu0
    %v515 = vpop.f32.mrb[0].mxu0
    %516 = vdwg.mxu0
    %v517 = vsel %vm421, %v463, -inf
    %518 = vmax.xlane.f32.xlu0 %v517
    %v519 = vpop.xlane.xlu0 %518
    %v520 = vsel %vm421, %v512, -inf
    %521 = vmax.xlane.f32.xlu0 %v520
    %v522 = vpop.xlane.xlu0 %521
    %v523 = vsub.f32 %v463, %v519
    %v524 = vsub.f32 %v512, %v522
    %v525 = vmul.f32 %v523, 1.442695
    %v526 = vpow.pop %v525
    %v527 = vmul.f32 %v524, 1.442695
    %v528 = vpow.pop %v527
    %v529 = vsel %vm421, %v526, 0.0
    %530 = vadd.xlane.f32.xlu0 %v529
    %v531 = vpop.xlane.xlu0 %530
    %v532 = vsel %vm421, %v528, 0.0
    %533 = vadd.xlane.f32.xlu0 %v532
    %v534 = vpop.xlane.xlu0 %533
    %v535 = vrcp.pop %v531
    %v536 = vrcp.pop %v534
    %v537 = vmul.f32 %v526, %v535
    %v538 = vmul.f32 %v528, %v536
    %v539 = vpack.c.bf16 %v537, %v537
    %v540 = vpack.c.bf16 %v538, %v538
    %541 = vrot.lane.b32.xlu0 %v416, 64
    %v542 = vpop.permute.xlu0 %541
    %v544 = vsel %vm421, %v539, 0
    %vm546 = vcmask 1043456
    %v548 = vsel %vm546, %v542, 0
    %550 = vmatprep.subr.bf16.mxu0 0
    %551 = vmatpush1.bf16.msra.mxu0 %v548
    %552 = vmatprep.subr.bf16.mxu0 0
    %553 = vmatpush1.bf16.msra.mxu0 0
    %554 = vmatprep.subr.bf16.mxu0 0
    %555 = vmatpush1.bf16.msra.mxu0 0
    %556 = vmatprep.subr.bf16.mxu0 0
    %557 = vmatpush1.bf16.msra.mxu0 0
    %558 = vmatprep.subr.bf16.mxu0 0
    %559 = vmatpush1.bf16.msra.mxu0 0
    %560 = vmatprep.subr.bf16.mxu0 0
    %561 = vmatpush1.bf16.msra.mxu0 0
    %562 = vmatprep.subr.bf16.mxu0 0
    %563 = vmatpush1.bf16.msra.mxu0 0
    %564 = vmatprep.subr.bf16.mxu0 0
    %565 = vmatpush1.bf16.msra.mxu0 0
    %566 = vmatprep.subr.bf16.mxu0 0
    %567 = vmatpush1.bf16.msra.mxu0 0
    %568 = vmatprep.subr.bf16.mxu0 0
    %569 = vmatpush1.bf16.msra.mxu0 0
    %570 = vmatprep.subr.bf16.mxu0 0
    %571 = vmatpush1.bf16.msra.mxu0 0
    %572 = vmatprep.subr.bf16.mxu0 0
    %573 = vmatpush1.bf16.msra.mxu0 0
    %574 = vmatprep.subr.bf16.mxu0 0
    %575 = vmatpush1.bf16.msra.mxu0 0
    %576 = vmatprep.subr.bf16.mxu0 0
    %577 = vmatpush1.bf16.msra.mxu0 0
    %578 = vmatprep.subr.bf16.mxu0 0
    %579 = vmatpush1.bf16.msra.mxu0 0
    %580 = vmatprep.subr.bf16.mxu0 0
    %581 = vmatpush1.bf16.msra.mxu0 0
    %582 = vmatprep.mubr.bf16.mxu0 0
    %583 = vmatmul.mubr.bf16.gmra.mrb[0].mxu0 %v544
    %v584 = vpop.f32.mrb[0].mxu0
    %v585 = vadd.f32 0.0, %v584
    %v586 = vpop.f32.mrb[0].mxu0
    %v587 = vpop.f32.mrb[0].mxu0
    %v588 = vpop.f32.mrb[0].mxu0
    %589 = vdwg.mxu0
    %590 = vrot.lane.b32.xlu0 %v417, 64
    %v591 = vpop.permute.xlu0 %590
    %v593 = vsel %vm421, %v540, 0
    %v596 = vsel %vm546, %v591, 0
    %598 = vmatprep.subr.bf16.mxu0 0
    %599 = vmatpush1.bf16.msra.mxu0 %v596
    %600 = vmatprep.subr.bf16.mxu0 0
    %601 = vmatpush1.bf16.msra.mxu0 0
    %602 = vmatprep.subr.bf16.mxu0 0
    %603 = vmatpush1.bf16.msra.mxu0 0
    %604 = vmatprep.subr.bf16.mxu0 0
    %605 = vmatpush1.bf16.msra.mxu0 0
    %606 = vmatprep.subr.bf16.mxu0 0
    %607 = vmatpush1.bf16.msra.mxu0 0
    %608 = vmatprep.subr.bf16.mxu0 0
    %609 = vmatpush1.bf16.msra.mxu0 0
    %610 = vmatprep.subr.bf16.mxu0 0
    %611 = vmatpush1.bf16.msra.mxu0 0
    %612 = vmatprep.subr.bf16.mxu0 0
    %613 = vmatpush1.bf16.msra.mxu0 0
    %614 = vmatprep.subr.bf16.mxu0 0
    %615 = vmatpush1.bf16.msra.mxu0 0
    %616 = vmatprep.subr.bf16.mxu0 0
    %617 = vmatpush1.bf16.msra.mxu0 0
    %618 = vmatprep.subr.bf16.mxu0 0
    %619 = vmatpush1.bf16.msra.mxu0 0
    %620 = vmatprep.subr.bf16.mxu0 0
    %621 = vmatpush1.bf16.msra.mxu0 0
    %622 = vmatprep.subr.bf16.mxu0 0
    %623 = vmatpush1.bf16.msra.mxu0 0
    %624 = vmatprep.subr.bf16.mxu0 0
    %625 = vmatpush1.bf16.msra.mxu0 0
    %626 = vmatprep.subr.bf16.mxu0 0
    %627 = vmatpush1.bf16.msra.mxu0 0
    %628 = vmatprep.subr.bf16.mxu0 0
    %629 = vmatpush1.bf16.msra.mxu0 0
    %630 = vmatprep.mubr.bf16.mxu0 0
    %631 = vmatmul.mubr.bf16.gmra.mrb[0].mxu0 %v593
    %v632 = vpop.f32.mrb[0].mxu0
    %v633 = vadd.f32 0.0, %v632
    %v634 = vpop.f32.mrb[0].mxu0
    %v635 = vpop.f32.mrb[0].mxu0
    %v636 = vpop.f32.mrb[0].mxu0
    %637 = vdwg.mxu0
    %v638 = vpack.c.bf16 %v633, %v585
    %640 = vrot.lane.b32.xlu0 %v414, 120
    %v641 = vpop.permute.xlu0 %640
    %642 = vrot.lane.b32.xlu0 %v416, 88
    %v643 = vpop.permute.xlu0 %642
    %v645 = vsel %vm421, %v641, 0
    %v648 = vsel %vm421, %v643, 0
    %650 = vmatprep.subr.bf16.mxu0 0
    %651 = vmatpush1.bf16.xpose.msra.mxu0 %v648
    %652 = vmatprep.subr.bf16.mxu0 0
    %653 = vmatpush1.bf16.xpose.msra.mxu0 0
    %654 = vmatprep.subr.bf16.mxu0 0
    %655 = vmatpush1.bf16.xpose.msra.mxu0 0
    %656 = vmatprep.subr.bf16.mxu0 0
    %657 = vmatpush1.bf16.xpose.msra.mxu0 0
    %658 = vmatprep.subr.bf16.mxu0 0
    %659 = vmatpush1.bf16.xpose.msra.mxu0 0
    %660 = vmatprep.subr.bf16.mxu0 0
    %661 = vmatpush1.bf16.xpose.msra.mxu0 0
    %662 = vmatprep.subr.bf16.mxu0 0
    %663 = vmatpush1.bf16.xpose.msra.mxu0 0
    %664 = vmatprep.subr.bf16.mxu0 0
    %665 = vmatpush1.bf16.xpose.msra.mxu0 0
    %666 = vmatprep.subr.bf16.mxu0 0
    %667 = vmatpush1.bf16.xpose.msra.mxu0 0
    %668 = vmatprep.subr.bf16.mxu0 0
    %669 = vmatpush1.bf16.xpose.msra.mxu0 0
    %670 = vmatprep.subr.bf16.mxu0 0
    %671 = vmatpush1.bf16.xpose.msra.mxu0 0
    %672 = vmatprep.subr.bf16.mxu0 0
    %673 = vmatpush1.bf16.xpose.msra.mxu0 0
    %674 = vmatprep.subr.bf16.mxu0 0
    %675 = vmatpush1.bf16.xpose.msra.mxu0 0
    %676 = vmatprep.subr.bf16.mxu0 0
    %677 = vmatpush1.bf16.xpose.msra.mxu0 0
    %678 = vmatprep.subr.bf16.mxu0 0
    %679 = vmatpush1.bf16.xpose.msra.mxu0 0
    %680 = vmatprep.subr.bf16.mxu0 0
    %681 = vmatpush1.bf16.xpose.msra.mxu0 0
    %682 = vmatprep.mubr.bf16.mxu0 0
    %683 = vmatmul.mubr.bf16.gmra.mrb[0].mxu0 %v645
    %v684 = vpop.f32.mrb[0].mxu0
    %v685 = vadd.f32 0.0, %v684
    %v686 = vpop.f32.mrb[0].mxu0
    %v687 = vpop.f32.mrb[0].mxu0
    %v688 = vpop.f32.mrb[0].mxu0
    %689 = vdwg.mxu0
    %691 = vrot.lane.b32.xlu0 %v415, 120
    %v692 = vpop.permute.xlu0 %691
    %693 = vrot.lane.b32.xlu0 %v417, 88
    %v694 = vpop.permute.xlu0 %693
    %v696 = vsel %vm421, %v692, 0
    %v699 = vsel %vm421, %v694, 0
    %701 = vmatprep.subr.bf16.mxu0 0
    %702 = vmatpush1.bf16.xpose.msra.mxu0 %v699
    %703 = vmatprep.subr.bf16.mxu0 0
    %704 = vmatpush1.bf16.xpose.msra.mxu0 0
    %705 = vmatprep.subr.bf16.mxu0 0
    %706 = vmatpush1.bf16.xpose.msra.mxu0 0
    %707 = vmatprep.subr.bf16.mxu0 0
    %708 = vmatpush1.bf16.xpose.msra.mxu0 0
    %709 = vmatprep.subr.bf16.mxu0 0
    %710 = vmatpush1.bf16.xpose.msra.mxu0 0
    %711 = vmatprep.subr.bf16.mxu0 0
    %712 = vmatpush1.bf16.xpose.msra.mxu0 0
    %713 = vmatprep.subr.bf16.mxu0 0
    %714 = vmatpush1.bf16.xpose.msra.mxu0 0
    %715 = vmatprep.subr.bf16.mxu0 0
    %716 = vmatpush1.bf16.xpose.msra.mxu0 0
    %717 = vmatprep.subr.bf16.mxu0 0
    %718 = vmatpush1.bf16.xpose.msra.mxu0 0
    %719 = vmatprep.subr.bf16.mxu0 0
    %720 = vmatpush1.bf16.xpose.msra.mxu0 0
    %721 = vmatprep.subr.bf16.mxu0 0
    %722 = vmatpush1.bf16.xpose.msra.mxu0 0
    %723 = vmatprep.subr.bf16.mxu0 0
    %724 = vmatpush1.bf16.xpose.msra.mxu0 0
    %725 = vmatprep.subr.bf16.mxu0 0
    %726 = vmatpush1.bf16.xpose.msra.mxu0 0
    %727 = vmatprep.subr.bf16.mxu0 0
    %728 = vmatpush1.bf16.xpose.msra.mxu0 0
    %729 = vmatprep.subr.bf16.mxu0 0
    %730 = vmatpush1.bf16.xpose.msra.mxu0 0
    %731 = vmatprep.subr.bf16.mxu0 0
    %732 = vmatpush1.bf16.xpose.msra.mxu0 0
    %733 = vmatprep.mubr.bf16.mxu0 0
    %734 = vmatmul.mubr.bf16.gmra.mrb[0].mxu0 %v696
    %v735 = vpop.f32.mrb[0].mxu0
    %v736 = vadd.f32 0.0, %v735
    %v737 = vpop.f32.mrb[0].mxu0
    %v738 = vpop.f32.mrb[0].mxu0
    %v739 = vpop.f32.mrb[0].mxu0
    %740 = vdwg.mxu0
    %v741 = vsel %vm421, %v685, -inf
    %742 = vmax.xlane.f32.xlu0 %v741
    %v743 = vpop.xlane.xlu0 %742
    %v744 = vsel %vm421, %v736, -inf
    %745 = vmax.xlane.f32.xlu0 %v744
    %v746 = vpop.xlane.xlu0 %745
    %v747 = vsub.f32 %v685, %v743
    %v748 = vsub.f32 %v736, %v746
    %v749 = vmul.f32 %v747, 1.442695
    %v750 = vpow.pop %v749
    %v751 = vmul.f32 %v748, 1.442695
    %v752 = vpow.pop %v751
    %v753 = vsel %vm421, %v750, 0.0
    %754 = vadd.xlane.f32.xlu0 %v753
    %v755 = vpop.xlane.xlu0 %754
    %v756 = vsel %vm421, %v752, 0.0
    %757 = vadd.xlane.f32.xlu0 %v756
    %v758 = vpop.xlane.xlu0 %757
    %v759 = vrcp.pop %v755
    %v760 = vrcp.pop %v758
    %v761 = vmul.f32 %v750, %v759
    %v762 = vmul.f32 %v752, %v760
    %v763 = vpack.c.bf16 %v761, %v761
    %v764 = vpack.c.bf16 %v762, %v762
    %765 = vrot.lane.b32.xlu0 %v416, 56
    %v766 = vpop.permute.xlu0 %765
    %v768 = vsel %vm421, %v763, 0
    %v771 = vsel %vm546, %v766, 0
    %773 = vmatprep.subr.bf16.mxu0 0
    %774 = vmatpush1.bf16.msra.mxu0 %v771
    %775 = vmatprep.subr.bf16.mxu0 0
    %776 = vmatpush1.bf16.msra.mxu0 0
    %777 = vmatprep.subr.bf16.mxu0 0
    %778 = vmatpush1.bf16.msra.mxu0 0
    %779 = vmatprep.subr.bf16.mxu0 0
    %780 = vmatpush1.bf16.msra.mxu0 0
    %781 = vmatprep.subr.bf16.mxu0 0
    %782 = vmatpush1.bf16.msra.mxu0 0
    %783 = vmatprep.subr.bf16.mxu0 0
    %784 = vmatpush1.bf16.msra.mxu0 0
    %785 = vmatprep.subr.bf16.mxu0 0
    %786 = vmatpush1.bf16.msra.mxu0 0
    %787 = vmatprep.subr.bf16.mxu0 0
    %788 = vmatpush1.bf16.msra.mxu0 0
    %789 = vmatprep.subr.bf16.mxu0 0
    %790 = vmatpush1.bf16.msra.mxu0 0
    %791 = vmatprep.subr.bf16.mxu0 0
    %792 = vmatpush1.bf16.msra.mxu0 0
    %793 = vmatprep.subr.bf16.mxu0 0
    %794 = vmatpush1.bf16.msra.mxu0 0
    %795 = vmatprep.subr.bf16.mxu0 0
    %796 = vmatpush1.bf16.msra.mxu0 0
    %797 = vmatprep.subr.bf16.mxu0 0
    %798 = vmatpush1.bf16.msra.mxu0 0
    %799 = vmatprep.subr.bf16.mxu0 0
    %800 = vmatpush1.bf16.msra.mxu0 0
    %801 = vmatprep.subr.bf16.mxu0 0
    %802 = vmatpush1.bf16.msra.mxu0 0
    %803 = vmatprep.subr.bf16.mxu0 0
    %804 = vmatpush1.bf16.msra.mxu0 0
    %805 = vmatprep.mubr.bf16.mxu0 0
    %806 = vmatmul.mubr.bf16.gmra.mrb[0].mxu0 %v768
    %v807 = vpop.f32.mrb[0].mxu0
    %v808 = vadd.f32 0.0, %v807
    %v809 = vpop.f32.mrb[0].mxu0
    %v810 = vpop.f32.mrb[0].mxu0
    %v811 = vpop.f32.mrb[0].mxu0
    %812 = vdwg.mxu0
    %813 = vrot.lane.b32.xlu0 %v417, 56
    %v814 = vpop.permute.xlu0 %813
    %v816 = vsel %vm421, %v764, 0
    %v819 = vsel %vm546, %v814, 0
    %821 = vmatprep.subr.bf16.mxu0 0
    %822 = vmatpush1.bf16.msra.mxu0 %v819
    %823 = vmatprep.subr.bf16.mxu0 0
    %824 = vmatpush1.bf16.msra.mxu0 0
    %825 = vmatprep.subr.bf16.mxu0 0
    %826 = vmatpush1.bf16.msra.mxu0 0
    %827 = vmatprep.subr.bf16.mxu0 0
    %828 = vmatpush1.bf16.msra.mxu0 0
    %829 = vmatprep.subr.bf16.mxu0 0
    %830 = vmatpush1.bf16.msra.mxu0 0
    %831 = vmatprep.subr.bf16.mxu0 0
    %832 = vmatpush1.bf16.msra.mxu0 0
    %833 = vmatprep.subr.bf16.mxu0 0
    %834 = vmatpush1.bf16.msra.mxu0 0
    %835 = vmatprep.subr.bf16.mxu0 0
    %836 = vmatpush1.bf16.msra.mxu0 0
    %837 = vmatprep.subr.bf16.mxu0 0
    %838 = vmatpush1.bf16.msra.mxu0 0
    %839 = vmatprep.subr.bf16.mxu0 0
    %840 = vmatpush1.bf16.msra.mxu0 0
    %841 = vmatprep.subr.bf16.mxu0 0
    %842 = vmatpush1.bf16.msra.mxu0 0
    %843 = vmatprep.subr.bf16.mxu0 0
    %844 = vmatpush1.bf16.msra.mxu0 0
    %845 = vmatprep.subr.bf16.mxu0 0
    %846 = vmatpush1.bf16.msra.mxu0 0
    %847 = vmatprep.subr.bf16.mxu0 0
    %848 = vmatpush1.bf16.msra.mxu0 0
    %849 = vmatprep.subr.bf16.mxu0 0
    %850 = vmatpush1.bf16.msra.mxu0 0
    %851 = vmatprep.subr.bf16.mxu0 0
    %852 = vmatpush1.bf16.msra.mxu0 0
    %853 = vmatprep.mubr.bf16.mxu0 0
    %854 = vmatmul.mubr.bf16.gmra.mrb[0].mxu0 %v816
    %v855 = vpop.f32.mrb[0].mxu0
    %v856 = vadd.f32 0.0, %v855
    %v857 = vpop.f32.mrb[0].mxu0
    %v858 = vpop.f32.mrb[0].mxu0
    %v859 = vpop.f32.mrb[0].mxu0
    %860 = vdwg.mxu0
    %v861 = vpack.c.bf16 %v856, %v808
    %v863 = vunpack.c.l.b16 %v409
    %v864 = vpack.c.b16 %v863, %v863
    %865 = vrot.lane.b32.xlu0 %v864, 96
    %v866 = vpop.permute.xlu0 %865
    %v868 = vsel %vm421, %v861, 0
    %v871 = vsel %vm546, %v866, 0
    %873 = vmatprep.subr.bf16.mxu0 0
    %874 = vmatpush1.bf16.msra.mxu0 %v871
    %875 = vmatprep.subr.bf16.mxu0 0
    %876 = vmatpush1.bf16.msra.mxu0 0
    %877 = vmatprep.subr.bf16.mxu0 0
    %878 = vmatpush1.bf16.msra.mxu0 0
    %879 = vmatprep.subr.bf16.mxu0 0
    %880 = vmatpush1.bf16.msra.mxu0 0
    %881 = vmatprep.subr.bf16.mxu0 0
    %882 = vmatpush1.bf16.msra.mxu0 0
    %883 = vmatprep.subr.bf16.mxu0 0
    %884 = vmatpush1.bf16.msra.mxu0 0
    %885 = vmatprep.subr.bf16.mxu0 0
    %886 = vmatpush1.bf16.msra.mxu0 0
    %887 = vmatprep.subr.bf16.mxu0 0
    %888 = vmatpush1.bf16.msra.mxu0 0
    %889 = vmatprep.subr.bf16.mxu0 0
    %890 = vmatpush1.bf16.msra.mxu0 0
    %891 = vmatprep.subr.bf16.mxu0 0
    %892 = vmatpush1.bf16.msra.mxu0 0
    %893 = vmatprep.subr.bf16.mxu0 0
    %894 = vmatpush1.bf16.msra.mxu0 0
    %895 = vmatprep.subr.bf16.mxu0 0
    %896 = vmatpush1.bf16.msra.mxu0 0
    %897 = vmatprep.subr.bf16.mxu0 0
    %898 = vmatpush1.bf16.msra.mxu0 0
    %899 = vmatprep.subr.bf16.mxu0 0
    %900 = vmatpush1.bf16.msra.mxu0 0
    %901 = vmatprep.subr.bf16.mxu0 0
    %902 = vmatpush1.bf16.msra.mxu0 0
    %903 = vmatprep.subr.bf16.mxu0 0
    %904 = vmatpush1.bf16.msra.mxu0 0
    %905 = vmatprep.mubr.bf16.mxu0 0
    %906 = vmatmul.mubr.bf16.gmra.mrb[0].mxu0 %v868
    %v907 = vpop.f32.mrb[0].mxu0
    %v908 = vadd.f32 0.0, %v907
    %v909 = vpop.f32.mrb[0].mxu0
    %v910 = vpop.f32.mrb[0].mxu0
    %v911 = vadd.f32 0.0, %v910
    %v912 = vpop.f32.mrb[0].mxu0
    %913 = vdwg.mxu0
    %v915 = vunpack.c.l.b16 %v408
    %v916 = vpack.c.b16 %v915, %v915
    %917 = vrot.lane.b32.xlu0 %v916, 96
    %v918 = vpop.permute.xlu0 %917
    %v920 = vsel %vm421, %v638, 0
    %v923 = vsel %vm546, %v918, 0
    %925 = vmatprep.subr.bf16.mxu0 0
    %926 = vmatpush1.bf16.msra.mxu0 %v923
    %927 = vmatprep.subr.bf16.mxu0 0
    %928 = vmatpush1.bf16.msra.mxu0 0
    %929 = vmatprep.subr.bf16.mxu0 0
    %930 = vmatpush1.bf16.msra.mxu0 0
    %931 = vmatprep.subr.bf16.mxu0 0
    %932 = vmatpush1.bf16.msra.mxu0 0
    %933 = vmatprep.subr.bf16.mxu0 0
    %934 = vmatpush1.bf16.msra.mxu0 0
    %935 = vmatprep.subr.bf16.mxu0 0
    %936 = vmatpush1.bf16.msra.mxu0 0
    %937 = vmatprep.subr.bf16.mxu0 0
    %938 = vmatpush1.bf16.msra.mxu0 0
    %939 = vmatprep.subr.bf16.mxu0 0
    %940 = vmatpush1.bf16.msra.mxu0 0
    %941 = vmatprep.subr.bf16.mxu0 0
    %942 = vmatpush1.bf16.msra.mxu0 0
    %943 = vmatprep.subr.bf16.mxu0 0
    %944 = vmatpush1.bf16.msra.mxu0 0
    %945 = vmatprep.subr.bf16.mxu0 0
    %946 = vmatpush1.bf16.msra.mxu0 0
    %947 = vmatprep.subr.bf16.mxu0 0
    %948 = vmatpush1.bf16.msra.mxu0 0
    %949 = vmatprep.subr.bf16.mxu0 0
    %950 = vmatpush1.bf16.msra.mxu0 0
    %951 = vmatprep.subr.bf16.mxu0 0
    %952 = vmatpush1.bf16.msra.mxu0 0
    %953 = vmatprep.subr.bf16.mxu0 0
    %954 = vmatpush1.bf16.msra.mxu0 0
    %955 = vmatprep.subr.bf16.mxu0 0
    %956 = vmatpush1.bf16.msra.mxu0 0
    %957 = vmatprep.mubr.bf16.mxu0 0
    %958 = vmatmul.mubr.bf16.gmra.mrb[0].mxu0 %v920
    %v959 = vpop.f32.mrb[0].mxu0
    %v960 = vadd.f32 %v908, %v959
    %v961 = vpop.f32.mrb[0].mxu0
    %v962 = vpop.f32.mrb[0].mxu0
    %v963 = vadd.f32 %v911, %v962
    %v964 = vpop.f32.mrb[0].mxu0
    %965 = vdwg.mxu0
    %966 = vrot.lane.b32.xlu0 %v414, 112
    %v967 = vpop.permute.xlu0 %966
    %968 = vrot.lane.b32.xlu0 %v416, 80
    %v969 = vpop.permute.xlu0 %968
    %v971 = vsel %vm421, %v967, 0
    %v974 = vsel %vm421, %v969, 0
    %976 = vmatprep.subr.bf16.mxu0 0
    %977 = vmatpush1.bf16.xpose.msra.mxu0 %v974
    %978 = vmatprep.subr.bf16.mxu0 0
    %979 = vmatpush1.bf16.xpose.msra.mxu0 0
    %980 = vmatprep.subr.bf16.mxu0 0
    %981 = vmatpush1.bf16.xpose.msra.mxu0 0
    %982 = vmatprep.subr.bf16.mxu0 0
    %983 = vmatpush1.bf16.xpose.msra.mxu0 0
    %984 = vmatprep.subr.bf16.mxu0 0
    %985 = vmatpush1.bf16.xpose.msra.mxu0 0
    %986 = vmatprep.subr.bf16.mxu0 0
    %987 = vmatpush1.bf16.xpose.msra.mxu0 0
    %988 = vmatprep.subr.bf16.mxu0 0
    %989 = vmatpush1.bf16.xpose.msra.mxu0 0
    %990 = vmatprep.subr.bf16.mxu0 0
    %991 = vmatpush1.bf16.xpose.msra.mxu0 0
    %992 = vmatprep.subr.bf16.mxu0 0
    %993 = vmatpush1.bf16.xpose.msra.mxu0 0
    %994 = vmatprep.subr.bf16.mxu0 0
    %995 = vmatpush1.bf16.xpose.msra.mxu0 0
    %996 = vmatprep.subr.bf16.mxu0 0
    %997 = vmatpush1.bf16.xpose.msra.mxu0 0
    %998 = vmatprep.subr.bf16.mxu0 0
    %999 = vmatpush1.bf16.xpose.msra.mxu0 0
    %1000 = vmatprep.subr.bf16.mxu0 0
    %1001 = vmatpush1.bf16.xpose.msra.mxu0 0
    %1002 = vmatprep.subr.bf16.mxu0 0
    %1003 = vmatpush1.bf16.xpose.msra.mxu0 0
    %1004 = vmatprep.subr.bf16.mxu0 0
    %1005 = vmatpush1.bf16.xpose.msra.mxu0 0
    %1006 = vmatprep.subr.bf16.mxu0 0
    %1007 = vmatpush1.bf16.xpose.msra.mxu0 0
    %1008 = vmatprep.mubr.bf16.mxu0 0
    %1009 = vmatmul.mubr.bf16.gmra.mrb[0].mxu0 %v971
    %v1010 = vpop.f32.mrb[0].mxu0
    %v1011 = vadd.f32 0.0, %v1010
    %v1012 = vpop.f32.mrb[0].mxu0
    %v1013 = vpop.f32.mrb[0].mxu0
    %v1014 = vpop.f32.mrb[0].mxu0
    %1015 = vdwg.mxu0
    %1016 = vrot.lane.b32.xlu0 %v415, 112
    %v1017 = vpop.permute.xlu0 %1016
    %1018 = vrot.lane.b32.xlu0 %v417, 80
    %v1019 = vpop.permute.xlu0 %1018
    %v1021 = vsel %vm421, %v1017, 0
    %v1024 = vsel %vm421, %v1019, 0
    %1026 = vmatprep.subr.bf16.mxu0 0
    %1027 = vmatpush1.bf16.xpose.msra.mxu0 %v1024
    %1028 = vmatprep.subr.bf16.mxu0 0
    %1029 = vmatpush1.bf16.xpose.msra.mxu0 0
    %1030 = vmatprep.subr.bf16.mxu0 0
    %1031 = vmatpush1.bf16.xpose.msra.mxu0 0
    %1032 = vmatprep.subr.bf16.mxu0 0
    %1033 = vmatpush1.bf16.xpose.msra.mxu0 0
    %1034 = vmatprep.subr.bf16.mxu0 0
    %1035 = vmatpush1.bf16.xpose.msra.mxu0 0
    %1036 = vmatprep.subr.bf16.mxu0 0
    %1037 = vmatpush1.bf16.xpose.msra.mxu0 0
    %1038 = vmatprep.subr.bf16.mxu0 0
    %1039 = vmatpush1.bf16.xpose.msra.mxu0 0
    %1040 = vmatprep.subr.bf16.mxu0 0
    %1041 = vmatpush1.bf16.xpose.msra.mxu0 0
    %1042 = vmatprep.subr.bf16.mxu0 0
    %1043 = vmatpush1.bf16.xpose.msra.mxu0 0
    %1044 = vmatprep.subr.bf16.mxu0 0
    %1045 = vmatpush1.bf16.xpose.msra.mxu0 0
    %1046 = vmatprep.subr.bf16.mxu0 0
    %1047 = vmatpush1.bf16.xpose.msra.mxu0 0
    %1048 = vmatprep.subr.bf16.mxu0 0
    %1049 = vmatpush1.bf16.xpose.msra.mxu0 0
    %1050 = vmatprep.subr.bf16.mxu0 0
    %1051 = vmatpush1.bf16.xpose.msra.mxu0 0
    %1052 = vmatprep.subr.bf16.mxu0 0
    %1053 = vmatpush1.bf16.xpose.msra.mxu0 0
    %1054 = vmatprep.subr.bf16.mxu0 0
    %1055 = vmatpush1.bf16.xpose.msra.mxu0 0
    %1056 = vmatprep.subr.bf16.mxu0 0
    %1057 = vmatpush1.bf16.xpose.msra.mxu0 0
    %1058 = vmatprep.mubr.bf16.mxu0 0
    %1059 = vmatmul.mubr.bf16.gmra.mrb[0].mxu0 %v1021
    %v1060 = vpop.f32.mrb[0].mxu0
    %v1061 = vadd.f32 0.0, %v1060
    %v1062 = vpop.f32.mrb[0].mxu0
    %v1063 = vpop.f32.mrb[0].mxu0
    %v1064 = vpop.f32.mrb[0].mxu0
    %1065 = vdwg.mxu0
    %v1066 = vsel %vm421, %v1011, -inf
    %1067 = vmax.xlane.f32.xlu0 %v1066
    %v1068 = vpop.xlane.xlu0 %1067
    %v1069 = vsel %vm421, %v1061, -inf
    %1070 = vmax.xlane.f32.xlu0 %v1069
    %v1071 = vpop.xlane.xlu0 %1070
    %v1072 = vsub.f32 %v1011, %v1068
    %v1073 = vsub.f32 %v1061, %v1071
    %v1074 = vmul.f32 %v1072, 1.442695
    %v1075 = vpow.pop %v1074
    %v1076 = vmul.f32 %v1073, 1.442695
    %v1077 = vpow.pop %v1076
    %v1078 = vsel %vm421, %v1075, 0.0
    %1079 = vadd.xlane.f32.xlu0 %v1078
    %v1080 = vpop.xlane.xlu0 %1079
    %v1081 = vsel %vm421, %v1077, 0.0
    %1082 = vadd.xlane.f32.xlu0 %v1081
    %v1083 = vpop.xlane.xlu0 %1082
    %v1084 = vrcp.pop %v1080
    %v1085 = vrcp.pop %v1083
    %v1086 = vmul.f32 %v1075, %v1084
    %v1087 = vmul.f32 %v1077, %v1085
    %v1088 = vpack.c.bf16 %v1086, %v1086
    %v1089 = vpack.c.bf16 %v1087, %v1087
    %1090 = vrot.lane.b32.xlu0 %v416, 48
    %v1091 = vpop.permute.xlu0 %1090
    %v1093 = vsel %vm421, %v1088, 0
    %v1096 = vsel %vm546, %v1091, 0
    %1098 = vmatprep.subr.bf16.mxu0 0
    %1099 = vmatpush1.bf16.msra.mxu0 %v1096
    %1100 = vmatprep.subr.bf16.mxu0 0
    %1101 = vmatpush1.bf16.msra.mxu0 0
    %1102 = vmatprep.subr.bf16.mxu0 0
    %1103 = vmatpush1.bf16.msra.mxu0 0
    %1104 = vmatprep.subr.bf16.mxu0 0
    %1105 = vmatpush1.bf16.msra.mxu0 0
    %1106 = vmatprep.subr.bf16.mxu0 0
    %1107 = vmatpush1.bf16.msra.mxu0 0
    %1108 = vmatprep.subr.bf16.mxu0 0
    %1109 = vmatpush1.bf16.msra.mxu0 0
    %1110 = vmatprep.subr.bf16.mxu0 0
    %1111 = vmatpush1.bf16.msra.mxu0 0
    %1112 = vmatprep.subr.bf16.mxu0 0
    %1113 = vmatpush1.bf16.msra.mxu0 0
    %1114 = vmatprep.subr.bf16.mxu0 0
    %1115 = vmatpush1.bf16.msra.mxu0 0
    %1116 = vmatprep.subr.bf16.mxu0 0
    %1117 = vmatpush1.bf16.msra.mxu0 0
    %1118 = vmatprep.subr.bf16.mxu0 0
    %1119 = vmatpush1.bf16.msra.mxu0 0
    %1120 = vmatprep.subr.bf16.mxu0 0
    %1121 = vmatpush1.bf16.msra.mxu0 0
    %1122 = vmatprep.subr.bf16.mxu0 0
    %1123 = vmatpush1.bf16.msra.mxu0 0
    %1124 = vmatprep.subr.bf16.mxu0 0
    %1125 = vmatpush1.bf16.msra.mxu0 0
    %1126 = vmatprep.subr.bf16.mxu0 0
    %1127 = vmatpush1.bf16.msra.mxu0 0
    %1128 = vmatprep.subr.bf16.mxu0 0
    %1129 = vmatpush1.bf16.msra.mxu0 0
    %1130 = vmatprep.mubr.bf16.mxu0 0
    %1131 = vmatmul.mubr.bf16.gmra.mrb[0].mxu0 %v1093
    %v1132 = vpop.f32.mrb[0].mxu0
    %v1133 = vadd.f32 0.0, %v1132
    %v1134 = vpop.f32.mrb[0].mxu0
    %v1135 = vpop.f32.mrb[0].mxu0
    %v1136 = vpop.f32.mrb[0].mxu0
    %1137 = vdwg.mxu0
    %1138 = vrot.lane.b32.xlu0 %v417, 48
    %v1139 = vpop.permute.xlu0 %1138
    %v1141 = vsel %vm421, %v1089, 0
    %v1144 = vsel %vm546, %v1139, 0
    %1146 = vmatprep.subr.bf16.mxu0 0
    %1147 = vmatpush1.bf16.msra.mxu0 %v1144
    %1148 = vmatprep.subr.bf16.mxu0 0
    %1149 = vmatpush1.bf16.msra.mxu0 0
    %1150 = vmatprep.subr.bf16.mxu0 0
    %1151 = vmatpush1.bf16.msra.mxu0 0
    %1152 = vmatprep.subr.bf16.mxu0 0
    %1153 = vmatpush1.bf16.msra.mxu0 0
    %1154 = vmatprep.subr.bf16.mxu0 0
    %1155 = vmatpush1.bf16.msra.mxu0 0
    %1156 = vmatprep.subr.bf16.mxu0 0
    %1157 = vmatpush1.bf16.msra.mxu0 0
    %1158 = vmatprep.subr.bf16.mxu0 0
    %1159 = vmatpush1.bf16.msra.mxu0 0
    %1160 = vmatprep.subr.bf16.mxu0 0
    %1161 = vmatpush1.bf16.msra.mxu0 0
    %1162 = vmatprep.subr.bf16.mxu0 0
    %1163 = vmatpush1.bf16.msra.mxu0 0
    %1164 = vmatprep.subr.bf16.mxu0 0
    %1165 = vmatpush1.bf16.msra.mxu0 0
    %1166 = vmatprep.subr.bf16.mxu0 0
    %1167 = vmatpush1.bf16.msra.mxu0 0
    %1168 = vmatprep.subr.bf16.mxu0 0
    %1169 = vmatpush1.bf16.msra.mxu0 0
    %1170 = vmatprep.subr.bf16.mxu0 0
    %1171 = vmatpush1.bf16.msra.mxu0 0
    %1172 = vmatprep.subr.bf16.mxu0 0
    %1173 = vmatpush1.bf16.msra.mxu0 0
    %1174 = vmatprep.subr.bf16.mxu0 0
    %1175 = vmatpush1.bf16.msra.mxu0 0
    %1176 = vmatprep.subr.bf16.mxu0 0
    %1177 = vmatpush1.bf16.msra.mxu0 0
    %1178 = vmatprep.mubr.bf16.mxu0 0
    %1179 = vmatmul.mubr.bf16.gmra.mrb[0].mxu0 %v1141
    %v1180 = vpop.f32.mrb[0].mxu0
    %v1181 = vadd.f32 0.0, %v1180
    %v1182 = vpop.f32.mrb[0].mxu0
    %v1183 = vpop.f32.mrb[0].mxu0
    %v1184 = vpop.f32.mrb[0].mxu0
    %1185 = vdwg.mxu0
    %v1186 = vpack.c.bf16 %v1181, %v1133
    %v1188 = vunpack.c.l.b16 %v410
    %v1189 = vpack.c.b16 %v1188, %v1188
    %1190 = vrot.lane.b32.xlu0 %v1189, 96
    %v1191 = vpop.permute.xlu0 %1190
    %v1193 = vsel %vm421, %v1186, 0
    %v1196 = vsel %vm546, %v1191, 0
    %1198 = vmatprep.subr.bf16.mxu0 0
    %1199 = vmatpush1.bf16.msra.mxu0 %v1196
    %1200 = vmatprep.subr.bf16.mxu0 0
    %1201 = vmatpush1.bf16.msra.mxu0 0
    %1202 = vmatprep.subr.bf16.mxu0 0
    %1203 = vmatpush1.bf16.msra.mxu0 0
    %1204 = vmatprep.subr.bf16.mxu0 0
    %1205 = vmatpush1.bf16.msra.mxu0 0
    %1206 = vmatprep.subr.bf16.mxu0 0
    %1207 = vmatpush1.bf16.msra.mxu0 0
    %1208 = vmatprep.subr.bf16.mxu0 0
    %1209 = vmatpush1.bf16.msra.mxu0 0
    %1210 = vmatprep.subr.bf16.mxu0 0
    %1211 = vmatpush1.bf16.msra.mxu0 0
    %1212 = vmatprep.subr.bf16.mxu0 0
    %1213 = vmatpush1.bf16.msra.mxu0 0
    %1214 = vmatprep.subr.bf16.mxu0 0
    %1215 = vmatpush1.bf16.msra.mxu0 0
    %1216 = vmatprep.subr.bf16.mxu0 0
    %1217 = vmatpush1.bf16.msra.mxu0 0
    %1218 = vmatprep.subr.bf16.mxu0 0
    %1219 = vmatpush1.bf16.msra.mxu0 0
    %1220 = vmatprep.subr.bf16.mxu0 0
    %1221 = vmatpush1.bf16.msra.mxu0 0
    %1222 = vmatprep.subr.bf16.mxu0 0
    %1223 = vmatpush1.bf16.msra.mxu0 0
    %1224 = vmatprep.subr.bf16.mxu0 0
    %1225 = vmatpush1.bf16.msra.mxu0 0
    %1226 = vmatprep.subr.bf16.mxu0 0
    %1227 = vmatpush1.bf16.msra.mxu0 0
    %1228 = vmatprep.subr.bf16.mxu0 0
    %1229 = vmatpush1.bf16.msra.mxu0 0
    %1230 = vmatprep.mubr.bf16.mxu0 0
    %1231 = vmatmul.mubr.bf16.gmra.mrb[0].mxu0 %v1193
    %v1232 = vpop.f32.mrb[0].mxu0
    %v1233 = vadd.f32 0.0, %v1232
    %v1234 = vpop.f32.mrb[0].mxu0
    %v1235 = vpop.f32.mrb[0].mxu0
    %v1236 = vadd.f32 0.0, %v1235
    %v1237 = vpop.f32.mrb[0].mxu0
    %1238 = vdwg.mxu0
    %v1239 = vadd.f32 %v960, %v1233
    %v1240 = vadd.f32 %v963, %v1236
    %1241 = vrot.lane.b32.xlu0 %v414, 104
    %v1242 = vpop.permute.xlu0 %1241
    %1243 = vrot.lane.b32.xlu0 %v416, 72
    %v1244 = vpop.permute.xlu0 %1243
    %v1246 = vsel %vm421, %v1242, 0
    %v1249 = vsel %vm421, %v1244, 0
    %1251 = vmatprep.subr.bf16.mxu0 0
    %1252 = vmatpush1.bf16.xpose.msra.mxu0 %v1249
    %1253 = vmatprep.subr.bf16.mxu0 0
    %1254 = vmatpush1.bf16.xpose.msra.mxu0 0
    %1255 = vmatprep.subr.bf16.mxu0 0
    %1256 = vmatpush1.bf16.xpose.msra.mxu0 0
    %1257 = vmatprep.subr.bf16.mxu0 0
    %1258 = vmatpush1.bf16.xpose.msra.mxu0 0
    %1259 = vmatprep.subr.bf16.mxu0 0
    %1260 = vmatpush1.bf16.xpose.msra.mxu0 0
    %1261 = vmatprep.subr.bf16.mxu0 0
    %1262 = vmatpush1.bf16.xpose.msra.mxu0 0
    %1263 = vmatprep.subr.bf16.mxu0 0
    %1264 = vmatpush1.bf16.xpose.msra.mxu0 0
    %1265 = vmatprep.subr.bf16.mxu0 0
    %1266 = vmatpush1.bf16.xpose.msra.mxu0 0
    %1267 = vmatprep.subr.bf16.mxu0 0
    %1268 = vmatpush1.bf16.xpose.msra.mxu0 0
    %1269 = vmatprep.subr.bf16.mxu0 0
    %1270 = vmatpush1.bf16.xpose.msra.mxu0 0
    %1271 = vmatprep.subr.bf16.mxu0 0
    %1272 = vmatpush1.bf16.xpose.msra.mxu0 0
    %1273 = vmatprep.subr.bf16.mxu0 0
    %1274 = vmatpush1.bf16.xpose.msra.mxu0 0
    %1275 = vmatprep.subr.bf16.mxu0 0
    %1276 = vmatpush1.bf16.xpose.msra.mxu0 0
    %1277 = vmatprep.subr.bf16.mxu0 0
    %1278 = vmatpush1.bf16.xpose.msra.mxu0 0
    %1279 = vmatprep.subr.bf16.mxu0 0
    %1280 = vmatpush1.bf16.xpose.msra.mxu0 0
    %1281 = vmatprep.subr.bf16.mxu0 0
    %1282 = vmatpush1.bf16.xpose.msra.mxu0 0
    %1283 = vmatprep.mubr.bf16.mxu0 0
    %1284 = vmatmul.mubr.bf16.gmra.mrb[0].mxu0 %v1246
    %v1285 = vpop.f32.mrb[0].mxu0
    %v1286 = vadd.f32 0.0, %v1285
    %v1287 = vpop.f32.mrb[0].mxu0
    %v1288 = vpop.f32.mrb[0].mxu0
    %v1289 = vpop.f32.mrb[0].mxu0
    %1290 = vdwg.mxu0
    %1291 = vrot.lane.b32.xlu0 %v415, 104
    %v1292 = vpop.permute.xlu0 %1291
    %1293 = vrot.lane.b32.xlu0 %v417, 72
    %v1294 = vpop.permute.xlu0 %1293
    %v1296 = vsel %vm421, %v1292, 0
    %v1299 = vsel %vm421, %v1294, 0
    %1301 = vmatprep.subr.bf16.mxu0 0
    %1302 = vmatpush1.bf16.xpose.msra.mxu0 %v1299
    %1303 = vmatprep.subr.bf16.mxu0 0
    %1304 = vmatpush1.bf16.xpose.msra.mxu0 0
    %1305 = vmatprep.subr.bf16.mxu0 0
    %1306 = vmatpush1.bf16.xpose.msra.mxu0 0
    %1307 = vmatprep.subr.bf16.mxu0 0
    %1308 = vmatpush1.bf16.xpose.msra.mxu0 0
    %1309 = vmatprep.subr.bf16.mxu0 0
    %1310 = vmatpush1.bf16.xpose.msra.mxu0 0
    %1311 = vmatprep.subr.bf16.mxu0 0
    %1312 = vmatpush1.bf16.xpose.msra.mxu0 0
    %1313 = vmatprep.subr.bf16.mxu0 0
    %1314 = vmatpush1.bf16.xpose.msra.mxu0 0
    %1315 = vmatprep.subr.bf16.mxu0 0
    %1316 = vmatpush1.bf16.xpose.msra.mxu0 0
    %1317 = vmatprep.subr.bf16.mxu0 0
    %1318 = vmatpush1.bf16.xpose.msra.mxu0 0
    %1319 = vmatprep.subr.bf16.mxu0 0
    %1320 = vmatpush1.bf16.xpose.msra.mxu0 0
    %1321 = vmatprep.subr.bf16.mxu0 0
    %1322 = vmatpush1.bf16.xpose.msra.mxu0 0
    %1323 = vmatprep.subr.bf16.mxu0 0
    %1324 = vmatpush1.bf16.xpose.msra.mxu0 0
    %1325 = vmatprep.subr.bf16.mxu0 0
    %1326 = vmatpush1.bf16.xpose.msra.mxu0 0
    %1327 = vmatprep.subr.bf16.mxu0 0
    %1328 = vmatpush1.bf16.xpose.msra.mxu0 0
    %1329 = vmatprep.subr.bf16.mxu0 0
    %1330 = vmatpush1.bf16.xpose.msra.mxu0 0
    %1331 = vmatprep.subr.bf16.mxu0 0
    %1332 = vmatpush1.bf16.xpose.msra.mxu0 0
    %1333 = vmatprep.mubr.bf16.mxu0 0
    %1334 = vmatmul.mubr.bf16.gmra.mrb[0].mxu0 %v1296
    %v1335 = vpop.f32.mrb[0].mxu0
    %v1336 = vadd.f32 0.0, %v1335
    %v1337 = vpop.f32.mrb[0].mxu0
    %v1338 = vpop.f32.mrb[0].mxu0
    %v1339 = vpop.f32.mrb[0].mxu0
    %1340 = vdwg.mxu0
    %v1341 = vsel %vm421, %v1286, -inf
    %1342 = vmax.xlane.f32.xlu0 %v1341
    %v1343 = vpop.xlane.xlu0 %1342
    %v1344 = vsel %vm421, %v1336, -inf
    %1345 = vmax.xlane.f32.xlu0 %v1344
    %v1346 = vpop.xlane.xlu0 %1345
    %v1347 = vsub.f32 %v1286, %v1343
    %v1348 = vsub.f32 %v1336, %v1346
    %v1349 = vmul.f32 %v1347, 1.442695
    %v1350 = vpow.pop %v1349
    %v1351 = vmul.f32 %v1348, 1.442695
    %v1352 = vpow.pop %v1351
    %v1353 = vsel %vm421, %v1350, 0.0
    %1354 = vadd.xlane.f32.xlu0 %v1353
    %v1355 = vpop.xlane.xlu0 %1354
    %v1356 = vsel %vm421, %v1352, 0.0
    %1357 = vadd.xlane.f32.xlu0 %v1356
    %v1358 = vpop.xlane.xlu0 %1357
    %v1359 = vrcp.pop %v1355
    %v1360 = vrcp.pop %v1358
    %v1361 = vmul.f32 %v1350, %v1359
    %v1362 = vmul.f32 %v1352, %v1360
    %v1363 = vpack.c.bf16 %v1361, %v1361
    %v1364 = vpack.c.bf16 %v1362, %v1362
    %1365 = vrot.lane.b32.xlu0 %v416, 40
    %v1366 = vpop.permute.xlu0 %1365
    %v1368 = vsel %vm421, %v1363, 0
    %v1371 = vsel %vm546, %v1366, 0
    %1373 = vmatprep.subr.bf16.mxu0 0
    %1374 = vmatpush1.bf16.msra.mxu0 %v1371
    %1375 = vmatprep.subr.bf16.mxu0 0
    %1376 = vmatpush1.bf16.msra.mxu0 0
    %1377 = vmatprep.subr.bf16.mxu0 0
    %1378 = vmatpush1.bf16.msra.mxu0 0
    %1379 = vmatprep.subr.bf16.mxu0 0
    %1380 = vmatpush1.bf16.msra.mxu0 0
    %1381 = vmatprep.subr.bf16.mxu0 0
    %1382 = vmatpush1.bf16.msra.mxu0 0
    %1383 = vmatprep.subr.bf16.mxu0 0
    %1384 = vmatpush1.bf16.msra.mxu0 0
    %1385 = vmatprep.subr.bf16.mxu0 0
    %1386 = vmatpush1.bf16.msra.mxu0 0
    %1387 = vmatprep.subr.bf16.mxu0 0
    %1388 = vmatpush1.bf16.msra.mxu0 0
    %1389 = vmatprep.subr.bf16.mxu0 0
    %1390 = vmatpush1.bf16.msra.mxu0 0
    %1391 = vmatprep.subr.bf16.mxu0 0
    %1392 = vmatpush1.bf16.msra.mxu0 0
    %1393 = vmatprep.subr.bf16.mxu0 0
    %1394 = vmatpush1.bf16.msra.mxu0 0
    %1395 = vmatprep.subr.bf16.mxu0 0
    %1396 = vmatpush1.bf16.msra.mxu0 0
    %1397 = vmatprep.subr.bf16.mxu0 0
    %1398 = vmatpush1.bf16.msra.mxu0 0
    %1399 = vmatprep.subr.bf16.mxu0 0
    %1400 = vmatpush1.bf16.msra.mxu0 0
    %1401 = vmatprep.subr.bf16.mxu0 0
    %1402 = vmatpush1.bf16.msra.mxu0 0
    %1403 = vmatprep.subr.bf16.mxu0 0
    %1404 = vmatpush1.bf16.msra.mxu0 0
    %1405 = vmatprep.mubr.bf16.mxu0 0
    %1406 = vmatmul.mubr.bf16.gmra.mrb[0].mxu0 %v1368
    %v1407 = vpop.f32.mrb[0].mxu0
    %v1408 = vadd.f32 0.0, %v1407
    %v1409 = vpop.f32.mrb[0].mxu0
    %v1410 = vpop.f32.mrb[0].mxu0
    %v1411 = vpop.f32.mrb[0].mxu0
    %1412 = vdwg.mxu0
    %1413 = vrot.lane.b32.xlu0 %v417, 40
    %v1414 = vpop.permute.xlu0 %1413
    %v1416 = vsel %vm421, %v1364, 0
    %v1419 = vsel %vm546, %v1414, 0
    %1421 = vmatprep.subr.bf16.mxu0 0
    %1422 = vmatpush1.bf16.msra.mxu0 %v1419
    %1423 = vmatprep.subr.bf16.mxu0 0
    %1424 = vmatpush1.bf16.msra.mxu0 0
    %1425 = vmatprep.subr.bf16.mxu0 0
    %1426 = vmatpush1.bf16.msra.mxu0 0
    %1427 = vmatprep.subr.bf16.mxu0 0
    %1428 = vmatpush1.bf16.msra.mxu0 0
    %1429 = vmatprep.subr.bf16.mxu0 0
    %1430 = vmatpush1.bf16.msra.mxu0 0
    %1431 = vmatprep.subr.bf16.mxu0 0
    %1432 = vmatpush1.bf16.msra.mxu0 0
    %1433 = vmatprep.subr.bf16.mxu0 0
    %1434 = vmatpush1.bf16.msra.mxu0 0
    %1435 = vmatprep.subr.bf16.mxu0 0
    %1436 = vmatpush1.bf16.msra.mxu0 0
    %1437 = vmatprep.subr.bf16.mxu0 0
    %1438 = vmatpush1.bf16.msra.mxu0 0
    %1439 = vmatprep.subr.bf16.mxu0 0
    %1440 = vmatpush1.bf16.msra.mxu0 0
    %1441 = vmatprep.subr.bf16.mxu0 0
    %1442 = vmatpush1.bf16.msra.mxu0 0
    %1443 = vmatprep.subr.bf16.mxu0 0
    %1444 = vmatpush1.bf16.msra.mxu0 0
    %1445 = vmatprep.subr.bf16.mxu0 0
    %1446 = vmatpush1.bf16.msra.mxu0 0
    %1447 = vmatprep.subr.bf16.mxu0 0
    %1448 = vmatpush1.bf16.msra.mxu0 0
    %1449 = vmatprep.subr.bf16.mxu0 0
    %1450 = vmatpush1.bf16.msra.mxu0 0
    %1451 = vmatprep.subr.bf16.mxu0 0
    %1452 = vmatpush1.bf16.msra.mxu0 0
    %1453 = vmatprep.mubr.bf16.mxu0 0
    %1454 = vmatmul.mubr.bf16.gmra.mrb[0].mxu0 %v1416
    %v1455 = vpop.f32.mrb[0].mxu0
    %v1456 = vadd.f32 0.0, %v1455
    %v1457 = vpop.f32.mrb[0].mxu0
    %v1458 = vpop.f32.mrb[0].mxu0
    %v1459 = vpop.f32.mrb[0].mxu0
    %1460 = vdwg.mxu0
    %v1461 = vpack.c.bf16 %v1456, %v1408
    %v1463 = vunpack.c.l.b16 %v411
    %v1464 = vpack.c.b16 %v1463, %v1463
    %1465 = vrot.lane.b32.xlu0 %v1464, 96
    %v1466 = vpop.permute.xlu0 %1465
    %v1468 = vsel %vm421, %v1461, 0
    %v1471 = vsel %vm546, %v1466, 0
    %1473 = vmatprep.subr.bf16.mxu0 0
    %1474 = vmatpush1.bf16.msra.mxu0 %v1471
    %1475 = vmatprep.subr.bf16.mxu0 0
    %1476 = vmatpush1.bf16.msra.mxu0 0
    %1477 = vmatprep.subr.bf16.mxu0 0
    %1478 = vmatpush1.bf16.msra.mxu0 0
    %1479 = vmatprep.subr.bf16.mxu0 0
    %1480 = vmatpush1.bf16.msra.mxu0 0
    %1481 = vmatprep.subr.bf16.mxu0 0
    %1482 = vmatpush1.bf16.msra.mxu0 0
    %1483 = vmatprep.subr.bf16.mxu0 0
    %1484 = vmatpush1.bf16.msra.mxu0 0
    %1485 = vmatprep.subr.bf16.mxu0 0
    %1486 = vmatpush1.bf16.msra.mxu0 0
    %1487 = vmatprep.subr.bf16.mxu0 0
    %1488 = vmatpush1.bf16.msra.mxu0 0
    %1489 = vmatprep.subr.bf16.mxu0 0
    %1490 = vmatpush1.bf16.msra.mxu0 0
    %1491 = vmatprep.subr.bf16.mxu0 0
    %1492 = vmatpush1.bf16.msra.mxu0 0
    %1493 = vmatprep.subr.bf16.mxu0 0
    %1494 = vmatpush1.bf16.msra.mxu0 0
    %1495 = vmatprep.subr.bf16.mxu0 0
    %1496 = vmatpush1.bf16.msra.mxu0 0
    %1497 = vmatprep.subr.bf16.mxu0 0
    %1498 = vmatpush1.bf16.msra.mxu0 0
    %1499 = vmatprep.subr.bf16.mxu0 0
    %1500 = vmatpush1.bf16.msra.mxu0 0
    %1501 = vmatprep.subr.bf16.mxu0 0
    %1502 = vmatpush1.bf16.msra.mxu0 0
    %1503 = vmatprep.subr.bf16.mxu0 0
    %1504 = vmatpush1.bf16.msra.mxu0 0
    %1505 = vmatprep.mubr.bf16.mxu0 0
    %1506 = vmatmul.mubr.bf16.gmra.mrb[0].mxu0 %v1468
    %v1507 = vpop.f32.mrb[0].mxu0
    %v1508 = vadd.f32 0.0, %v1507
    %v1509 = vpop.f32.mrb[0].mxu0
    %v1510 = vpop.f32.mrb[0].mxu0
    %v1511 = vadd.f32 0.0, %v1510
    %v1512 = vpop.f32.mrb[0].mxu0
    %1513 = vdwg.mxu0
    %v1514 = vadd.f32 %v1239, %v1508
    %v1515 = vadd.f32 %v1240, %v1511
    %v1516 = vadd.f32 %v283, %v1514
    %v1517 = vadd.f32 %v284, %v1515
    %v1518 = vld [vmem:[#allocation8 + $0x14] sm:$0x1]
    %v1519 = vlaneseq
    %v1520 = vshrl.u32 %v1519, 7
    %v1521 = vsub.s32 0, %v1520
    %v1522 = vrot.slane %v1518, %v1521
    %v1523 = vadd.f32 %v1516, %v1522
    %v1524 = vadd.f32 %v1517, %v1522
    %v1525 = vld [vmem:[#allocation8 + $0x2] sm:$0x1]
    %v1526 = vld [vmem:[#allocation8 + $0x7] sm:$0x1]
    %v1527 = vsel %vm78, %v1523, 0.0
    %1528 = vadd.xlane.f32.xlu0 %v1527
    %v1529 = vpop.xlane.xlu0 %1528
    %v1530 = vsel %vm78, %v1524, 0.0
    %1531 = vadd.xlane.f32.xlu0 %v1530
    %v1532 = vpop.xlane.xlu0 %1531
    %v1533 = vmul.f32 %v1529, %v85
    %v1534 = vmul.f32 %v1532, %v85
    %v1535 = vsub.f32 %v1523, %v1533
    %v1536 = vsub.f32 %v1524, %v1534
    %v1537 = vmul.f32 %v1535, %v1535
    %v1538 = vmul.f32 %v1536, %v1536
    %v1539 = vsel %vm78, %v1537, 0.0
    %1540 = vadd.xlane.f32.xlu0 %v1539
    %v1541 = vpop.xlane.xlu0 %1540
    %v1542 = vsel %vm78, %v1538, 0.0
    %1543 = vadd.xlane.f32.xlu0 %v1542
    %v1544 = vpop.xlane.xlu0 %1543
    %v1545 = vmul.f32 %v1541, %v85
    %v1546 = vmul.f32 %v1544, %v85
    %v1547 = vadd.f32 %v1545, 1e-05
    %v1548 = vadd.f32 %v1546, 1e-05
    %v1549 = vrsqrt.pop %v1547
    %v1550 = vrsqrt.pop %v1548
    %v1551 = vmul.f32 %v1535, %v1549
    %v1552 = vmul.f32 %v1536, %v1550
    %v1553 = vlaneseq
    %v1554 = vshrl.u32 %v1553, 7
    %v1555 = vsub.s32 0, %v1554
    %v1556 = vrot.slane %v1525, %v1555
    %v1557 = vmul.f32 %v1551, %v1556
    %v1558 = vmul.f32 %v1552, %v1556
    %v1559 = vlaneseq
    %v1560 = vshrl.u32 %v1559, 7
    %v1561 = vsub.s32 0, %v1560
    %v1562 = vrot.slane %v1526, %v1561
    %v1563 = vadd.f32 %v1557, %v1562
    %v1564 = vadd.f32 %v1558, %v1562
    %v1565 = vld [vmem:[#allocation5 + $0x4] sm:$0xf]
    %v1566 = vld [vmem:[#allocation5 + $0x10] sm:$0xf]
    %v1567 = vld [vmem:[#allocation5 + $0x1c] sm:$0xf]
    %v1568 = vld [vmem:[#allocation5 + $0x28] sm:$0xf]
    %v1569 = vpack.c.bf16 %v1564, %v1563
    %v1570 = vld [vmem:[#allocation8 + $0x15] sm:$0x1]
    %v1571 = vlaneseq
    %v1572 = vshrl.u32 %v1571, 7
    %v1573 = vsub.s32 0, %v1572
    %v1574 = vrot.slane %v1570, %v1573
    %v1579 = vunpack.c.l.b16 %v1565
    %v1580 = vunpack.c.l.b16 %v1566
    %v1581 = vunpack.c.l.b16 %v1567
    %v1582 = vunpack.c.l.b16 %v1568
    %v1583 = vpack.c.b16 %v1580, %v1579
    %v1584 = vpack.c.b16 %v1582, %v1581
    %1585 = vrot.lane.b32.xlu0 %v1583, 64
    %v1586 = vpop.permute.xlu0 %1585
    %1587 = vrot.lane.b32.xlu0 %v1584, 64
    %v1588 = vpop.permute.xlu0 %1587
    %v1592 = vsel %vm78, %v1569, 0
    %1594 = vmatprep.subr.bf16.mxu0 0
    %1595 = vmatpush1.bf16.msra.mxu0 %v1586
    %1596 = vmatprep.subr.bf16.mxu0 0
    %1597 = vmatpush1.bf16.msra.mxu0 %v1588
    %1598 = vmatprep.subr.bf16.mxu0 0
    %1599 = vmatpush1.bf16.msra.mxu0 0
    %1600 = vmatprep.subr.bf16.mxu0 0
    %1601 = vmatpush1.bf16.msra.mxu0 0
    %1602 = vmatprep.subr.bf16.mxu0 0
    %1603 = vmatpush1.bf16.msra.mxu0 0
    %1604 = vmatprep.subr.bf16.mxu0 0
    %1605 = vmatpush1.bf16.msra.mxu0 0
    %1606 = vmatprep.subr.bf16.mxu0 0
    %1607 = vmatpush1.bf16.msra.mxu0 0
    %1608 = vmatprep.subr.bf16.mxu0 0
    %1609 = vmatpush1.bf16.msra.mxu0 0
    %1610 = vmatprep.subr.bf16.mxu0 0
    %1611 = vmatpush1.bf16.msra.mxu0 0
    %1612 = vmatprep.subr.bf16.mxu0 0
    %1613 = vmatpush1.bf16.msra.mxu0 0
    %1614 = vmatprep.subr.bf16.mxu0 0
    %1615 = vmatpush1.bf16.msra.mxu0 0
    %1616 = vmatprep.subr.bf16.mxu0 0
    %1617 = vmatpush1.bf16.msra.mxu0 0
    %1618 = vmatprep.subr.bf16.mxu0 0
    %1619 = vmatpush1.bf16.msra.mxu0 0
    %1620 = vmatprep.subr.bf16.mxu0 0
    %1621 = vmatpush1.bf16.msra.mxu0 0
    %1622 = vmatprep.subr.bf16.mxu0 0
    %1623 = vmatpush1.bf16.msra.mxu0 0
    %1624 = vmatprep.subr.bf16.mxu0 0
    %1625 = vmatpush1.bf16.msra.mxu0 0
    %1626 = vmatprep.mubr.bf16.mxu0 0
    %1627 = vmatmul.mubr.bf16.gmra.mrb[0].mxu0 %v1592
    %v1628 = vpop.f32.mrb[0].mxu0
    %v1629 = vadd.f32 %v1574, %v1628
    %v1630 = vpop.f32.mrb[0].mxu0
    %v1631 = vpop.f32.mrb[0].mxu0
    %v1632 = vadd.f32 %v1574, %v1631
    %v1633 = vpop.f32.mrb[0].mxu0
    %1634 = vdwg.mxu0
    %v1635 = vxor.u32 %v1629, 2147483648
    %v1636 = vxor.u32 %v1632, 2147483648
    %v1637 = vmul.f32 %v1635, 1.442695
    %v1638 = vpow.pop %v1637
    %v1639 = vmul.f32 %v1636, 1.442695
    %v1640 = vpow.pop %v1639
    %v1641 = vadd.f32 %v1638, 1.0
    %v1642 = vadd.f32 %v1640, 1.0
    %v1643 = vrcp.pop %v1641
    %v1644 = vmul.f32 1.0, %v1643
    %v1645 = vrcp.pop %v1642
    %v1646 = vmul.f32 1.0, %v1645
    %1649 = vrot.lane.b32.xlu0 %v1644, 96
    %v1650 = vpop.permute.xlu0 %1649
    %1651 = vrot.lane.b32.xlu0 %v1646, 96
    %v1652 = vpop.permute.xlu0 %1651
    %v1655 = vmul.f32 %v1629, %v1650
    %v1656 = vmul.f32 %v1632, %v1652
    %v1657 = vlaneseq
    %v1658 = vshrl.u32 %v1657, 7
    %v1659 = vadd.s32 %v1658, 8
    %vm1660 = vcmp.lt.s32.totalorder %v1658, 0
    %v1661 = vsub.s32 0, %v1658
    %v1662 = vsel %vm1660, %v1661, %v1658
    %v1663 = vshrl.u32 %v1662, 3
    %v1664 = vand.u32 %v1662, 7
    %v1665 = vsub.s32 0, %v1664
    %v1666 = vsel %vm1660, %v1665, %v1664
    %vm1667 = vcmp.lt.s32.totalorder %v1659, 0
    %v1668 = vsub.s32 0, %v1659
    %v1669 = vsel %vm1667, %v1668, %v1659
    %v1670 = vshrl.u32 %v1669, 3
    %v1671 = vand.u32 %v1669, 7
    %v1672 = vsub.s32 0, %v1671
    %v1673 = vsel %vm1667, %v1672, %v1671
    %vm1674 = vcmp.ne.s32.totalorder %v1666, 0
    %vm1675 = vcmp.ne.s32.totalorder %v1673, 0
    %vm1676 = vcmp.lt.s32.totalorder %v1666, 0
    %vm1677 = vcmp.lt.s32.totalorder %v1673, 0
    %vm1678 = vmand %vm1676, %vm1674
    %vm1679 = vmand %vm1677, %vm1675
    %v1680 = vadd.s32 %v1666, 8
    %v1681 = vadd.s32 %v1673, 8
    %v1682 = vsel %vm1678, %v1680, %v1666
    %v1683 = vsel %vm1679, %v1681, %v1673
    %v1684 = vld [vmem:[#allocation8 + $0x16] sm:$0x1]
    %v1685 = vlaneseq
    %v1686 = vshrl.u32 %v1685, 7
    %v1687 = vsub.s32 0, %v1686
    %v1688 = vrot.slane %v1684, %v1687
    %v1689 = vrot.slane %v1655, 5
    %v1690 = vrot.slane %v1656, 5
    %vm1691 = vcmp.lt.s32.totalorder %v1658, 3
    %v1692 = vsel %vm1691, %v1689, %v1690
    %v1693 = vsel %vm1691, %v1690, %v1689
    %v1694 = vadd.s32 %v1682, 4294967293
    %v1695 = vadd.s32 %v1683, 4294967293
    %vm1696 = vcmp.ge.s32.totalorder %v1694, 0
    %vm1697 = vcmp.ge.s32.totalorder %v1695, 0
    %vm1698 = vcmp.lt.s32.totalorder %v1694, 8
    %vm1699 = vcmp.lt.s32.totalorder %v1695, 8
    %vm1700 = vmand %vm1696, %vm1698
    %vm1701 = vmand %vm1697, %vm1699
    %v1702 = vld [vmem:[#allocation8 + $0xa] sm:$0x1]
    %v1703 = vsel %vm1700, 1, 0
    %v1704 = vsel %vm1701, 1, 0
    %vm1705 = vcmp.eq.s32.totalorder %v1703, 1
    %vm1706 = vcmp.eq.s32.totalorder %v1704, 1
    %v1707 = vsel %vm1705, %v1693, 0.0
    %v1708 = vsel %vm1706, %v1692, 0.0
    %v1709 = vlaneseq
    %v1710 = vshrl.u32 %v1709, 7
    %v1711 = vsub.s32 0, %v1710
    %v1712 = vrot.slane %v1702, %v1711
    %v1713 = vmul.f32 %v1707, %v1712
    %v1714 = vmul.f32 %v1708, %v1712
    %v1715 = vadd.f32 %v1688, %v1713
    %v1716 = vadd.f32 %v1688, %v1714
    %v1717 = vrot.slane %v1655, 6
    %v1718 = vrot.slane %v1656, 6
    %vm1719 = vcmp.lt.s32.totalorder %v1658, 2
    %v1720 = vsel %vm1719, %v1717, %v1718
    %v1721 = vsel %vm1719, %v1718, %v1717
    %v1722 = vadd.s32 %v1682, 4294967294
    %v1723 = vadd.s32 %v1683, 4294967294
    %vm1724 = vcmp.ge.s32.totalorder %v1722, 0
    %vm1725 = vcmp.ge.s32.totalorder %v1723, 0
    %vm1726 = vcmp.lt.s32.totalorder %v1722, 8
    %vm1727 = vcmp.lt.s32.totalorder %v1723, 8
    %vm1728 = vmand %vm1724, %vm1726
    %vm1729 = vmand %vm1725, %vm1727
    %v1730 = vld [vmem:[#allocation8 + $0xb] sm:$0x1]
    %v1731 = vsel %vm1728, 1, 0
    %v1732 = vsel %vm1729, 1, 0
    %vm1733 = vcmp.eq.s32.totalorder %v1731, 1
    %vm1734 = vcmp.eq.s32.totalorder %v1732, 1
    %v1735 = vsel %vm1733, %v1721, 0.0
    %v1736 = vsel %vm1734, %v1720, 0.0
    %v1737 = vlaneseq
    %v1738 = vshrl.u32 %v1737, 7
    %v1739 = vsub.s32 0, %v1738
    %v1740 = vrot.slane %v1730, %v1739
    %v1741 = vmul.f32 %v1735, %v1740
    %v1742 = vmul.f32 %v1736, %v1740
    %v1743 = vadd.f32 %v1715, %v1741
    %v1744 = vadd.f32 %v1716, %v1742
    %v1745 = vrot.slane %v1655, 7
    %v1746 = vrot.slane %v1656, 7
    %vm1747 = vcmp.lt.s32.totalorder %v1658, 1
    %v1748 = vsel %vm1747, %v1745, %v1746
    %v1749 = vsel %vm1747, %v1746, %v1745
    %v1750 = vadd.s32 %v1682, 4294967295
    %v1751 = vadd.s32 %v1683, 4294967295
    %vm1752 = vcmp.ge.s32.totalorder %v1750, 0
    %vm1753 = vcmp.ge.s32.totalorder %v1751, 0
    %vm1754 = vcmp.lt.s32.totalorder %v1750, 8
    %vm1755 = vcmp.lt.s32.totalorder %v1751, 8
    %vm1756 = vmand %vm1752, %vm1754
    %vm1757 = vmand %vm1753, %vm1755
    %v1758 = vld [vmem:[#allocation8 + $0xc] sm:$0x1]
    %v1759 = vsel %vm1756, 1, 0
    %v1760 = vsel %vm1757, 1, 0
    %vm1761 = vcmp.eq.s32.totalorder %v1759, 1
    %vm1762 = vcmp.eq.s32.totalorder %v1760, 1
    %v1763 = vsel %vm1761, %v1749, 0.0
    %v1764 = vsel %vm1762, %v1748, 0.0
    %v1765 = vlaneseq
    %v1766 = vshrl.u32 %v1765, 7
    %v1767 = vsub.s32 0, %v1766
    %v1768 = vrot.slane %v1758, %v1767
    %v1769 = vmul.f32 %v1763, %v1768
    %v1770 = vmul.f32 %v1764, %v1768
    %v1771 = vadd.f32 %v1743, %v1769
    %v1772 = vadd.f32 %v1744, %v1770
    %vm1773 = vcmp.ge.s32.totalorder %v1682, 0
    %vm1774 = vcmp.ge.s32.totalorder %v1683, 0
    %vm1775 = vcmp.lt.s32.totalorder %v1682, 8
    %vm1776 = vcmp.lt.s32.totalorder %v1683, 8
    %vm1777 = vmand %vm1773, %vm1775
    %vm1778 = vmand %vm1774, %vm1776
    %v1779 = vld [vmem:[#allocation8 + $0xd] sm:$0x1]
    %v1780 = vsel %vm1777, 1, 0
    %v1781 = vsel %vm1778, 1, 0
    %vm1782 = vcmp.eq.s32.totalorder %v1780, 1
    %vm1783 = vcmp.eq.s32.totalorder %v1781, 1
    %v1784 = vsel %vm1782, %v1655, 0.0
    %v1785 = vsel %vm1783, %v1656, 0.0
    %v1786 = vlaneseq
    %v1787 = vshrl.u32 %v1786, 7
    %v1788 = vsub.s32 0, %v1787
    %v1789 = vrot.slane %v1779, %v1788
    %v1790 = vmul.f32 %v1784, %v1789
    %v1791 = vmul.f32 %v1785, %v1789
    %v1792 = vadd.f32 %v1771, %v1790
    %v1793 = vadd.f32 %v1772, %v1791
    %v1794 = vrot.slane %v1655, 1
    %v1795 = vrot.slane %v1656, 1
    %vm1796 = vcmp.lt.s32.totalorder %v1658, 7
    %v1797 = vsel %vm1796, %v1794, %v1795
    %v1798 = vsel %vm1796, %v1795, %v1794
    %v1799 = vadd.s32 %v1682, 1
    %v1800 = vadd.s32 %v1683, 1
    %vm1801 = vcmp.ge.s32.totalorder %v1799, 0
    %vm1802 = vcmp.ge.s32.totalorder %v1800, 0
    %vm1803 = vcmp.lt.s32.totalorder %v1799, 8
    %vm1804 = vcmp.lt.s32.totalorder %v1800, 8
    %vm1805 = vmand %vm1801, %vm1803
    %vm1806 = vmand %vm1802, %vm1804
    %v1807 = vld [vmem:[#allocation8 + $0xe] sm:$0x1]
    %v1808 = vsel %vm1805, 1, 0
    %v1809 = vsel %vm1806, 1, 0
    %vm1810 = vcmp.eq.s32.totalorder %v1808, 1
    %vm1811 = vcmp.eq.s32.totalorder %v1809, 1
    %v1812 = vsel %vm1810, %v1797, 0.0
    %v1813 = vsel %vm1811, %v1798, 0.0
    %v1814 = vlaneseq
    %v1815 = vshrl.u32 %v1814, 7
    %v1816 = vsub.s32 0, %v1815
    %v1817 = vrot.slane %v1807, %v1816
    %v1818 = vmul.f32 %v1812, %v1817
    %v1819 = vmul.f32 %v1813, %v1817
    %v1820 = vadd.f32 %v1792, %v1818
    %v1821 = vadd.f32 %v1793, %v1819
    %v1822 = vrot.slane %v1655, 2
    %v1823 = vrot.slane %v1656, 2
    %vm1824 = vcmp.lt.s32.totalorder %v1658, 6
    %v1825 = vsel %vm1824, %v1822, %v1823
    %v1826 = vsel %vm1824, %v1823, %v1822
    %v1827 = vadd.s32 %v1682, 2
    %v1828 = vadd.s32 %v1683, 2
    %vm1829 = vcmp.ge.s32.totalorder %v1827, 0
    %vm1830 = vcmp.ge.s32.totalorder %v1828, 0
    %vm1831 = vcmp.lt.s32.totalorder %v1827, 8
    %vm1832 = vcmp.lt.s32.totalorder %v1828, 8
    %vm1833 = vmand %vm1829, %vm1831
    %vm1834 = vmand %vm1830, %vm1832
    %v1835 = vld [vmem:[#allocation8 + $0xf] sm:$0x1]
    %v1836 = vsel %vm1833, 1, 0
    %v1837 = vsel %vm1834, 1, 0
    %vm1838 = vcmp.eq.s32.totalorder %v1836, 1
    %vm1839 = vcmp.eq.s32.totalorder %v1837, 1
    %v1840 = vsel %vm1838, %v1825, 0.0
    %v1841 = vsel %vm1839, %v1826, 0.0
    %v1842 = vlaneseq
    %v1843 = vshrl.u32 %v1842, 7
    %v1844 = vsub.s32 0, %v1843
    %v1845 = vrot.slane %v1835, %v1844
    %v1846 = vmul.f32 %v1840, %v1845
    %v1847 = vmul.f32 %v1841, %v1845
    %v1848 = vadd.f32 %v1820, %v1846
    %v1849 = vadd.f32 %v1821, %v1847
    %v1850 = vrot.slane %v1655, 3
    %v1851 = vrot.slane %v1656, 3
    %vm1852 = vcmp.lt.s32.totalorder %v1658, 5
    %v1853 = vsel %vm1852, %v1850, %v1851
    %v1854 = vsel %vm1852, %v1851, %v1850
    %v1855 = vadd.s32 %v1682, 3
    %v1856 = vadd.s32 %v1683, 3
    %vm1857 = vcmp.ge.s32.totalorder %v1855, 0
    %vm1858 = vcmp.ge.s32.totalorder %v1856, 0
    %vm1859 = vcmp.lt.s32.totalorder %v1855, 8
    %vm1860 = vcmp.lt.s32.totalorder %v1856, 8
    %vm1861 = vmand %vm1857, %vm1859
    %vm1862 = vmand %vm1858, %vm1860
    %v1863 = vld [vmem:[#allocation8 + $0x10] sm:$0x1]
    %v1864 = vsel %vm1861, 1, 0
    %v1865 = vsel %vm1862, 1, 0
    %vm1866 = vcmp.eq.s32.totalorder %v1864, 1
    %vm1867 = vcmp.eq.s32.totalorder %v1865, 1
    %v1868 = vsel %vm1866, %v1853, 0.0
    %v1869 = vsel %vm1867, %v1854, 0.0
    %v1870 = vlaneseq
    %v1871 = vshrl.u32 %v1870, 7
    %v1872 = vsub.s32 0, %v1871
    %v1873 = vrot.slane %v1863, %v1872
    %v1874 = vmul.f32 %v1868, %v1873
    %v1875 = vmul.f32 %v1869, %v1873
    %v1876 = vadd.f32 %v1848, %v1874
    %v1877 = vadd.f32 %v1849, %v1875
    %v1878 = vld [vmem:[#allocation8 + $0x17] sm:$0x1]
    %v1879 = vlaneseq
    %v1880 = vshrl.u32 %v1879, 7
    %v1881 = vsub.s32 0, %v1880
    %v1882 = vrot.slane %v1878, %v1881
    %v1883 = vmul.f32 %v1876, %v1882
    %v1884 = vmul.f32 %v1877, %v1882
    %v1885 = vld [vmem:[#allocation8 + $0x18] sm:$0x1]
    %v1886 = vlaneseq
    %v1887 = vshrl.u32 %v1886, 7
    %v1888 = vsub.s32 0, %v1887
    %v1889 = vrot.slane %v1885, %v1888
    %v1890 = vadd.f32 %v1883, %v1889
    %v1891 = vadd.f32 %v1884, %v1889
    %v1892 = vxor.u32 %v1890, 2147483648
    %v1893 = vxor.u32 %v1891, 2147483648
    %v1894 = vmul.f32 %v1892, 1.442695
    %v1895 = vpow.pop %v1894
    %v1896 = vmul.f32 %v1893, 1.442695
    %v1897 = vpow.pop %v1896
    %v1898 = vadd.f32 %v1895, 1.0
    %v1899 = vadd.f32 %v1897, 1.0
    %v1900 = vrcp.pop %v1898
    %v1901 = vmul.f32 1.0, %v1900
    %v1902 = vrcp.pop %v1899
    %v1903 = vmul.f32 1.0, %v1902
    %v1904 = vmul.f32 %v1890, %v1901
    %v1905 = vmul.f32 %v1891, %v1903
    %v1906 = vld [vmem:[#allocation5 + $0x8] sm:$0xf]
    %v1907 = vld [vmem:[#allocation5 + $0x14] sm:$0xf]
    %v1908 = vld [vmem:[#allocation5 + $0x20] sm:$0xf]
    %v1909 = vld [vmem:[#allocation5 + $0x2c] sm:$0xf]
    %v1910 = vpack.c.bf16 %v1905, %v1904
    %v1911 = vld [vmem:[#allocation8 + $0x19] sm:$0x1]
    %v1912 = vlaneseq
    %v1913 = vshrl.u32 %v1912, 7
    %v1914 = vsub.s32 0, %v1913
    %v1915 = vrot.slane %v1911, %v1914
    %v1920 = vunpack.c.l.b16 %v1906
    %v1921 = vunpack.c.l.b16 %v1907
    %v1922 = vunpack.c.l.b16 %v1908
    %v1923 = vunpack.c.l.b16 %v1909
    %v1924 = vpack.c.b16 %v1921, %v1920
    %v1925 = vpack.c.b16 %v1923, %v1922
    %v1929 = vsel %vm78, %v1910, 0
    %1931 = vmatprep.subr.bf16.mxu0 0
    %1932 = vmatpush1.bf16.msra.mxu0 %v1924
    %1933 = vmatprep.subr.bf16.mxu0 0
    %1934 = vmatpush1.bf16.msra.mxu0 %v1925
    %1935 = vmatprep.subr.bf16.mxu0 0
    %1936 = vmatpush1.bf16.msra.mxu0 0
    %1937 = vmatprep.subr.bf16.mxu0 0
    %1938 = vmatpush1.bf16.msra.mxu0 0
    %1939 = vmatprep.subr.bf16.mxu0 0
    %1940 = vmatpush1.bf16.msra.mxu0 0
    %1941 = vmatprep.subr.bf16.mxu0 0
    %1942 = vmatpush1.bf16.msra.mxu0 0
    %1943 = vmatprep.subr.bf16.mxu0 0
    %1944 = vmatpush1.bf16.msra.mxu0 0
    %1945 = vmatprep.subr.bf16.mxu0 0
    %1946 = vmatpush1.bf16.msra.mxu0 0
    %1947 = vmatprep.subr.bf16.mxu0 0
    %1948 = vmatpush1.bf16.msra.mxu0 0
    %1949 = vmatprep.subr.bf16.mxu0 0
    %1950 = vmatpush1.bf16.msra.mxu0 0
    %1951 = vmatprep.subr.bf16.mxu0 0
    %1952 = vmatpush1.bf16.msra.mxu0 0
    %1953 = vmatprep.subr.bf16.mxu0 0
    %1954 = vmatpush1.bf16.msra.mxu0 0
    %1955 = vmatprep.subr.bf16.mxu0 0
    %1956 = vmatpush1.bf16.msra.mxu0 0
    %1957 = vmatprep.subr.bf16.mxu0 0
    %1958 = vmatpush1.bf16.msra.mxu0 0
    %1959 = vmatprep.subr.bf16.mxu0 0
    %1960 = vmatpush1.bf16.msra.mxu0 0
    %1961 = vmatprep.subr.bf16.mxu0 0
    %1962 = vmatpush1.bf16.msra.mxu0 0
    %1963 = vmatprep.mubr.bf16.mxu0 0
    %1964 = vmatmul.mubr.bf16.gmra.mrb[0].mxu0 %v1929
    %v1965 = vpop.f32.mrb[0].mxu0
    %v1966 = vadd.f32 %v1915, %v1965
    %v1967 = vpop.f32.mrb[0].mxu0
    %v1968 = vpop.f32.mrb[0].mxu0
    %v1969 = vadd.f32 %v1915, %v1968
    %v1970 = vpop.f32.mrb[0].mxu0
    %1971 = vdwg.mxu0
    %v1972 = vadd.f32 %v1523, %v1966
    %v1973 = vadd.f32 %v1524, %v1969
    %v1974 = vld [vmem:[#allocation8 + $0x3] sm:$0x1]
    %v1975 = vld [vmem:[#allocation8 + $0x8] sm:$0x1]
    %v1976 = vsel %vm78, %v1972, 0.0
    %1977 = vadd.xlane.f32.xlu0 %v1976
    %v1978 = vpop.xlane.xlu0 %1977
    %v1979 = vsel %vm78, %v1973, 0.0
    %1980 = vadd.xlane.f32.xlu0 %v1979
    %v1981 = vpop.xlane.xlu0 %1980
    %v1982 = vmul.f32 %v1978, %v85
    %v1983 = vmul.f32 %v1981, %v85
    %v1984 = vsub.f32 %v1972, %v1982
    %v1985 = vsub.f32 %v1973, %v1983
    %v1986 = vmul.f32 %v1984, %v1984
    %v1987 = vmul.f32 %v1985, %v1985
    %v1988 = vsel %vm78, %v1986, 0.0
    %1989 = vadd.xlane.f32.xlu0 %v1988
    %v1990 = vpop.xlane.xlu0 %1989
    %v1991 = vsel %vm78, %v1987, 0.0
    %1992 = vadd.xlane.f32.xlu0 %v1991
    %v1993 = vpop.xlane.xlu0 %1992
    %v1994 = vmul.f32 %v1990, %v85
    %v1995 = vmul.f32 %v1993, %v85
    %v1996 = vadd.f32 %v1994, 1e-05
    %v1997 = vadd.f32 %v1995, 1e-05
    %v1998 = vrsqrt.pop %v1996
    %v1999 = vrsqrt.pop %v1997
    %v2000 = vmul.f32 %v1984, %v1998
    %v2001 = vmul.f32 %v1985, %v1999
    %v2002 = vlaneseq
    %v2003 = vshrl.u32 %v2002, 7
    %v2004 = vsub.s32 0, %v2003
    %v2005 = vrot.slane %v1974, %v2004
    %v2006 = vmul.f32 %v2000, %v2005
    %v2007 = vmul.f32 %v2001, %v2005
    %v2008 = vlaneseq
    %v2009 = vshrl.u32 %v2008, 7
    %v2010 = vsub.s32 0, %v2009
    %v2011 = vrot.slane %v1975, %v2010
    %v2012 = vadd.f32 %v2006, %v2011
    %v2013 = vadd.f32 %v2007, %v2011
    %v2014 = vpack.c.bf16 %v2013, %v2012
    %v2015 = vld [vmem:[#allocation8 + $0x1a] sm:$0x1]
    %v2016 = vlaneseq
    %v2017 = vshrl.u32 %v2016, 7
    %v2018 = vsub.s32 0, %v2017
    %v2019 = vrot.slane %v2015, %v2018
    %2020 = vrot.lane.b32.xlu0 %v1924, 96
    %v2021 = vpop.permute.xlu0 %2020
    %2022 = vrot.lane.b32.xlu0 %v1925, 96
    %v2023 = vpop.permute.xlu0 %2022
    %v2027 = vsel %vm78, %v2014, 0
    %2029 = vmatprep.subr.bf16.mxu0 0
    %2030 = vmatpush1.bf16.msra.mxu0 %v2021
    %2031 = vmatprep.subr.bf16.mxu0 0
    %2032 = vmatpush1.bf16.msra.mxu0 %v2023
    %2033 = vmatprep.subr.bf16.mxu0 0
    %2034 = vmatpush1.bf16.msra.mxu0 0
    %2035 = vmatprep.subr.bf16.mxu0 0
    %2036 = vmatpush1.bf16.msra.mxu0 0
    %2037 = vmatprep.subr.bf16.mxu0 0
    %2038 = vmatpush1.bf16.msra.mxu0 0
    %2039 = vmatprep.subr.bf16.mxu0 0
    %2040 = vmatpush1.bf16.msra.mxu0 0
    %2041 = vmatprep.subr.bf16.mxu0 0
    %2042 = vmatpush1.bf16.msra.mxu0 0
    %2043 = vmatprep.subr.bf16.mxu0 0
    %2044 = vmatpush1.bf16.msra.mxu0 0
    %2045 = vmatprep.subr.bf16.mxu0 0
    %2046 = vmatpush1.bf16.msra.mxu0 0
    %2047 = vmatprep.subr.bf16.mxu0 0
    %2048 = vmatpush1.bf16.msra.mxu0 0
    %2049 = vmatprep.subr.bf16.mxu0 0
    %2050 = vmatpush1.bf16.msra.mxu0 0
    %2051 = vmatprep.subr.bf16.mxu0 0
    %2052 = vmatpush1.bf16.msra.mxu0 0
    %2053 = vmatprep.subr.bf16.mxu0 0
    %2054 = vmatpush1.bf16.msra.mxu0 0
    %2055 = vmatprep.subr.bf16.mxu0 0
    %2056 = vmatpush1.bf16.msra.mxu0 0
    %2057 = vmatprep.subr.bf16.mxu0 0
    %2058 = vmatpush1.bf16.msra.mxu0 0
    %2059 = vmatprep.subr.bf16.mxu0 0
    %2060 = vmatpush1.bf16.msra.mxu0 0
    %2061 = vmatprep.mubr.bf16.mxu0 0
    %2062 = vmatmul.mubr.bf16.gmra.mrb[0].mxu0 %v2027
    %v2063 = vpop.f32.mrb[0].mxu0
    %v2064 = vadd.f32 %v2019, %v2063
    %v2065 = vpop.f32.mrb[0].mxu0
    %v2066 = vpop.f32.mrb[0].mxu0
    %v2067 = vadd.f32 %v2019, %v2066
    %v2068 = vpop.f32.mrb[0].mxu0
    %2069 = vdwg.mxu0
    %v2070 = vxor.u32 %v2064, 2147483648
    %v2071 = vxor.u32 %v2067, 2147483648
    %v2072 = vmul.f32 %v2070, 1.442695
    %v2073 = vpow.pop %v2072
    %v2074 = vmul.f32 %v2071, 1.442695
    %v2075 = vpow.pop %v2074
    %v2076 = vadd.f32 %v2073, 1.0
    %v2077 = vadd.f32 %v2075, 1.0
    %v2078 = vrcp.pop %v2076
    %v2079 = vmul.f32 1.0, %v2078
    %v2080 = vrcp.pop %v2077
    %v2081 = vmul.f32 1.0, %v2080
    %v2082 = vmul.f32 %v2064, %v2079
    %v2083 = vmul.f32 %v2067, %v2081
    %v2084 = vld [vmem:[#allocation7] sm:$0xf]
    %v2085 = vld [vmem:[#allocation7 + $0x4] sm:$0xf]
    %v2086 = vld [vmem:[#allocation7 + $0x8] sm:$0xf]
    %v2087 = vld [vmem:[#allocation7 + $0xc] sm:$0xf]
    %v2088 = vld [vmem:[#allocation7 + $0x10] sm:$0xf]
    %v2089 = vld [vmem:[#allocation7 + $0x14] sm:$0xf]
    %v2090 = vld [vmem:[#allocation7 + $0x18] sm:$0xf]
    %v2091 = vld [vmem:[#allocation7 + $0x1c] sm:$0xf]
    %v2092 = vpack.c.bf16 %v2083, %v2082
    %v2093 = vld [vmem:[#allocation8 + $0x1b] sm:$0x1]
    %v2094 = vlaneseq
    %v2095 = vshrl.u32 %v2094, 7
    %v2096 = vsub.s32 0, %v2095
    %v2097 = vrot.slane %v2093, %v2096
    %v2106 = vunpack.c.l.b16 %v2084
    %v2107 = vunpack.c.l.b16 %v2085
    %v2108 = vunpack.c.l.b16 %v2086
    %v2109 = vunpack.c.l.b16 %v2087
    %v2110 = vunpack.c.l.b16 %v2088
    %v2111 = vunpack.c.l.b16 %v2089
    %v2112 = vunpack.c.l.b16 %v2090
    %v2113 = vunpack.c.l.b16 %v2091
    %v2114 = vpack.c.b16 %v2107, %v2106
    %v2115 = vpack.c.b16 %v2109, %v2108
    %v2116 = vpack.c.b16 %v2111, %v2110
    %v2117 = vpack.c.b16 %v2113, %v2112
    %2118 = vrot.lane.b32.xlu0 %v2114, 96
    %v2119 = vpop.permute.xlu0 %2118
    %2120 = vrot.lane.b32.xlu0 %v2115, 96
    %v2121 = vpop.permute.xlu0 %2120
    %2122 = vrot.lane.b32.xlu0 %v2116, 96
    %v2123 = vpop.permute.xlu0 %2122
    %2124 = vrot.lane.b32.xlu0 %v2117, 96
    %v2125 = vpop.permute.xlu0 %2124
    %v2131 = vsel %vm236, %v2092, 0
    %2133 = vmatprep.subr.bf16.mxu0 0
    %2134 = vmatpush1.bf16.msra.mxu0 %v2119
    %2135 = vmatprep.subr.bf16.mxu0 0
    %2136 = vmatpush1.bf16.msra.mxu0 %v2121
    %2137 = vmatprep.subr.bf16.mxu0 0
    %2138 = vmatpush1.bf16.msra.mxu0 %v2123
    %2139 = vmatprep.subr.bf16.mxu0 0
    %2140 = vmatpush1.bf16.msra.mxu0 %v2125
    %2141 = vmatprep.subr.bf16.mxu0 0
    %2142 = vmatpush1.bf16.msra.mxu0 0
    %2143 = vmatprep.subr.bf16.mxu0 0
    %2144 = vmatpush1.bf16.msra.mxu0 0
    %2145 = vmatprep.subr.bf16.mxu0 0
    %2146 = vmatpush1.bf16.msra.mxu0 0
    %2147 = vmatprep.subr.bf16.mxu0 0
    %2148 = vmatpush1.bf16.msra.mxu0 0
    %2149 = vmatprep.subr.bf16.mxu0 0
    %2150 = vmatpush1.bf16.msra.mxu0 0
    %2151 = vmatprep.subr.bf16.mxu0 0
    %2152 = vmatpush1.bf16.msra.mxu0 0
    %2153 = vmatprep.subr.bf16.mxu0 0
    %2154 = vmatpush1.bf16.msra.mxu0 0
    %2155 = vmatprep.subr.bf16.mxu0 0
    %2156 = vmatpush1.bf16.msra.mxu0 0
    %2157 = vmatprep.subr.bf16.mxu0 0
    %2158 = vmatpush1.bf16.msra.mxu0 0
    %2159 = vmatprep.subr.bf16.mxu0 0
    %2160 = vmatpush1.bf16.msra.mxu0 0
    %2161 = vmatprep.subr.bf16.mxu0 0
    %2162 = vmatpush1.bf16.msra.mxu0 0
    %2163 = vmatprep.subr.bf16.mxu0 0
    %2164 = vmatpush1.bf16.msra.mxu0 0
    %2165 = vmatprep.mubr.bf16.mxu0 0
    %2166 = vmatmul.mubr.bf16.gmra.mrb[0].mxu0 %v2131
    %v2167 = vpop.f32.mrb[0].mxu0
    %v2168 = vadd.f32 %v2097, %v2167
    %v2169 = vpop.f32.mrb[0].mxu0
    %v2170 = vpop.f32.mrb[0].mxu0
    %v2171 = vadd.f32 %v2097, %v2170
    %v2172 = vpop.f32.mrb[0].mxu0
    %2173 = vdwg.mxu0
    %v2174 = vmul.f32 %v2168, 0.5
    %v2175 = vmul.f32 %v2171, 0.5
    %v2176 = vadd.f32 %v1972, %v2174
    %v2177 = vadd.f32 %v1973, %v2175
    %v2178 = vld [vmem:[#allocation8 + $0x4] sm:$0x1]
    %v2179 = vld [vmem:[#allocation8 + $0x9] sm:$0x1]
    %v2180 = vsel %vm78, %v2176, 0.0
    %2181 = vadd.xlane.f32.xlu0 %v2180
    %v2182 = vpop.xlane.xlu0 %2181
    %v2183 = vsel %vm78, %v2177, 0.0
    %2184 = vadd.xlane.f32.xlu0 %v2183
    %v2185 = vpop.xlane.xlu0 %2184
    %v2186 = vmul.f32 %v2182, %v85
    %v2187 = vmul.f32 %v2185, %v85
    %v2188 = vsub.f32 %v2176, %v2186
    %v2189 = vsub.f32 %v2177, %v2187
    %v2190 = vmul.f32 %v2188, %v2188
    %v2191 = vmul.f32 %v2189, %v2189
    %v2192 = vsel %vm78, %v2190, 0.0
    %2193 = vadd.xlane.f32.xlu0 %v2192
    %v2194 = vpop.xlane.xlu0 %2193
    %v2195 = vsel %vm78, %v2191, 0.0
    %2196 = vadd.xlane.f32.xlu0 %v2195
    %v2197 = vpop.xlane.xlu0 %2196
    %v2198 = vmul.f32 %v2194, %v85
    %v2199 = vmul.f32 %v2197, %v85
    %v2200 = vadd.f32 %v2198, 1e-05
    %v2201 = vadd.f32 %v2199, 1e-05
    %v2202 = vrsqrt.pop %v2200
    %v2203 = vrsqrt.pop %v2201
    %v2204 = vmul.f32 %v2188, %v2202
    %v2205 = vmul.f32 %v2189, %v2203
    %v2206 = vlaneseq
    %v2207 = vshrl.u32 %v2206, 7
    %v2208 = vsub.s32 0, %v2207
    %v2209 = vrot.slane %v2178, %v2208
    %v2210 = vmul.f32 %v2204, %v2209
    %v2211 = vmul.f32 %v2205, %v2209
    %v2212 = vlaneseq
    %v2213 = vshrl.u32 %v2212, 7
    %v2214 = vsub.s32 0, %v2213
    %v2215 = vrot.slane %v2179, %v2214
    %v2216 = vadd.f32 %v2210, %v2215
    %v2217 = vadd.f32 %v2211, %v2215
    %2218 = vst.msk [vmem:[#allocation10] sm:$0xff] %vm78, %v2216
    %2219 = vst.msk [vmem:[#allocation10 + $0x8] sm:$0xff] %vm78, %v2217
    // Predicated region
    $region34: #{tpu_custom_call.1} parent=1 // pred_check
      _
    $region35: #{tpu_custom_call.1} parent=1 // pred_check_branch
      %2221 = sbr.rel (0) target = $region37
    $region36: #{tpu_custom_call.1} parent=1 // pred_region
      %s2223 = ssub.s32 256, 256
      %2224 = vsyncadd [#allocation4], %s2223
      %s2225 = sshll.u32 [#allocation10], 4
      %s2226 = int_to_ptr.vmem [resolvable:$true] %s2225
      %2231 = dma.vmem_to_hbm [thread:$0]  %s2226, 256, %s4, [#allocation4], 128, 128, 8
    $region37: #{tpu_custom_call.1} parent=1 // pred_fallthru
      _
    // Predicated region
    $region38: #{tpu_custom_call.1} parent=1 // pred_check
      _
    $region39: #{tpu_custom_call.1} parent=1 // pred_check_branch
      %2233 = sbr.rel (0) target = $region41
    $region40: #{tpu_custom_call.1} parent=1 // pred_region
      %2234 = dma.done [#allocation4], 256
    $region41: #{tpu_custom_call.1} parent=1 // pred_fallthru
      _
    %2235 = vsyncpa [#allocation3], 1
    %2236 = vsyncpa [#allocation6], 1
    %2237 = vsyncpa [#allocation9], 1
    %2238 = vsyncpa [#allocation4], 1

</llo_original>
